<compile_context>
chip_gen: v7x
topology: tpu7x:2x2x1
jax: 0.10.0
libtpu: 0.0.40
codegen_flags: <defaults>
</compile_context>

<pallas_src>
import functools

import jax
import jax.numpy as jnp
from jax import lax
from jax.experimental import pallas as pl
from jax.experimental.pallas import tpu as pltpu


def _resblock_kernel(x_ref, w1_ref, sh1_ref, a_ref, w2_ref, sh2_ref,
                     out_ref, pad_scr, col_scr, *, H, W, C):
    """One batch image per grid step.

    x_ref   : (1, H, W, C)         un-padded input (NHWC)
    w*_ref  : (9*C, C)             im2col conv weight, BN scale pre-folded
    sh*_ref : (1, C)               folded shift = s*b + t
    a_ref   : (1, 1)               PReLU slope (single parameter)
    out_ref : (1, H, W, C)
    pad_scr : (H+2, W+2, C)  VMEM  zero-padded activation (shared by both convs)
    col_scr : (H*W, 9*C)     VMEM  im2col buffer (shared by both convs)
    """
    f32 = jnp.float32

    # Zero only the 1-wide border of the padded scratch (4 thin stores); the
    # interior is fully overwritten below and conv2 reuses the same border.
    pad_scr[0:1, :, :] = jnp.zeros((1, W + 2, C), f32)
    pad_scr[H + 1:H + 2, :, :] = jnp.zeros((1, W + 2, C), f32)
    pad_scr[1:H + 1, 0:1, :] = jnp.zeros((H, 1, C), f32)
    pad_scr[1:H + 1, W + 1:W + 2, :] = jnp.zeros((H, 1, C), f32)

    def conv3x3(w_ref, sh_ref):
        # im2col: 9 shifted (H, W, C) windows -> column blocks of col_scr,
        # then a single (H*W, 9C) x (9C, C) matmul (accumulation in the MXU).
        for ky in range(3):
            for kx in range(3):
                t = ky * 3 + kx
                col_scr[:, t * C:(t + 1) * C] = (
                    pad_scr[ky:ky + H, kx:kx + W, :].reshape(H * W, C))
        y = jnp.dot(col_scr[...], w_ref[...], preferred_element_type=f32)
        return y + sh_ref[...]                       # (H*W, C) + (1, C)

    # conv1 (+ folded BN1) + PReLU
    pad_scr[1:H + 1, 1:W + 1, :] = x_ref[0]
    h = conv3x3(w1_ref, sh1_ref)
    a = a_ref[0, 0]
    h = jnp.where(h > 0, h, a * h)

    # conv2 (+ folded BN2)
    pad_scr[1:H + 1, 1:W + 1, :] = h.reshape(H, W, C)
    g = conv3x3(w2_ref, sh2_ref)

    # residual add against the tile-aligned, un-padded input block
    out_ref[0] = (g.reshape(H, W, C) + x_ref[0]).astype(out_ref.dtype)


def residual_block(x_nchw, params):
    """x_nchw: (N, C, H, W) float32 -> (N, C, H, W) float32."""
    (w1, b1, s1, t1, a, w2, b2, s2, t2) = params
    N, C, H, W = x_nchw.shape

    # TODO(synk): the NCHW<->NHWC transposes cost an extra HBM round trip;
    # keep the surrounding model NHWC end-to-end to drop them.
    x = jnp.transpose(x_nchw, (0, 2, 3, 1)).astype(jnp.float32)     # NHWC

    # Fold BN into the convs:  s*(conv(x,w)+b)+t == conv(x, w*s) + (s*b + t)
    w1f = (w1 * s1[None, None, None, :]).reshape(9 * C, C).astype(jnp.float32)
    sh1 = (s1 * b1 + t1).reshape(1, C).astype(jnp.float32)
    w2f = (w2 * s2[None, None, None, :]).reshape(9 * C, C).astype(jnp.float32)
    sh2 = (s2 * b2 + t2).reshape(1, C).astype(jnp.float32)
    a_v = jnp.reshape(a, (1, 1)).astype(jnp.float32)

    kernel = functools.partial(_resblock_kernel, H=H, W=W, C=C)
    full2 = lambda n: (0, 0)

    out_nhwc = pl.pallas_call(
        kernel,
        out_shape=jax.ShapeDtypeStruct((N, H, W, C), jnp.float32),
        grid_spec=pltpu.PrefetchScalarGridSpec(
            num_scalar_prefetch=0,
            grid=(N,),
            in_specs=[
                pl.BlockSpec((1, H, W, C), lambda n: (n, 0, 0, 0)),  # x
                pl.BlockSpec((9 * C, C), full2),                     # w1 folded
                pl.BlockSpec((1, C), full2),                         # shift1
                pl.BlockSpec((1, 1), full2),                         # prelu a
                pl.BlockSpec((9 * C, C), full2),                     # w2 folded
                pl.BlockSpec((1, C), full2),                         # shift2
            ],
            out_specs=pl.BlockSpec((1, H, W, C), lambda n: (n, 0, 0, 0)),
            scratch_shapes=[
                pltpu.VMEM((H + 2, W + 2, C), jnp.float32),          # padded act
                pltpu.VMEM((H * W, 9 * C), jnp.float32),             # im2col
            ],
        ),
        compiler_params=pltpu.CompilerParams(
            dimension_semantics=("parallel",)),
    )(x, w1f, sh1, a_v, w2f, sh2)

    return jnp.transpose(out_nhwc, (0, 3, 1, 2))                    # NCHW


def init_params(key, C, eps=1e-5):
    """Deterministic synthetic parameters matching the module's shapes."""
    ks = jax.random.split(key, 14)

    def bn_fold(gamma, beta, mean, var):
        scale = gamma * lax.rsqrt(var + eps)
        shift = beta - mean * scale
        return scale.astype(jnp.float32), shift.astype(jnp.float32)

    w1 = 0.05 * jax.random.normal(ks[0], (3, 3, C, C), jnp.float32)
    b1 = 0.05 * jax.random.normal(ks[1], (C,), jnp.float32)
    g1 = 1.0 + 0.1 * jax.random.normal(ks[2], (C,), jnp.float32)
    be1 = 0.1 * jax.random.normal(ks[3], (C,), jnp.float32)
    m1 = 0.1 * jax.random.normal(ks[4], (C,), jnp.float32)
    v1 = 1.0 + 0.1 * jnp.abs(jax.random.normal(ks[5], (C,), jnp.float32))
    s1, t1 = bn_fold(g1, be1, m1, v1)

    a = jnp.float32(0.25)  # nn.PReLU() default: single parameter, init 0.25

    w2 = 0.05 * jax.random.normal(ks[6], (3, 3, C, C), jnp.float32)
    b2 = 0.05 * jax.random.normal(ks[7], (C,), jnp.float32)
    g2 = 1.0 + 0.1 * jax.random.normal(ks[8], (C,), jnp.float32)
    be2 = 0.1 * jax.random.normal(ks[9], (C,), jnp.float32)
    m2 = 0.1 * jax.random.normal(ks[10], (C,), jnp.float32)
    v2 = 1.0 + 0.1 * jnp.abs(jax.random.normal(ks[11], (C,), jnp.float32))
    s2, t2 = bn_fold(g2, be2, m2, v2)

    return (w1, b1, s1, t1, a, w2, b2, s2, t2)


def residual_block_reference(x_nchw, params):
    """Pure-JAX (XLA conv) reference for correctness checking (un-folded)."""
    (w1, b1, s1, t1, a, w2, b2, s2, t2) = params
    dn = ('NCHW', 'OIHW', 'NCHW')

    def conv(x, w_khwc, b):
        w_oihw = jnp.transpose(w_khwc, (3, 2, 0, 1))
        y = lax.conv_general_dilated(x, w_oihw, (1, 1), 'SAME',
                                     dimension_numbers=dn)
        return y + b[None, :, None, None]

    h = conv(x_nchw, w1, b1)
    h = h * s1[None, :, None, None] + t1[None, :, None, None]
    h = jnp.where(h > 0, h, a * h)
    g = conv(h, w2, b2)
    g = g * s2[None, :, None, None] + t2[None, :, None, None]
    return g + x_nchw


if __name__ == "__main__":
    key = jax.random.PRNGKey(0)
    k_x, k_p = jax.random.split(key)

    N, C, H, W = 2, 64, 16, 16                  # num_filters=64 (module default)
    x = jax.random.normal(k_x, (N, C, H, W), jnp.float32)
    params = init_params(k_p, C)

    out = jax.block_until_ready(residual_block(x, params))
    ref = jax.block_until_ready(residual_block_reference(x, params))

    assert out.shape == (N, C, H, W), out.shape
    assert jnp.allclose(out, ref, rtol=1e-3, atol=1e-3), (
        float(jnp.max(jnp.abs(out - ref))))
    print("KERNEL_OK")
</pallas_src>

<mosaic_0001>
module attributes {stable_mosaic.version = 11 : i64} {
  func.func @_resblock_kernel(%arg0: i32, %arg1: memref<1x16x16x64xf32, #tpu.memory_space<vmem>>, %arg2: memref<576x64xf32, #tpu.memory_space<vmem>>, %arg3: memref<1x64xf32, #tpu.memory_space<vmem>>, %arg4: memref<1x1xf32, #tpu.memory_space<vmem>>, %arg5: memref<576x64xf32, #tpu.memory_space<vmem>>, %arg6: memref<1x64xf32, #tpu.memory_space<vmem>>, %arg7: memref<1x16x16x64xf32, #tpu.memory_space<vmem>>, %arg8: memref<18x18x64xf32, #tpu.memory_space<vmem>>, %arg9: memref<256x576xf32, #tpu.memory_space<vmem>>) attributes {dimension_semantics = [#tpu.dimension_semantics<parallel>], iteration_bounds = array<i64: 2>, scalar_prefetch = 0 : i64, scratch_operands = 2 : i64, tpu.core_type = #tpu.core_type<tc>, window_params = [{transform_indices = @transform_0, window_bounds = array<i64: 1, 16, 16, 64>}, {pipeline_mode = #tpu.pipeline_mode<synchronous>, transform_indices = @transform_1, window_bounds = array<i64: 576, 64>}, {pipeline_mode = #tpu.pipeline_mode<synchronous>, transform_indices = @transform_2, window_bounds = array<i64: 1, 64>}, {pipeline_mode = #tpu.pipeline_mode<synchronous>, transform_indices = @transform_3, window_bounds = array<i64: 1, 1>}, {pipeline_mode = #tpu.pipeline_mode<synchronous>, transform_indices = @transform_4, window_bounds = array<i64: 576, 64>}, {pipeline_mode = #tpu.pipeline_mode<synchronous>, transform_indices = @transform_5, window_bounds = array<i64: 1, 64>}, {transform_indices = @transform_6, window_bounds = array<i64: 1, 16, 16, 64>}]} {
    %cst = arith.constant 0.000000e+00 : f32
    %0 = vector.broadcast %cst : f32 to vector<1x18x64xf32>
    %c0 = arith.constant 0 : index
    %c0_0 = arith.constant 0 : index
    %c0_1 = arith.constant 0 : index
    %1 = vector.load %arg8[%c0, %c0_0, %c0_1] : memref<18x18x64xf32, #tpu.memory_space<vmem>>, vector<1x18x64xf32>
    tpu.vector_store %arg8[%c0, %c0_0, %c0_1], %0 {strides = array<i32>} : memref<18x18x64xf32, #tpu.memory_space<vmem>>, vector<1x18x64xf32>,
    %cst_2 = arith.constant 0.000000e+00 : f32
    %2 = vector.broadcast %cst_2 : f32 to vector<1x18x64xf32>
    %c17 = arith.constant 17 : index
    %c0_3 = arith.constant 0 : index
    %c0_4 = arith.constant 0 : index
    %3 = vector.load %arg8[%c17, %c0_3, %c0_4] : memref<18x18x64xf32, #tpu.memory_space<vmem>>, vector<1x18x64xf32>
    tpu.vector_store %arg8[%c17, %c0_3, %c0_4], %2 {strides = array<i32>} : memref<18x18x64xf32, #tpu.memory_space<vmem>>, vector<1x18x64xf32>,
    %cst_5 = arith.constant 0.000000e+00 : f32
    %4 = vector.broadcast %cst_5 : f32 to vector<16x1x64xf32>
    %c1 = arith.constant 1 : index
    %c0_6 = arith.constant 0 : index
    %c0_7 = arith.constant 0 : index
    %5 = vector.load %arg8[%c1, %c0_6, %c0_7] : memref<18x18x64xf32, #tpu.memory_space<vmem>>, vector<16x1x64xf32>
    tpu.vector_store %arg8[%c1, %c0_6, %c0_7], %4 {strides = array<i32>} : memref<18x18x64xf32, #tpu.memory_space<vmem>>, vector<16x1x64xf32>,
    %cst_8 = arith.constant 0.000000e+00 : f32
    %6 = vector.broadcast %cst_8 : f32 to vector<16x1x64xf32>
    %c1_9 = arith.constant 1 : index
    %c17_10 = arith.constant 17 : index
    %c0_11 = arith.constant 0 : index
    %7 = vector.load %arg8[%c1_9, %c17_10, %c0_11] : memref<18x18x64xf32, #tpu.memory_space<vmem>>, vector<16x1x64xf32>
    tpu.vector_store %arg8[%c1_9, %c17_10, %c0_11], %6 {strides = array<i32>} : memref<18x18x64xf32, #tpu.memory_space<vmem>>, vector<16x1x64xf32>,
    %c0_12 = arith.constant 0 : index
    %c0_13 = arith.constant 0 : index
    %c0_14 = arith.constant 0 : index
    %c0_15 = arith.constant 0 : index
    %8 = vector.load %arg1[%c0_12, %c0_13, %c0_14, %c0_15] : memref<1x16x16x64xf32, #tpu.memory_space<vmem>>, vector<1x16x16x64xf32>
    %9 = vector.shape_cast %8 : vector<1x16x16x64xf32> to vector<16x16x64xf32>
    %c1_16 = arith.constant 1 : index
    %c1_17 = arith.constant 1 : index
    %c0_18 = arith.constant 0 : index
    %10 = vector.load %arg8[%c1_16, %c1_17, %c0_18] : memref<18x18x64xf32, #tpu.memory_space<vmem>>, vector<16x16x64xf32>
    tpu.vector_store %arg8[%c1_16, %c1_17, %c0_18], %9 {strides = array<i32>} : memref<18x18x64xf32, #tpu.memory_space<vmem>>, vector<16x16x64xf32>,
    %c0_19 = arith.constant 0 : index
    %c0_20 = arith.constant 0 : index
    %c0_21 = arith.constant 0 : index
    %11 = vector.load %arg8[%c0_19, %c0_20, %c0_21] : memref<18x18x64xf32, #tpu.memory_space<vmem>>, vector<16x16x64xf32>
    %12 = vector.shape_cast %11 : vector<16x16x64xf32> to vector<256x64xf32>
    %c0_22 = arith.constant 0 : index
    %c0_23 = arith.constant 0 : index
    %13 = vector.load %arg9[%c0_22, %c0_23] : memref<256x576xf32, #tpu.memory_space<vmem>>, vector<256x64xf32>
    tpu.vector_store %arg9[%c0_22, %c0_23], %12 {strides = array<i32>} : memref<256x576xf32, #tpu.memory_space<vmem>>, vector<256x64xf32>,
    %c0_24 = arith.constant 0 : index
    %c1_25 = arith.constant 1 : index
    %c0_26 = arith.constant 0 : index
    %14 = vector.load %arg8[%c0_24, %c1_25, %c0_26] : memref<18x18x64xf32, #tpu.memory_space<vmem>>, vector<16x16x64xf32>
    %15 = vector.shape_cast %14 : vector<16x16x64xf32> to vector<256x64xf32>
    %c0_27 = arith.constant 0 : index
    %c64 = arith.constant 64 : index
    %16 = vector.load %arg9[%c0_27, %c64] : memref<256x576xf32, #tpu.memory_space<vmem>>, vector<256x64xf32>
    tpu.vector_store %arg9[%c0_27, %c64], %15 {strides = array<i32>} : memref<256x576xf32, #tpu.memory_space<vmem>>, vector<256x64xf32>,
    %c0_28 = arith.constant 0 : index
    %c2 = arith.constant 2 : index
    %c0_29 = arith.constant 0 : index
    %17 = vector.load %arg8[%c0_28, %c2, %c0_29] : memref<18x18x64xf32, #tpu.memory_space<vmem>>, vector<16x16x64xf32>
    %18 = vector.shape_cast %17 : vector<16x16x64xf32> to vector<256x64xf32>
    %c0_30 = arith.constant 0 : index
    %c128 = arith.constant 128 : index
    %19 = vector.load %arg9[%c0_30, %c128] : memref<256x576xf32, #tpu.memory_space<vmem>>, vector<256x64xf32>
    tpu.vector_store %arg9[%c0_30, %c128], %18 {strides = array<i32>} : memref<256x576xf32, #tpu.memory_space<vmem>>, vector<256x64xf32>,
    %c1_31 = arith.constant 1 : index
    %c0_32 = arith.constant 0 : index
    %c0_33 = arith.constant 0 : index
    %20 = vector.load %arg8[%c1_31, %c0_32, %c0_33] : memref<18x18x64xf32, #tpu.memory_space<vmem>>, vector<16x16x64xf32>
    %21 = vector.shape_cast %20 : vector<16x16x64xf32> to vector<256x64xf32>
    %c0_34 = arith.constant 0 : index
    %c192 = arith.constant 192 : index
    %22 = vector.load %arg9[%c0_34, %c192] : memref<256x576xf32, #tpu.memory_space<vmem>>, vector<256x64xf32>
    tpu.vector_store %arg9[%c0_34, %c192], %21 {strides = array<i32>} : memref<256x576xf32, #tpu.memory_space<vmem>>, vector<256x64xf32>,
    %c1_35 = arith.constant 1 : index
    %c1_36 = arith.constant 1 : index
    %c0_37 = arith.constant 0 : index
    %23 = vector.load %arg8[%c1_35, %c1_36, %c0_37] : memref<18x18x64xf32, #tpu.memory_space<vmem>>, vector<16x16x64xf32>
    %24 = vector.shape_cast %23 : vector<16x16x64xf32> to vector<256x64xf32>
    %c0_38 = arith.constant 0 : index
    %c256 = arith.constant 256 : index
    %25 = vector.load %arg9[%c0_38, %c256] : memref<256x576xf32, #tpu.memory_space<vmem>>, vector<256x64xf32>
    tpu.vector_store %arg9[%c0_38, %c256], %24 {strides = array<i32>} : memref<256x576xf32, #tpu.memory_space<vmem>>, vector<256x64xf32>,
    %c1_39 = arith.constant 1 : index
    %c2_40 = arith.constant 2 : index
    %c0_41 = arith.constant 0 : index
    %26 = vector.load %arg8[%c1_39, %c2_40, %c0_41] : memref<18x18x64xf32, #tpu.memory_space<vmem>>, vector<16x16x64xf32>
    %27 = vector.shape_cast %26 : vector<16x16x64xf32> to vector<256x64xf32>
    %c0_42 = arith.constant 0 : index
    %c320 = arith.constant 320 : index
    %28 = vector.load %arg9[%c0_42, %c320] : memref<256x576xf32, #tpu.memory_space<vmem>>, vector<256x64xf32>
    tpu.vector_store %arg9[%c0_42, %c320], %27 {strides = array<i32>} : memref<256x576xf32, #tpu.memory_space<vmem>>, vector<256x64xf32>,
    %c2_43 = arith.constant 2 : index
    %c0_44 = arith.constant 0 : index
    %c0_45 = arith.constant 0 : index
    %29 = vector.load %arg8[%c2_43, %c0_44, %c0_45] : memref<18x18x64xf32, #tpu.memory_space<vmem>>, vector<16x16x64xf32>
    %30 = vector.shape_cast %29 : vector<16x16x64xf32> to vector<256x64xf32>
    %c0_46 = arith.constant 0 : index
    %c384 = arith.constant 384 : index
    %31 = vector.load %arg9[%c0_46, %c384] : memref<256x576xf32, #tpu.memory_space<vmem>>, vector<256x64xf32>
    tpu.vector_store %arg9[%c0_46, %c384], %30 {strides = array<i32>} : memref<256x576xf32, #tpu.memory_space<vmem>>, vector<256x64xf32>,
    %c2_47 = arith.constant 2 : index
    %c1_48 = arith.constant 1 : index
    %c0_49 = arith.constant 0 : index
    %32 = vector.load %arg8[%c2_47, %c1_48, %c0_49] : memref<18x18x64xf32, #tpu.memory_space<vmem>>, vector<16x16x64xf32>
    %33 = vector.shape_cast %32 : vector<16x16x64xf32> to vector<256x64xf32>
    %c0_50 = arith.constant 0 : index
    %c448 = arith.constant 448 : index
    %34 = vector.load %arg9[%c0_50, %c448] : memref<256x576xf32, #tpu.memory_space<vmem>>, vector<256x64xf32>
    tpu.vector_store %arg9[%c0_50, %c448], %33 {strides = array<i32>} : memref<256x576xf32, #tpu.memory_space<vmem>>, vector<256x64xf32>,
    %c2_51 = arith.constant 2 : index
    %c2_52 = arith.constant 2 : index
    %c0_53 = arith.constant 0 : index
    %35 = vector.load %arg8[%c2_51, %c2_52, %c0_53] : memref<18x18x64xf32, #tpu.memory_space<vmem>>, vector<16x16x64xf32>
    %36 = vector.shape_cast %35 : vector<16x16x64xf32> to vector<256x64xf32>
    %c0_54 = arith.constant 0 : index
    %c512 = arith.constant 512 : index
    %37 = vector.load %arg9[%c0_54, %c512] : memref<256x576xf32, #tpu.memory_space<vmem>>, vector<256x64xf32>
    tpu.vector_store %arg9[%c0_54, %c512], %36 {strides = array<i32>} : memref<256x576xf32, #tpu.memory_space<vmem>>, vector<256x64xf32>,
    %c0_55 = arith.constant 0 : index
    %c0_56 = arith.constant 0 : index
    %38 = vector.load %arg9[%c0_55, %c0_56] : memref<256x576xf32, #tpu.memory_space<vmem>>, vector<256x576xf32>
    %c0_57 = arith.constant 0 : index
    %c0_58 = arith.constant 0 : index
    %39 = vector.load %arg2[%c0_57, %c0_58] : memref<576x64xf32, #tpu.memory_space<vmem>>, vector<576x64xf32>
    %cst_59 = arith.constant dense<0.000000e+00> : vector<256x64xf32>
    %40 = tpu.matmul %38, %39, %cst_59 {dimension_numbers = #tpu.dot_dimension_numbers<[1], [0], [0], [1], [0, 0, 1, 1], [], []>} : vector<256x576xf32>, vector<576x64xf32>, vector<256x64xf32> -> vector<256x64xf32>
    %c0_60 = arith.constant 0 : index
    %c0_61 = arith.constant 0 : index
    %41 = vector.load %arg3[%c0_60, %c0_61] : memref<1x64xf32, #tpu.memory_space<vmem>>, vector<1x64xf32>
    %42 = vector.broadcast %41 : vector<1x64xf32> to vector<256x64xf32>
    %43 = arith.addf %40, %42 : vector<256x64xf32>
    %c0_62 = arith.constant 0 : index
    %c0_63 = arith.constant 0 : index
    %44 = vector.load %arg4[%c0_62, %c0_63] : memref<1x1xf32, #tpu.memory_space<vmem>>, vector<1x1xf32>
    %45 = vector.extract %44[0, 0] : f32 from vector<1x1xf32>
    %cst_64 = arith.constant 0.000000e+00 : f32
    %46 = vector.broadcast %cst_64 : f32 to vector<256x64xf32>
    %47 = arith.cmpf ogt, %43, %46 : vector<256x64xf32>
    %48 = vector.broadcast %45 : f32 to vector<256x64xf32>
    %49 = arith.mulf %48, %43 : vector<256x64xf32>
    %50 = arith.select %47, %43, %49 : vector<256x64xi1>, vector<256x64xf32>
    %51 = vector.shape_cast %50 : vector<256x64xf32> to vector<16x16x64xf32>
    %c1_65 = arith.constant 1 : index
    %c1_66 = arith.constant 1 : index
    %c0_67 = arith.constant 0 : index
    %52 = vector.load %arg8[%c1_65, %c1_66, %c0_67] : memref<18x18x64xf32, #tpu.memory_space<vmem>>, vector<16x16x64xf32>
    tpu.vector_store %arg8[%c1_65, %c1_66, %c0_67], %51 {strides = array<i32>} : memref<18x18x64xf32, #tpu.memory_space<vmem>>, vector<16x16x64xf32>,
    %c0_68 = arith.constant 0 : index
    %c0_69 = arith.constant 0 : index
    %c0_70 = arith.constant 0 : index
    %53 = vector.load %arg8[%c0_68, %c0_69, %c0_70] : memref<18x18x64xf32, #tpu.memory_space<vmem>>, vector<16x16x64xf32>
    %54 = vector.shape_cast %53 : vector<16x16x64xf32> to vector<256x64xf32>
    %c0_71 = arith.constant 0 : index
    %c0_72 = arith.constant 0 : index
    %55 = vector.load %arg9[%c0_71, %c0_72] : memref<256x576xf32, #tpu.memory_space<vmem>>, vector<256x64xf32>
    tpu.vector_store %arg9[%c0_71, %c0_72], %54 {strides = array<i32>} : memref<256x576xf32, #tpu.memory_space<vmem>>, vector<256x64xf32>,
    %c0_73 = arith.constant 0 : index
    %c1_74 = arith.constant 1 : index
    %c0_75 = arith.constant 0 : index
    %56 = vector.load %arg8[%c0_73, %c1_74, %c0_75] : memref<18x18x64xf32, #tpu.memory_space<vmem>>, vector<16x16x64xf32>
    %57 = vector.shape_cast %56 : vector<16x16x64xf32> to vector<256x64xf32>
    %c0_76 = arith.constant 0 : index
    %c64_77 = arith.constant 64 : index
    %58 = vector.load %arg9[%c0_76, %c64_77] : memref<256x576xf32, #tpu.memory_space<vmem>>, vector<256x64xf32>
    tpu.vector_store %arg9[%c0_76, %c64_77], %57 {strides = array<i32>} : memref<256x576xf32, #tpu.memory_space<vmem>>, vector<256x64xf32>,
    %c0_78 = arith.constant 0 : index
    %c2_79 = arith.constant 2 : index
    %c0_80 = arith.constant 0 : index
    %59 = vector.load %arg8[%c0_78, %c2_79, %c0_80] : memref<18x18x64xf32, #tpu.memory_space<vmem>>, vector<16x16x64xf32>
    %60 = vector.shape_cast %59 : vector<16x16x64xf32> to vector<256x64xf32>
    %c0_81 = arith.constant 0 : index
    %c128_82 = arith.constant 128 : index
    %61 = vector.load %arg9[%c0_81, %c128_82] : memref<256x576xf32, #tpu.memory_space<vmem>>, vector<256x64xf32>
    tpu.vector_store %arg9[%c0_81, %c128_82], %60 {strides = array<i32>} : memref<256x576xf32, #tpu.memory_space<vmem>>, vector<256x64xf32>,
    %c1_83 = arith.constant 1 : index
    %c0_84 = arith.constant 0 : index
    %c0_85 = arith.constant 0 : index
    %62 = vector.load %arg8[%c1_83, %c0_84, %c0_85] : memref<18x18x64xf32, #tpu.memory_space<vmem>>, vector<16x16x64xf32>
    %63 = vector.shape_cast %62 : vector<16x16x64xf32> to vector<256x64xf32>
    %c0_86 = arith.constant 0 : index
    %c192_87 = arith.constant 192 : index
    %64 = vector.load %arg9[%c0_86, %c192_87] : memref<256x576xf32, #tpu.memory_space<vmem>>, vector<256x64xf32>
    tpu.vector_store %arg9[%c0_86, %c192_87], %63 {strides = array<i32>} : memref<256x576xf32, #tpu.memory_space<vmem>>, vector<256x64xf32>,
    %c1_88 = arith.constant 1 : index
    %c1_89 = arith.constant 1 : index
    %c0_90 = arith.constant 0 : index
    %65 = vector.load %arg8[%c1_88, %c1_89, %c0_90] : memref<18x18x64xf32, #tpu.memory_space<vmem>>, vector<16x16x64xf32>
    %66 = vector.shape_cast %65 : vector<16x16x64xf32> to vector<256x64xf32>
    %c0_91 = arith.constant 0 : index
    %c256_92 = arith.constant 256 : index
    %67 = vector.load %arg9[%c0_91, %c256_92] : memref<256x576xf32, #tpu.memory_space<vmem>>, vector<256x64xf32>
    tpu.vector_store %arg9[%c0_91, %c256_92], %66 {strides = array<i32>} : memref<256x576xf32, #tpu.memory_space<vmem>>, vector<256x64xf32>,
    %c1_93 = arith.constant 1 : index
    %c2_94 = arith.constant 2 : index
    %c0_95 = arith.constant 0 : index
    %68 = vector.load %arg8[%c1_93, %c2_94, %c0_95] : memref<18x18x64xf32, #tpu.memory_space<vmem>>, vector<16x16x64xf32>
    %69 = vector.shape_cast %68 : vector<16x16x64xf32> to vector<256x64xf32>
    %c0_96 = arith.constant 0 : index
    %c320_97 = arith.constant 320 : index
    %70 = vector.load %arg9[%c0_96, %c320_97] : memref<256x576xf32, #tpu.memory_space<vmem>>, vector<256x64xf32>
    tpu.vector_store %arg9[%c0_96, %c320_97], %69 {strides = array<i32>} : memref<256x576xf32, #tpu.memory_space<vmem>>, vector<256x64xf32>,
    %c2_98 = arith.constant 2 : index
    %c0_99 = arith.constant 0 : index
    %c0_100 = arith.constant 0 : index
    %71 = vector.load %arg8[%c2_98, %c0_99, %c0_100] : memref<18x18x64xf32, #tpu.memory_space<vmem>>, vector<16x16x64xf32>
    %72 = vector.shape_cast %71 : vector<16x16x64xf32> to vector<256x64xf32>
    %c0_101 = arith.constant 0 : index
    %c384_102 = arith.constant 384 : index
    %73 = vector.load %arg9[%c0_101, %c384_102] : memref<256x576xf32, #tpu.memory_space<vmem>>, vector<256x64xf32>
    tpu.vector_store %arg9[%c0_101, %c384_102], %72 {strides = array<i32>} : memref<256x576xf32, #tpu.memory_space<vmem>>, vector<256x64xf32>,
    %c2_103 = arith.constant 2 : index
    %c1_104 = arith.constant 1 : index
    %c0_105 = arith.constant 0 : index
    %74 = vector.load %arg8[%c2_103, %c1_104, %c0_105] : memref<18x18x64xf32, #tpu.memory_space<vmem>>, vector<16x16x64xf32>
    %75 = vector.shape_cast %74 : vector<16x16x64xf32> to vector<256x64xf32>
    %c0_106 = arith.constant 0 : index
    %c448_107 = arith.constant 448 : index
    %76 = vector.load %arg9[%c0_106, %c448_107] : memref<256x576xf32, #tpu.memory_space<vmem>>, vector<256x64xf32>
    tpu.vector_store %arg9[%c0_106, %c448_107], %75 {strides = array<i32>} : memref<256x576xf32, #tpu.memory_space<vmem>>, vector<256x64xf32>,
    %c2_108 = arith.constant 2 : index
    %c2_109 = arith.constant 2 : index
    %c0_110 = arith.constant 0 : index
    %77 = vector.load %arg8[%c2_108, %c2_109, %c0_110] : memref<18x18x64xf32, #tpu.memory_space<vmem>>, vector<16x16x64xf32>
    %78 = vector.shape_cast %77 : vector<16x16x64xf32> to vector<256x64xf32>
    %c0_111 = arith.constant 0 : index
    %c512_112 = arith.constant 512 : index
    %79 = vector.load %arg9[%c0_111, %c512_112] : memref<256x576xf32, #tpu.memory_space<vmem>>, vector<256x64xf32>
    tpu.vector_store %arg9[%c0_111, %c512_112], %78 {strides = array<i32>} : memref<256x576xf32, #tpu.memory_space<vmem>>, vector<256x64xf32>,
    %c0_113 = arith.constant 0 : index
    %c0_114 = arith.constant 0 : index
    %80 = vector.load %arg9[%c0_113, %c0_114] : memref<256x576xf32, #tpu.memory_space<vmem>>, vector<256x576xf32>
    %c0_115 = arith.constant 0 : index
    %c0_116 = arith.constant 0 : index
    %81 = vector.load %arg5[%c0_115, %c0_116] : memref<576x64xf32, #tpu.memory_space<vmem>>, vector<576x64xf32>
    %cst_117 = arith.constant dense<0.000000e+00> : vector<256x64xf32>
    %82 = tpu.matmul %80, %81, %cst_117 {dimension_numbers = #tpu.dot_dimension_numbers<[1], [0], [0], [1], [0, 0, 1, 1], [], []>} : vector<256x576xf32>, vector<576x64xf32>, vector<256x64xf32> -> vector<256x64xf32>
    %c0_118 = arith.constant 0 : index
    %c0_119 = arith.constant 0 : index
    %83 = vector.load %arg6[%c0_118, %c0_119] : memref<1x64xf32, #tpu.memory_space<vmem>>, vector<1x64xf32>
    %84 = vector.broadcast %83 : vector<1x64xf32> to vector<256x64xf32>
    %85 = arith.addf %82, %84 : vector<256x64xf32>
    %86 = vector.shape_cast %85 : vector<256x64xf32> to vector<16x16x64xf32>
    %c0_120 = arith.constant 0 : index
    %c0_121 = arith.constant 0 : index
    %c0_122 = arith.constant 0 : index
    %c0_123 = arith.constant 0 : index
    %87 = vector.load %arg1[%c0_120, %c0_121, %c0_122, %c0_123] : memref<1x16x16x64xf32, #tpu.memory_space<vmem>>, vector<1x16x16x64xf32>
    %88 = vector.shape_cast %87 : vector<1x16x16x64xf32> to vector<16x16x64xf32>
    %89 = arith.addf %86, %88 : vector<16x16x64xf32>
    %c0_124 = arith.constant 0 : index
    %c0_125 = arith.constant 0 : index
    %c0_126 = arith.constant 0 : index
    %c0_127 = arith.constant 0 : index
    %90 = vector.load %arg7[%c0_124, %c0_125, %c0_126, %c0_127] : memref<1x16x16x64xf32, #tpu.memory_space<vmem>>, vector<1x16x16x64xf32>
    %91 = vector.shape_cast %90 : vector<1x16x16x64xf32> to vector<16x16x64xf32>
    %92 = vector.shape_cast %89 : vector<16x16x64xf32> to vector<1x16x16x64xf32>
    tpu.vector_store %arg7[%c0_124, %c0_125, %c0_126, %c0_127], %92 {strides = array<i32>} : memref<1x16x16x64xf32, #tpu.memory_space<vmem>>, vector<1x16x16x64xf32>,
    return
  }
  func.func @transform_0(%arg0: i32) -> (i32, i32, i32, i32) {
    %c0_i32 = arith.constant 0 : i32
    %c0_i32_0 = arith.constant 0 : i32
    %c0_i32_1 = arith.constant 0 : i32
    %c0_i32_2 = arith.constant 0 : i32
    return %arg0, %c0_i32, %c0_i32_0, %c0_i32_1 : i32, i32, i32, i32
  }
  func.func @transform_1(%arg0: i32) -> (i32, i32) {
    %c0_i32 = arith.constant 0 : i32
    %c0_i32_0 = arith.constant 0 : i32
    %c0_i32_1 = arith.constant 0 : i32
    return %c0_i32, %c0_i32_0 : i32, i32
  }
  func.func @transform_2(%arg0: i32) -> (i32, i32) {
    %c0_i32 = arith.constant 0 : i32
    %c0_i32_0 = arith.constant 0 : i32
    %c0_i32_1 = arith.constant 0 : i32
    return %c0_i32, %c0_i32_0 : i32, i32
  }
  func.func @transform_3(%arg0: i32) -> (i32, i32) {
    %c0_i32 = arith.constant 0 : i32
    %c0_i32_0 = arith.constant 0 : i32
    %c0_i32_1 = arith.constant 0 : i32
    return %c0_i32, %c0_i32_0 : i32, i32
  }
  func.func @transform_4(%arg0: i32) -> (i32, i32) {
    %c0_i32 = arith.constant 0 : i32
    %c0_i32_0 = arith.constant 0 : i32
    %c0_i32_1 = arith.constant 0 : i32
    return %c0_i32, %c0_i32_0 : i32, i32
  }
  func.func @transform_5(%arg0: i32) -> (i32, i32) {
    %c0_i32 = arith.constant 0 : i32
    %c0_i32_0 = arith.constant 0 : i32
    %c0_i32_1 = arith.constant 0 : i32
    return %c0_i32, %c0_i32_0 : i32, i32
  }
  func.func @transform_6(%arg0: i32) -> (i32, i32, i32, i32) {
    %c0_i32 = arith.constant 0 : i32
    %c0_i32_0 = arith.constant 0 : i32
    %c0_i32_1 = arith.constant 0 : i32
    %c0_i32_2 = arith.constant 0 : i32
    return %arg0, %c0_i32, %c0_i32_0, %c0_i32_1 : i32, i32, i32, i32
  }
}

</mosaic_0001>

<llo_original>
// kernel: tpu_custom_call.1
$region0: #{tpu_custom_call.1}
  #allocation0 [shape = 'u32[]', space=smem, size = 0x4, offset = 0x4, fixed_abs, tag = 'smem constant byte address 0x4 - core index']
  #allocation1 [shape = 'u32[144,128]{1,0:T(1,128)}', space=vmem, size = 0x12000, scoped, tag = 'internal scratch']
  #allocation2 [shape = 'f32[18,18,64]{2,1,0:T(8,128)}', space=vmem, size = 0x36000, scoped, tag = 'scratch operand']
  #allocation3 [shape = 'f32[256,576]{1,0:T(8,128)}', space=vmem, size = 0xa0000, scoped, tag = 'scratch operand']
  #allocation4 [shape = 'f32[1,1]{1,0:T(1,128)S(1)}', space=vmem, size = 0x200, scoped, tag = 'scoped memory for tpu_custom_call.1']
  %s0 = inlined_call_operand.vmem [shape: f32[2,16,16,64], index: 0, kind: input, shape index: {}]
  %s1 = inlined_call_operand.vmem [shape: f32[576,64], index: 1, kind: input, shape index: {}]
  %s2 = inlined_call_operand.vmem [shape: f32[1,64], index: 2, kind: input, shape index: {}]
  %s3 = inlined_call_operand.<no memory space> [shape: f32[1,1], index: 3, kind: input, shape index: {}]
  %s4 = inlined_call_operand.vmem [shape: f32[576,64], index: 4, kind: input, shape index: {}]
  %s5 = inlined_call_operand.vmem [shape: f32[1,64], index: 5, kind: input, shape index: {}]
  %s6 = inlined_call_operand.hbm [shape: f32[2,16,16,64], index: 6, kind: output, shape index: {}]
  %s7 = sld [smem:[#allocation0]]
  $region57: #{tpu_custom_call.1} parent=0
    _
  %s9 = ssub.s32 1, %s7
  %s10 = scalar_select 0, %s9, %s7
  %v11 = vstv %s3
  %12 = vst [vmem:[#allocation4] sm:$0x1] %v11
  $region1: #{tpu_custom_call.1} parent=0
    #allocation5 [shape = 'u8[262144]{0}', space=vmem, size = 0x40000, scoped, tag = 'output window, operand 0']
    #allocation6 [shape = 's32[2]{0}', space=sflag, size = 0x8, scoped, tag = 'scoped memory for tpu_custom_call.1']
    %13 = vsyncpa [#allocation6], 0
    %s14 = scalar_lea.sflag [#allocation6], 1
    %15 = vsyncpa %s14, 0
    loop: start=0, step=1, limit=4
    $region2: #{tpu_custom_call.1} parent=1 // loop_pre_header
      _
    $region3: #{tpu_custom_call.1} parent=1 // loop_header
      %s17 = sphi 0, %s21
      %p18 = scmp.ge.s32.totalorder %s17, 4
      %s27 = sphi 0, %s29
      %s30 = sphi 0, %s27
      %s31 = sphi 0, %s30
      %s47 = sphi 0, %s31
      %s51 = sphi 0, %s51
      %s53 = sphi 0, %s51
      %s54 = sphi 0, %s53
      %s68 = sphi 0, %s54
      %s72 = sphi 0, %s72
      %s74 = sphi 0, %s72
      %s75 = sphi 0, %s74
      %s89 = sphi 0, %s75
      %s93 = sphi 0, %s93
      %s95 = sphi 0, %s93
      %s96 = sphi 0, %s95
      %s110 = sphi 0, %s96
      %s114 = sphi 0, %s114
      %s116 = sphi 0, %s114
      %s117 = sphi 0, %s116
      %s131 = sphi 0, %s117
      %s135 = sphi 0, %s135
      %s137 = sphi 0, %s135
      %s138 = sphi 0, %s137
      %s152 = sphi 0, %s138
      %s158 = sphi 0, %s160
      %s161 = sphi 0, %s158
      %s162 = sphi 0, %s161
      %s178 = sphi 0, %s162
    $region4: #{tpu_custom_call.1} parent=1 // loop_header_branch
      %20 = sbr.rel (%p18) target = $region8
    $region5: #{tpu_custom_call.1} parent=1 // loop_body
      %s22 = ssub.s32 %s17, 1
      %s23 = ssub.s32 %s17, 2
      %s24 = sadd.s32 %s17, 1
      %s25 = ssub.s32 %s17, %s24
      %p26 = scmp.eq.s32.totalorder %s25, 0
      %s28 = sadd.s32 %s27, 1
      %s29 = scalar_select %p26, %s27, %s28
      %p32 = pneg %p26
      %p33 = scmp.eq.s32.totalorder %s17, 1
      %p34 = por %p32, %p33
      %p35 = scmp.ne.s32.totalorder %s27, %s30
      %p36 = scmp.eq.s32.totalorder %s17, 0
      %p37 = por %p35, %p36
      %p38 = scmp.ne.s32.totalorder %s27, %s30
      %p39 = scmp.eq.s32.totalorder %s22, 1
      %p40 = por %p38, %p39
      %p41 = scmp.ne.s32.totalorder %s30, %s31
      %p42 = scmp.eq.s32.totalorder %s22, 0
      %p43 = por %p41, %p42
      %p44 = scmp.ne.s32.totalorder %s30, %s31
      %p45 = scmp.eq.s32.totalorder %s23, 1
      %p46 = por %p44, %p45
      %p48 = scmp.ne.s32.totalorder %s31, %s47
      %p49 = scmp.eq.s32.totalorder %s23, 0
      %p50 = por %p48, %p49
      %s52 = sadd.s32 %s51, 1
      %p55 = scmp.eq.s32.totalorder %s17, 1
      %p56 = scmp.ne.s32.totalorder %s51, %s53
      %p57 = scmp.eq.s32.totalorder %s17, 0
      %p58 = por %p56, %p57
      %p59 = scmp.ne.s32.totalorder %s51, %s53
      %p60 = scmp.eq.s32.totalorder %s22, 1
      %p61 = por %p59, %p60
      %p62 = scmp.ne.s32.totalorder %s53, %s54
      %p63 = scmp.eq.s32.totalorder %s22, 0
      %p64 = por %p62, %p63
      %p65 = scmp.ne.s32.totalorder %s53, %s54
      %p66 = scmp.eq.s32.totalorder %s23, 1
      %p67 = por %p65, %p66
      %p69 = scmp.ne.s32.totalorder %s54, %s68
      %p70 = scmp.eq.s32.totalorder %s23, 0
      %p71 = por %p69, %p70
      %s73 = sadd.s32 %s72, 1
      %p76 = scmp.eq.s32.totalorder %s17, 1
      %p77 = scmp.ne.s32.totalorder %s72, %s74
      %p78 = scmp.eq.s32.totalorder %s17, 0
      %p79 = por %p77, %p78
      %p80 = scmp.ne.s32.totalorder %s72, %s74
      %p81 = scmp.eq.s32.totalorder %s22, 1
      %p82 = por %p80, %p81
      %p83 = scmp.ne.s32.totalorder %s74, %s75
      %p84 = scmp.eq.s32.totalorder %s22, 0
      %p85 = por %p83, %p84
      %p86 = scmp.ne.s32.totalorder %s74, %s75
      %p87 = scmp.eq.s32.totalorder %s23, 1
      %p88 = por %p86, %p87
      %p90 = scmp.ne.s32.totalorder %s75, %s89
      %p91 = scmp.eq.s32.totalorder %s23, 0
      %p92 = por %p90, %p91
      %s94 = sadd.s32 %s93, 1
      %p97 = scmp.eq.s32.totalorder %s17, 1
      %p98 = scmp.ne.s32.totalorder %s93, %s95
      %p99 = scmp.eq.s32.totalorder %s17, 0
      %p100 = por %p98, %p99
      %p101 = scmp.ne.s32.totalorder %s93, %s95
      %p102 = scmp.eq.s32.totalorder %s22, 1
      %p103 = por %p101, %p102
      %p104 = scmp.ne.s32.totalorder %s95, %s96
      %p105 = scmp.eq.s32.totalorder %s22, 0
      %p106 = por %p104, %p105
      %p107 = scmp.ne.s32.totalorder %s95, %s96
      %p108 = scmp.eq.s32.totalorder %s23, 1
      %p109 = por %p107, %p108
      %p111 = scmp.ne.s32.totalorder %s96, %s110
      %p112 = scmp.eq.s32.totalorder %s23, 0
      %p113 = por %p111, %p112
      %s115 = sadd.s32 %s114, 1
      %p118 = scmp.eq.s32.totalorder %s17, 1
      %p119 = scmp.ne.s32.totalorder %s114, %s116
      %p120 = scmp.eq.s32.totalorder %s17, 0
      %p121 = por %p119, %p120
      %p122 = scmp.ne.s32.totalorder %s114, %s116
      %p123 = scmp.eq.s32.totalorder %s22, 1
      %p124 = por %p122, %p123
      %p125 = scmp.ne.s32.totalorder %s116, %s117
      %p126 = scmp.eq.s32.totalorder %s22, 0
      %p127 = por %p125, %p126
      %p128 = scmp.ne.s32.totalorder %s116, %s117
      %p129 = scmp.eq.s32.totalorder %s23, 1
      %p130 = por %p128, %p129
      %p132 = scmp.ne.s32.totalorder %s117, %s131
      %p133 = scmp.eq.s32.totalorder %s23, 0
      %p134 = por %p132, %p133
      %s136 = sadd.s32 %s135, 1
      %p139 = scmp.eq.s32.totalorder %s17, 1
      %p140 = scmp.ne.s32.totalorder %s135, %s137
      %p141 = scmp.eq.s32.totalorder %s17, 0
      %p142 = por %p140, %p141
      %p143 = scmp.ne.s32.totalorder %s135, %s137
      %p144 = scmp.eq.s32.totalorder %s22, 1
      %p145 = por %p143, %p144
      %p146 = scmp.ne.s32.totalorder %s137, %s138
      %p147 = scmp.eq.s32.totalorder %s22, 0
      %p148 = por %p146, %p147
      %p149 = scmp.ne.s32.totalorder %s137, %s138
      %p150 = scmp.eq.s32.totalorder %s23, 1
      %p151 = por %p149, %p150
      %p153 = scmp.ne.s32.totalorder %s138, %s152
      %p154 = scmp.eq.s32.totalorder %s23, 0
      %p155 = por %p153, %p154
      %s156 = ssub.s32 %s17, %s24
      %p157 = scmp.eq.s32.totalorder %s156, 0
      %s159 = sadd.s32 %s158, 1
      %s160 = scalar_select %p157, %s158, %s159
      %p163 = pneg %p157
      %p164 = scmp.eq.s32.totalorder %s17, 1
      %p165 = por %p163, %p164
      %p166 = scmp.ne.s32.totalorder %s158, %s161
      %p167 = scmp.eq.s32.totalorder %s17, 0
      %p168 = por %p166, %p167
      %p169 = scmp.ne.s32.totalorder %s158, %s161
      %p170 = scmp.eq.s32.totalorder %s22, 1
      %p171 = por %p169, %p170
      %p172 = scmp.ne.s32.totalorder %s161, %s162
      %p173 = scmp.eq.s32.totalorder %s22, 0
      %p174 = por %p172, %p173
      %p175 = scmp.ne.s32.totalorder %s161, %s162
      %p176 = scmp.eq.s32.totalorder %s23, 1
      %p177 = por %p175, %p176
      %p179 = scmp.ne.s32.totalorder %s162, %s178
      %p180 = scmp.eq.s32.totalorder %s23, 0
      %p181 = por %p179, %p180
      %p182 = scmp.le.s32.totalorder 1, %s17
      %p183 = scmp.lt.s32.totalorder %s17, 3
      %p184 = pnand %p182, %p183
      %p185 = pneg %p184
      // Predicated region
      $region9: #{tpu_custom_call.1} parent=5 // pred_check
        _
      $region10: #{tpu_custom_call.1} parent=5 // pred_check_branch
        %187 = sbr.rel (%p184) target = $region12
      $region11: #{tpu_custom_call.1} parent=5 // pred_region
        %s188 = ssub.s32 %s17, 1
        // Predicated region
        $region13: #{tpu_custom_call.1} parent=11 // pred_check
          %p189 = pneg %p64
        $region14: #{tpu_custom_call.1} parent=11 // pred_check_branch
          %191 = sbr.rel (%p189) target = $region16
        $region15: #{tpu_custom_call.1} parent=11 // pred_region
          _
        $region16: #{tpu_custom_call.1} parent=11 // pred_fallthru
          _
        // Predicated region
        $region17: #{tpu_custom_call.1} parent=11 // pred_check
          %p192 = pneg %p85
        $region18: #{tpu_custom_call.1} parent=11 // pred_check_branch
          %194 = sbr.rel (%p192) target = $region20
        $region19: #{tpu_custom_call.1} parent=11 // pred_region
          _
        $region20: #{tpu_custom_call.1} parent=11 // pred_fallthru
          _
        // Predicated region
        $region21: #{tpu_custom_call.1} parent=11 // pred_check
          %p195 = pneg %p106
        $region22: #{tpu_custom_call.1} parent=11 // pred_check_branch
          %197 = sbr.rel (%p195) target = $region24
        $region23: #{tpu_custom_call.1} parent=11 // pred_region
          _
        $region24: #{tpu_custom_call.1} parent=11 // pred_fallthru
          _
        // Predicated region
        $region25: #{tpu_custom_call.1} parent=11 // pred_check
          %p198 = pneg %p127
        $region26: #{tpu_custom_call.1} parent=11 // pred_check_branch
          %200 = sbr.rel (%p198) target = $region28
        $region27: #{tpu_custom_call.1} parent=11 // pred_region
          _
        $region28: #{tpu_custom_call.1} parent=11 // pred_fallthru
          _
        // Predicated region
        $region29: #{tpu_custom_call.1} parent=11 // pred_check
          %p201 = pneg %p148
        $region30: #{tpu_custom_call.1} parent=11 // pred_check_branch
          %203 = sbr.rel (%p201) target = $region32
        $region31: #{tpu_custom_call.1} parent=11 // pred_region
          _
        $region32: #{tpu_custom_call.1} parent=11 // pred_fallthru
          _
      $region12: #{tpu_custom_call.1} parent=5 // pred_fallthru
        _
      %p204 = scmp.lt.s32.totalorder %s17, 2
      // Predicated region
      $region33: #{tpu_custom_call.1} parent=5 // pred_check
        %p205 = pneg %p204
      $region34: #{tpu_custom_call.1} parent=5 // pred_check_branch
        %207 = sbr.rel (%p205) target = $region36
      $region35: #{tpu_custom_call.1} parent=5 // pred_region
        // Predicated region
        $region37: #{tpu_custom_call.1} parent=35 // pred_check
          %p208 = pneg %p37
        $region38: #{tpu_custom_call.1} parent=35 // pred_check_branch
          %210 = sbr.rel (%p208) target = $region40
        $region39: #{tpu_custom_call.1} parent=35 // pred_region
          %p211 = scmp.lt.s32.totalorder %s17, 1
          %s212 = scalar_select %p211, %s17, 1
          %s213 = smul.addr %s212, 32
          %s214 = smul.addr %s213, 8
          %s215 = scalar_lea.vmem %s0, %s214
        $region40: #{tpu_custom_call.1} parent=35 // pred_fallthru
          _
      $region36: #{tpu_custom_call.1} parent=5 // pred_fallthru
        _
      %p216 = scmp.le.s32.totalorder 1, %s17
      %p217 = scmp.lt.s32.totalorder %s17, 3
      %p218 = pnand %p216, %p217
      %p219 = pneg %p218
      // Predicated region
      $region41: #{tpu_custom_call.1} parent=5 // pred_check
        _
      $region42: #{tpu_custom_call.1} parent=5 // pred_check_branch
        %221 = sbr.rel (%p218) target = $region44
      $region43: #{tpu_custom_call.1} parent=5 // pred_region
        %s222 = ssub.s32 %s17, 1
        %p223 = scmp.lt.s32.totalorder %s22, 1
        %s224 = scalar_select %p223, %s22, 1
        %s225 = smul.addr %s224, 32
        %s226 = smul.addr %s225, 8
        %s227 = scalar_lea.vmem %s0, %s226
        %p228 = pneg %p43
        %p229 = pneg %p40
        %p230 = pneg %p64
        %p231 = pneg %p61
        %p232 = pneg %p85
        %p233 = pneg %p82
        %p234 = pneg %p106
        %p235 = pneg %p103
        %p236 = pneg %p127
        %p237 = pneg %p124
        %p238 = pneg %p148
        %p239 = pneg %p145
        %p240 = pneg %p174
        %p241 = pneg %p171
        %s242 = sand.u32 %s161, 1
        %s243 = scalar_lea.sflag [#allocation6], %s242
        %s244 = sand.u32 %s161, 1
        %s245 = smul.addr %s244, 256
        %s246 = scalar_lea.vmem [#allocation5], %s245
        %p247 = scmp.lt.s32.totalorder %s22, 1
        %s248 = scalar_select %p247, %s22, 1
        %s249 = smul.addr %s248, 32
        %s250 = smul.addr %s249, 8
        %s251 = scalar_lea.vmem %s0, %s250
        %vm252 = vcmask 523264
        %253 = vst.msk [vmem:[#allocation2] sm:$0xff] %vm252, 0.0
        %254 = vst.msk [vmem:[#allocation2 + $0x8] sm:$0xff] %vm252, 0.0
        %vm255 = vcmask 517120
        %256 = vst.msk [vmem:[#allocation2 + $0x10] sm:$0x3] %vm255, 0.0
        %s257 = scalar_lea.vmem [#allocation2], 408
        %258 = vst.msk [vmem:[%s257] sm:$0xff] %vm252, 0.0
        %259 = vst.msk [vmem:[%s257 + $0x8] sm:$0xff] %vm252, 0.0
        %260 = vst.msk [vmem:[%s257 + $0x10] sm:$0x3] %vm255, 0.0
        %s261 = scalar_lea.vmem [#allocation2], 24
        %vm262 = vcmask 516096
        %263 = vst.msk [vmem:[%s261] sm:$0x1] %vm262, 0.0
        %264 = vst.msk [vmem:[%s261 + $0x18] sm:$0x1] %vm262, 0.0
        %265 = vst.msk [vmem:[%s261 + $0x30] sm:$0x1] %vm262, 0.0
        %266 = vst.msk [vmem:[%s261 + $0x48] sm:$0x1] %vm262, 0.0
        %267 = vst.msk [vmem:[%s261 + $0x60] sm:$0x1] %vm262, 0.0
        %268 = vst.msk [vmem:[%s261 + $0x78] sm:$0x1] %vm262, 0.0
        %269 = vst.msk [vmem:[%s261 + $0x90] sm:$0x1] %vm262, 0.0
        %270 = vst.msk [vmem:[%s261 + $0xa8] sm:$0x1] %vm262, 0.0
        %271 = vst.msk [vmem:[%s261 + $0xc0] sm:$0x1] %vm262, 0.0
        %272 = vst.msk [vmem:[%s261 + $0xd8] sm:$0x1] %vm262, 0.0
        %273 = vst.msk [vmem:[%s261 + $0xf0] sm:$0x1] %vm262, 0.0
        %274 = vst.msk [vmem:[%s261 + $0x108] sm:$0x1] %vm262, 0.0
        %275 = vst.msk [vmem:[%s261 + $0x120] sm:$0x1] %vm262, 0.0
        %276 = vst.msk [vmem:[%s261 + $0x138] sm:$0x1] %vm262, 0.0
        %277 = vst.msk [vmem:[%s261 + $0x150] sm:$0x1] %vm262, 0.0
        %278 = vst.msk [vmem:[%s261 + $0x168] sm:$0x1] %vm262, 0.0
        %279 = vst.msk [vmem:[%s261 + $0x11] sm:$0x1] %vm262, 0.0
        %280 = vst.msk [vmem:[%s261 + $0x29] sm:$0x1] %vm262, 0.0
        %281 = vst.msk [vmem:[%s261 + $0x41] sm:$0x1] %vm262, 0.0
        %282 = vst.msk [vmem:[%s261 + $0x59] sm:$0x1] %vm262, 0.0
        %283 = vst.msk [vmem:[%s261 + $0x71] sm:$0x1] %vm262, 0.0
        %284 = vst.msk [vmem:[%s261 + $0x89] sm:$0x1] %vm262, 0.0
        %285 = vst.msk [vmem:[%s261 + $0xa1] sm:$0x1] %vm262, 0.0
        %286 = vst.msk [vmem:[%s261 + $0xb9] sm:$0x1] %vm262, 0.0
        %287 = vst.msk [vmem:[%s261 + $0xd1] sm:$0x1] %vm262, 0.0
        %288 = vst.msk [vmem:[%s261 + $0xe9] sm:$0x1] %vm262, 0.0
        %289 = vst.msk [vmem:[%s261 + $0x101] sm:$0x1] %vm262, 0.0
        %290 = vst.msk [vmem:[%s261 + $0x119] sm:$0x1] %vm262, 0.0
        %291 = vst.msk [vmem:[%s261 + $0x131] sm:$0x1] %vm262, 0.0
        %292 = vst.msk [vmem:[%s261 + $0x149] sm:$0x1] %vm262, 0.0
        %293 = vst.msk [vmem:[%s261 + $0x161] sm:$0x1] %vm262, 0.0
        %294 = vst.msk [vmem:[%s261 + $0x179] sm:$0x1] %vm262, 0.0
        %v295 = vld [vmem:[%s251] sm:$0xff]
        %v296 = vld [vmem:[%s251 + $0x8] sm:$0xff]
        %v297 = vld [vmem:[%s251 + $0x10] sm:$0xff]
        %v298 = vld [vmem:[%s251 + $0x18] sm:$0xff]
        %v299 = vld [vmem:[%s251 + $0x20] sm:$0xff]
        %v300 = vld [vmem:[%s251 + $0x28] sm:$0xff]
        %v301 = vld [vmem:[%s251 + $0x30] sm:$0xff]
        %v302 = vld [vmem:[%s251 + $0x38] sm:$0xff]
        %v303 = vld [vmem:[%s251 + $0x40] sm:$0xff]
        %v304 = vld [vmem:[%s251 + $0x48] sm:$0xff]
        %v305 = vld [vmem:[%s251 + $0x50] sm:$0xff]
        %v306 = vld [vmem:[%s251 + $0x58] sm:$0xff]
        %v307 = vld [vmem:[%s251 + $0x60] sm:$0xff]
        %v308 = vld [vmem:[%s251 + $0x68] sm:$0xff]
        %v309 = vld [vmem:[%s251 + $0x70] sm:$0xff]
        %v310 = vld [vmem:[%s251 + $0x78] sm:$0xff]
        %v311 = vld [vmem:[%s251 + $0x80] sm:$0xff]
        %v312 = vld [vmem:[%s251 + $0x88] sm:$0xff]
        %v313 = vld [vmem:[%s251 + $0x90] sm:$0xff]
        %v314 = vld [vmem:[%s251 + $0x98] sm:$0xff]
        %v315 = vld [vmem:[%s251 + $0xa0] sm:$0xff]
        %v316 = vld [vmem:[%s251 + $0xa8] sm:$0xff]
        %v317 = vld [vmem:[%s251 + $0xb0] sm:$0xff]
        %v318 = vld [vmem:[%s251 + $0xb8] sm:$0xff]
        %v319 = vld [vmem:[%s251 + $0xc0] sm:$0xff]
        %v320 = vld [vmem:[%s251 + $0xc8] sm:$0xff]
        %v321 = vld [vmem:[%s251 + $0xd0] sm:$0xff]
        %v322 = vld [vmem:[%s251 + $0xd8] sm:$0xff]
        %v323 = vld [vmem:[%s251 + $0xe0] sm:$0xff]
        %v324 = vld [vmem:[%s251 + $0xe8] sm:$0xff]
        %v325 = vld [vmem:[%s251 + $0xf0] sm:$0xff]
        %v326 = vld [vmem:[%s251 + $0xf8] sm:$0xff]
        %327 = vst.msk [vmem:[%s261 + $0x1] sm:$0xff] %vm252, %v295
        %328 = vst.msk [vmem:[%s261 + $0x9] sm:$0xff] %vm252, %v296
        %329 = vst.msk [vmem:[%s261 + $0x19] sm:$0xff] %vm252, %v297
        %330 = vst.msk [vmem:[%s261 + $0x21] sm:$0xff] %vm252, %v298
        %331 = vst.msk [vmem:[%s261 + $0x31] sm:$0xff] %vm252, %v299
        %332 = vst.msk [vmem:[%s261 + $0x39] sm:$0xff] %vm252, %v300
        %333 = vst.msk [vmem:[%s261 + $0x49] sm:$0xff] %vm252, %v301
        %334 = vst.msk [vmem:[%s261 + $0x51] sm:$0xff] %vm252, %v302
        %335 = vst.msk [vmem:[%s261 + $0x61] sm:$0xff] %vm252, %v303
        %336 = vst.msk [vmem:[%s261 + $0x69] sm:$0xff] %vm252, %v304
        %337 = vst.msk [vmem:[%s261 + $0x79] sm:$0xff] %vm252, %v305
        %338 = vst.msk [vmem:[%s261 + $0x81] sm:$0xff] %vm252, %v306
        %339 = vst.msk [vmem:[%s261 + $0x91] sm:$0xff] %vm252, %v307
        %340 = vst.msk [vmem:[%s261 + $0x99] sm:$0xff] %vm252, %v308
        %341 = vst.msk [vmem:[%s261 + $0xa9] sm:$0xff] %vm252, %v309
        %342 = vst.msk [vmem:[%s261 + $0xb1] sm:$0xff] %vm252, %v310
        %343 = vst.msk [vmem:[%s261 + $0xc1] sm:$0xff] %vm252, %v311
        %344 = vst.msk [vmem:[%s261 + $0xc9] sm:$0xff] %vm252, %v312
        %345 = vst.msk [vmem:[%s261 + $0xd9] sm:$0xff] %vm252, %v313
        %346 = vst.msk [vmem:[%s261 + $0xe1] sm:$0xff] %vm252, %v314
        %347 = vst.msk [vmem:[%s261 + $0xf1] sm:$0xff] %vm252, %v315
        %348 = vst.msk [vmem:[%s261 + $0xf9] sm:$0xff] %vm252, %v316
        %349 = vst.msk [vmem:[%s261 + $0x109] sm:$0xff] %vm252, %v317
        %350 = vst.msk [vmem:[%s261 + $0x111] sm:$0xff] %vm252, %v318
        %351 = vst.msk [vmem:[%s261 + $0x121] sm:$0xff] %vm252, %v319
        %352 = vst.msk [vmem:[%s261 + $0x129] sm:$0xff] %vm252, %v320
        %353 = vst.msk [vmem:[%s261 + $0x139] sm:$0xff] %vm252, %v321
        %354 = vst.msk [vmem:[%s261 + $0x141] sm:$0xff] %vm252, %v322
        %355 = vst.msk [vmem:[%s261 + $0x151] sm:$0xff] %vm252, %v323
        %356 = vst.msk [vmem:[%s261 + $0x159] sm:$0xff] %vm252, %v324
        %357 = vst.msk [vmem:[%s261 + $0x169] sm:$0xff] %vm252, %v325
        %358 = vst.msk [vmem:[%s261 + $0x171] sm:$0xff] %vm252, %v326
        %v359 = vld [vmem:[#allocation2] sm:$0xff]
        %v360 = vld [vmem:[#allocation2 + $0x8] sm:$0xff]
        %v361 = vld [vmem:[#allocation2 + $0x18] sm:$0xff]
        %v362 = vld [vmem:[#allocation2 + $0x20] sm:$0xff]
        %v363 = vld [vmem:[#allocation2 + $0x30] sm:$0xff]
        %v364 = vld [vmem:[#allocation2 + $0x38] sm:$0xff]
        %v365 = vld [vmem:[#allocation2 + $0x48] sm:$0xff]
        %v366 = vld [vmem:[#allocation2 + $0x50] sm:$0xff]
        %v367 = vld [vmem:[#allocation2 + $0x60] sm:$0xff]
        %v368 = vld [vmem:[#allocation2 + $0x68] sm:$0xff]
        %v369 = vld [vmem:[#allocation2 + $0x78] sm:$0xff]
        %v370 = vld [vmem:[#allocation2 + $0x80] sm:$0xff]
        %v371 = vld [vmem:[#allocation2 + $0x90] sm:$0xff]
        %v372 = vld [vmem:[#allocation2 + $0x98] sm:$0xff]
        %v373 = vld [vmem:[#allocation2 + $0xa8] sm:$0xff]
        %v374 = vld [vmem:[#allocation2 + $0xb0] sm:$0xff]
        %v375 = vld [vmem:[#allocation2 + $0xc0] sm:$0xff]
        %v376 = vld [vmem:[#allocation2 + $0xc8] sm:$0xff]
        %v377 = vld [vmem:[#allocation2 + $0xd8] sm:$0xff]
        %v378 = vld [vmem:[#allocation2 + $0xe0] sm:$0xff]
        %v379 = vld [vmem:[#allocation2 + $0xf0] sm:$0xff]
        %v380 = vld [vmem:[#allocation2 + $0xf8] sm:$0xff]
        %v381 = vld [vmem:[#allocation2 + $0x108] sm:$0xff]
        %v382 = vld [vmem:[#allocation2 + $0x110] sm:$0xff]
        %v383 = vld [vmem:[#allocation2 + $0x120] sm:$0xff]
        %v384 = vld [vmem:[#allocation2 + $0x128] sm:$0xff]
        %v385 = vld [vmem:[#allocation2 + $0x138] sm:$0xff]
        %v386 = vld [vmem:[#allocation2 + $0x140] sm:$0xff]
        %v387 = vld [vmem:[#allocation2 + $0x150] sm:$0xff]
        %v388 = vld [vmem:[#allocation2 + $0x158] sm:$0xff]
        %v389 = vld [vmem:[#allocation2 + $0x168] sm:$0xff]
        %v390 = vld [vmem:[#allocation2 + $0x170] sm:$0xff]
        %391 = vst.msk [vmem:[#allocation3] sm:$0xff] %vm252, %v359
        %392 = vst.msk [vmem:[#allocation3 + $0x28] sm:$0xff] %vm252, %v360
        %393 = vst.msk [vmem:[#allocation3 + $0x50] sm:$0xff] %vm252, %v361
        %394 = vst.msk [vmem:[#allocation3 + $0x78] sm:$0xff] %vm252, %v362
        %395 = vst.msk [vmem:[#allocation3 + $0xa0] sm:$0xff] %vm252, %v363
        %396 = vst.msk [vmem:[#allocation3 + $0xc8] sm:$0xff] %vm252, %v364
        %397 = vst.msk [vmem:[#allocation3 + $0xf0] sm:$0xff] %vm252, %v365
        %398 = vst.msk [vmem:[#allocation3 + $0x118] sm:$0xff] %vm252, %v366
        %399 = vst.msk [vmem:[#allocation3 + $0x140] sm:$0xff] %vm252, %v367
        %400 = vst.msk [vmem:[#allocation3 + $0x168] sm:$0xff] %vm252, %v368
        %401 = vst.msk [vmem:[#allocation3 + $0x190] sm:$0xff] %vm252, %v369
        %402 = vst.msk [vmem:[#allocation3 + $0x1b8] sm:$0xff] %vm252, %v370
        %403 = vst.msk [vmem:[#allocation3 + $0x1e0] sm:$0xff] %vm252, %v371
        %404 = vst.msk [vmem:[#allocation3 + $0x208] sm:$0xff] %vm252, %v372
        %405 = vst.msk [vmem:[#allocation3 + $0x230] sm:$0xff] %vm252, %v373
        %406 = vst.msk [vmem:[#allocation3 + $0x258] sm:$0xff] %vm252, %v374
        %407 = vst.msk [vmem:[#allocation3 + $0x280] sm:$0xff] %vm252, %v375
        %408 = vst.msk [vmem:[#allocation3 + $0x2a8] sm:$0xff] %vm252, %v376
        %409 = vst.msk [vmem:[#allocation3 + $0x2d0] sm:$0xff] %vm252, %v377
        %410 = vst.msk [vmem:[#allocation3 + $0x2f8] sm:$0xff] %vm252, %v378
        %411 = vst.msk [vmem:[#allocation3 + $0x320] sm:$0xff] %vm252, %v379
        %412 = vst.msk [vmem:[#allocation3 + $0x348] sm:$0xff] %vm252, %v380
        %413 = vst.msk [vmem:[#allocation3 + $0x370] sm:$0xff] %vm252, %v381
        %414 = vst.msk [vmem:[#allocation3 + $0x398] sm:$0xff] %vm252, %v382
        %415 = vst.msk [vmem:[#allocation3 + $0x3c0] sm:$0xff] %vm252, %v383
        %416 = vst.msk [vmem:[#allocation3 + $0x3e8] sm:$0xff] %vm252, %v384
        %417 = vst.msk [vmem:[#allocation3 + $0x410] sm:$0xff] %vm252, %v385
        %418 = vst.msk [vmem:[#allocation3 + $0x438] sm:$0xff] %vm252, %v386
        %419 = vst.msk [vmem:[#allocation3 + $0x460] sm:$0xff] %vm252, %v387
        %420 = vst.msk [vmem:[#allocation3 + $0x488] sm:$0xff] %vm252, %v388
        %421 = vst.msk [vmem:[#allocation3 + $0x4b0] sm:$0xff] %vm252, %v389
        %422 = vst.msk [vmem:[#allocation3 + $0x4d8] sm:$0xff] %vm252, %v390
        %v423 = vld [vmem:[#allocation2 + $0x1] sm:$0xff]
        %v424 = vld [vmem:[#allocation2 + $0x9] sm:$0xff]
        %v425 = vld [vmem:[#allocation2 + $0x19] sm:$0xff]
        %v426 = vld [vmem:[#allocation2 + $0x21] sm:$0xff]
        %v427 = vld [vmem:[#allocation2 + $0x31] sm:$0xff]
        %v428 = vld [vmem:[#allocation2 + $0x39] sm:$0xff]
        %v429 = vld [vmem:[#allocation2 + $0x49] sm:$0xff]
        %v430 = vld [vmem:[#allocation2 + $0x51] sm:$0xff]
        %v431 = vld [vmem:[#allocation2 + $0x61] sm:$0xff]
        %v432 = vld [vmem:[#allocation2 + $0x69] sm:$0xff]
        %v433 = vld [vmem:[#allocation2 + $0x79] sm:$0xff]
        %v434 = vld [vmem:[#allocation2 + $0x81] sm:$0xff]
        %v435 = vld [vmem:[#allocation2 + $0x91] sm:$0xff]
        %v436 = vld [vmem:[#allocation2 + $0x99] sm:$0xff]
        %v437 = vld [vmem:[#allocation2 + $0xa9] sm:$0xff]
        %v438 = vld [vmem:[#allocation2 + $0xb1] sm:$0xff]
        %v439 = vld [vmem:[#allocation2 + $0xc1] sm:$0xff]
        %v440 = vld [vmem:[#allocation2 + $0xc9] sm:$0xff]
        %v441 = vld [vmem:[#allocation2 + $0xd9] sm:$0xff]
        %v442 = vld [vmem:[#allocation2 + $0xe1] sm:$0xff]
        %v443 = vld [vmem:[#allocation2 + $0xf1] sm:$0xff]
        %v444 = vld [vmem:[#allocation2 + $0xf9] sm:$0xff]
        %v445 = vld [vmem:[#allocation2 + $0x109] sm:$0xff]
        %v446 = vld [vmem:[#allocation2 + $0x111] sm:$0xff]
        %v447 = vld [vmem:[#allocation2 + $0x121] sm:$0xff]
        %v448 = vld [vmem:[#allocation2 + $0x129] sm:$0xff]
        %v449 = vld [vmem:[#allocation2 + $0x139] sm:$0xff]
        %v450 = vld [vmem:[#allocation2 + $0x141] sm:$0xff]
        %v451 = vld [vmem:[#allocation2 + $0x151] sm:$0xff]
        %v452 = vld [vmem:[#allocation2 + $0x159] sm:$0xff]
        %v453 = vld [vmem:[#allocation2 + $0x169] sm:$0xff]
        %v454 = vld [vmem:[#allocation2 + $0x171] sm:$0xff]
        %487 = vrot.lane.b32.xlu0 %v423, 64
        %v488 = vpop.permute.xlu0 %487
        %489 = vrot.lane.b32.xlu0 %v424, 64
        %v490 = vpop.permute.xlu0 %489
        %491 = vrot.lane.b32.xlu0 %v425, 64
        %v492 = vpop.permute.xlu0 %491
        %493 = vrot.lane.b32.xlu0 %v426, 64
        %v494 = vpop.permute.xlu0 %493
        %495 = vrot.lane.b32.xlu0 %v427, 64
        %v496 = vpop.permute.xlu0 %495
        %497 = vrot.lane.b32.xlu0 %v428, 64
        %v498 = vpop.permute.xlu0 %497
        %499 = vrot.lane.b32.xlu0 %v429, 64
        %v500 = vpop.permute.xlu0 %499
        %501 = vrot.lane.b32.xlu0 %v430, 64
        %v502 = vpop.permute.xlu0 %501
        %503 = vrot.lane.b32.xlu0 %v431, 64
        %v504 = vpop.permute.xlu0 %503
        %505 = vrot.lane.b32.xlu0 %v432, 64
        %v506 = vpop.permute.xlu0 %505
        %507 = vrot.lane.b32.xlu0 %v433, 64
        %v508 = vpop.permute.xlu0 %507
        %509 = vrot.lane.b32.xlu0 %v434, 64
        %v510 = vpop.permute.xlu0 %509
        %511 = vrot.lane.b32.xlu0 %v435, 64
        %v512 = vpop.permute.xlu0 %511
        %513 = vrot.lane.b32.xlu0 %v436, 64
        %v514 = vpop.permute.xlu0 %513
        %515 = vrot.lane.b32.xlu0 %v437, 64
        %v516 = vpop.permute.xlu0 %515
        %517 = vrot.lane.b32.xlu0 %v438, 64
        %v518 = vpop.permute.xlu0 %517
        %519 = vrot.lane.b32.xlu0 %v439, 64
        %v520 = vpop.permute.xlu0 %519
        %521 = vrot.lane.b32.xlu0 %v440, 64
        %v522 = vpop.permute.xlu0 %521
        %523 = vrot.lane.b32.xlu0 %v441, 64
        %v524 = vpop.permute.xlu0 %523
        %525 = vrot.lane.b32.xlu0 %v442, 64
        %v526 = vpop.permute.xlu0 %525
        %527 = vrot.lane.b32.xlu0 %v443, 64
        %v528 = vpop.permute.xlu0 %527
        %529 = vrot.lane.b32.xlu0 %v444, 64
        %v530 = vpop.permute.xlu0 %529
        %531 = vrot.lane.b32.xlu0 %v445, 64
        %v532 = vpop.permute.xlu0 %531
        %533 = vrot.lane.b32.xlu0 %v446, 64
        %v534 = vpop.permute.xlu0 %533
        %535 = vrot.lane.b32.xlu0 %v447, 64
        %v536 = vpop.permute.xlu0 %535
        %537 = vrot.lane.b32.xlu0 %v448, 64
        %v538 = vpop.permute.xlu0 %537
        %539 = vrot.lane.b32.xlu0 %v449, 64
        %v540 = vpop.permute.xlu0 %539
        %541 = vrot.lane.b32.xlu0 %v450, 64
        %v542 = vpop.permute.xlu0 %541
        %543 = vrot.lane.b32.xlu0 %v451, 64
        %v544 = vpop.permute.xlu0 %543
        %545 = vrot.lane.b32.xlu0 %v452, 64
        %v546 = vpop.permute.xlu0 %545
        %547 = vrot.lane.b32.xlu0 %v453, 64
        %v548 = vpop.permute.xlu0 %547
        %549 = vrot.lane.b32.xlu0 %v454, 64
        %v550 = vpop.permute.xlu0 %549
        %vm583 = vcmask 1048064
        %584 = vst.msk [vmem:[#allocation3] sm:$0xff] %vm583, %v488
        %585 = vst.msk [vmem:[#allocation3 + $0x28] sm:$0xff] %vm583, %v490
        %586 = vst.msk [vmem:[#allocation3 + $0x50] sm:$0xff] %vm583, %v492
        %587 = vst.msk [vmem:[#allocation3 + $0x78] sm:$0xff] %vm583, %v494
        %588 = vst.msk [vmem:[#allocation3 + $0xa0] sm:$0xff] %vm583, %v496
        %589 = vst.msk [vmem:[#allocation3 + $0xc8] sm:$0xff] %vm583, %v498
        %590 = vst.msk [vmem:[#allocation3 + $0xf0] sm:$0xff] %vm583, %v500
        %591 = vst.msk [vmem:[#allocation3 + $0x118] sm:$0xff] %vm583, %v502
        %592 = vst.msk [vmem:[#allocation3 + $0x140] sm:$0xff] %vm583, %v504
        %593 = vst.msk [vmem:[#allocation3 + $0x168] sm:$0xff] %vm583, %v506
        %594 = vst.msk [vmem:[#allocation3 + $0x190] sm:$0xff] %vm583, %v508
        %595 = vst.msk [vmem:[#allocation3 + $0x1b8] sm:$0xff] %vm583, %v510
        %596 = vst.msk [vmem:[#allocation3 + $0x1e0] sm:$0xff] %vm583, %v512
        %597 = vst.msk [vmem:[#allocation3 + $0x208] sm:$0xff] %vm583, %v514
        %598 = vst.msk [vmem:[#allocation3 + $0x230] sm:$0xff] %vm583, %v516
        %599 = vst.msk [vmem:[#allocation3 + $0x258] sm:$0xff] %vm583, %v518
        %600 = vst.msk [vmem:[#allocation3 + $0x280] sm:$0xff] %vm583, %v520
        %601 = vst.msk [vmem:[#allocation3 + $0x2a8] sm:$0xff] %vm583, %v522
        %602 = vst.msk [vmem:[#allocation3 + $0x2d0] sm:$0xff] %vm583, %v524
        %603 = vst.msk [vmem:[#allocation3 + $0x2f8] sm:$0xff] %vm583, %v526
        %604 = vst.msk [vmem:[#allocation3 + $0x320] sm:$0xff] %vm583, %v528
        %605 = vst.msk [vmem:[#allocation3 + $0x348] sm:$0xff] %vm583, %v530
        %606 = vst.msk [vmem:[#allocation3 + $0x370] sm:$0xff] %vm583, %v532
        %607 = vst.msk [vmem:[#allocation3 + $0x398] sm:$0xff] %vm583, %v534
        %608 = vst.msk [vmem:[#allocation3 + $0x3c0] sm:$0xff] %vm583, %v536
        %609 = vst.msk [vmem:[#allocation3 + $0x3e8] sm:$0xff] %vm583, %v538
        %610 = vst.msk [vmem:[#allocation3 + $0x410] sm:$0xff] %vm583, %v540
        %611 = vst.msk [vmem:[#allocation3 + $0x438] sm:$0xff] %vm583, %v542
        %612 = vst.msk [vmem:[#allocation3 + $0x460] sm:$0xff] %vm583, %v544
        %613 = vst.msk [vmem:[#allocation3 + $0x488] sm:$0xff] %vm583, %v546
        %614 = vst.msk [vmem:[#allocation3 + $0x4b0] sm:$0xff] %vm583, %v548
        %615 = vst.msk [vmem:[#allocation3 + $0x4d8] sm:$0xff] %vm583, %v550
        %v616 = vld [vmem:[#allocation2 + $0x2] sm:$0xff]
        %v617 = vld [vmem:[#allocation2 + $0xa] sm:$0xff]
        %v618 = vld [vmem:[#allocation2 + $0x1a] sm:$0xff]
        %v619 = vld [vmem:[#allocation2 + $0x22] sm:$0xff]
        %v620 = vld [vmem:[#allocation2 + $0x32] sm:$0xff]
        %v621 = vld [vmem:[#allocation2 + $0x3a] sm:$0xff]
        %v622 = vld [vmem:[#allocation2 + $0x4a] sm:$0xff]
        %v623 = vld [vmem:[#allocation2 + $0x52] sm:$0xff]
        %v624 = vld [vmem:[#allocation2 + $0x62] sm:$0xff]
        %v625 = vld [vmem:[#allocation2 + $0x6a] sm:$0xff]
        %v626 = vld [vmem:[#allocation2 + $0x7a] sm:$0xff]
        %v627 = vld [vmem:[#allocation2 + $0x82] sm:$0xff]
        %v628 = vld [vmem:[#allocation2 + $0x92] sm:$0xff]
        %v629 = vld [vmem:[#allocation2 + $0x9a] sm:$0xff]
        %v630 = vld [vmem:[#allocation2 + $0xaa] sm:$0xff]
        %v631 = vld [vmem:[#allocation2 + $0xb2] sm:$0xff]
        %v632 = vld [vmem:[#allocation2 + $0xc2] sm:$0xff]
        %v633 = vld [vmem:[#allocation2 + $0xca] sm:$0xff]
        %v634 = vld [vmem:[#allocation2 + $0xda] sm:$0xff]
        %v635 = vld [vmem:[#allocation2 + $0xe2] sm:$0xff]
        %v636 = vld [vmem:[#allocation2 + $0xf2] sm:$0xff]
        %v637 = vld [vmem:[#allocation2 + $0xfa] sm:$0xff]
        %v638 = vld [vmem:[#allocation2 + $0x10a] sm:$0xff]
        %v639 = vld [vmem:[#allocation2 + $0x112] sm:$0xff]
        %v640 = vld [vmem:[#allocation2 + $0x122] sm:$0xff]
        %v641 = vld [vmem:[#allocation2 + $0x12a] sm:$0xff]
        %v642 = vld [vmem:[#allocation2 + $0x13a] sm:$0xff]
        %v643 = vld [vmem:[#allocation2 + $0x142] sm:$0xff]
        %v644 = vld [vmem:[#allocation2 + $0x152] sm:$0xff]
        %v645 = vld [vmem:[#allocation2 + $0x15a] sm:$0xff]
        %v646 = vld [vmem:[#allocation2 + $0x16a] sm:$0xff]
        %v647 = vld [vmem:[#allocation2 + $0x172] sm:$0xff]
        %648 = vst.msk [vmem:[#allocation3 + $0x8] sm:$0xff] %vm252, %v616
        %649 = vst.msk [vmem:[#allocation3 + $0x30] sm:$0xff] %vm252, %v617
        %650 = vst.msk [vmem:[#allocation3 + $0x58] sm:$0xff] %vm252, %v618
        %651 = vst.msk [vmem:[#allocation3 + $0x80] sm:$0xff] %vm252, %v619
        %652 = vst.msk [vmem:[#allocation3 + $0xa8] sm:$0xff] %vm252, %v620
        %653 = vst.msk [vmem:[#allocation3 + $0xd0] sm:$0xff] %vm252, %v621
        %654 = vst.msk [vmem:[#allocation3 + $0xf8] sm:$0xff] %vm252, %v622
        %655 = vst.msk [vmem:[#allocation3 + $0x120] sm:$0xff] %vm252, %v623
        %656 = vst.msk [vmem:[#allocation3 + $0x148] sm:$0xff] %vm252, %v624
        %657 = vst.msk [vmem:[#allocation3 + $0x170] sm:$0xff] %vm252, %v625
        %658 = vst.msk [vmem:[#allocation3 + $0x198] sm:$0xff] %vm252, %v626
        %659 = vst.msk [vmem:[#allocation3 + $0x1c0] sm:$0xff] %vm252, %v627
        %660 = vst.msk [vmem:[#allocation3 + $0x1e8] sm:$0xff] %vm252, %v628
        %661 = vst.msk [vmem:[#allocation3 + $0x210] sm:$0xff] %vm252, %v629
        %662 = vst.msk [vmem:[#allocation3 + $0x238] sm:$0xff] %vm252, %v630
        %663 = vst.msk [vmem:[#allocation3 + $0x260] sm:$0xff] %vm252, %v631
        %664 = vst.msk [vmem:[#allocation3 + $0x288] sm:$0xff] %vm252, %v632
        %665 = vst.msk [vmem:[#allocation3 + $0x2b0] sm:$0xff] %vm252, %v633
        %666 = vst.msk [vmem:[#allocation3 + $0x2d8] sm:$0xff] %vm252, %v634
        %667 = vst.msk [vmem:[#allocation3 + $0x300] sm:$0xff] %vm252, %v635
        %668 = vst.msk [vmem:[#allocation3 + $0x328] sm:$0xff] %vm252, %v636
        %669 = vst.msk [vmem:[#allocation3 + $0x350] sm:$0xff] %vm252, %v637
        %670 = vst.msk [vmem:[#allocation3 + $0x378] sm:$0xff] %vm252, %v638
        %671 = vst.msk [vmem:[#allocation3 + $0x3a0] sm:$0xff] %vm252, %v639
        %672 = vst.msk [vmem:[#allocation3 + $0x3c8] sm:$0xff] %vm252, %v640
        %673 = vst.msk [vmem:[#allocation3 + $0x3f0] sm:$0xff] %vm252, %v641
        %674 = vst.msk [vmem:[#allocation3 + $0x418] sm:$0xff] %vm252, %v642
        %675 = vst.msk [vmem:[#allocation3 + $0x440] sm:$0xff] %vm252, %v643
        %676 = vst.msk [vmem:[#allocation3 + $0x468] sm:$0xff] %vm252, %v644
        %677 = vst.msk [vmem:[#allocation3 + $0x490] sm:$0xff] %vm252, %v645
        %678 = vst.msk [vmem:[#allocation3 + $0x4b8] sm:$0xff] %vm252, %v646
        %679 = vst.msk [vmem:[#allocation3 + $0x4e0] sm:$0xff] %vm252, %v647
        %v680 = vld [vmem:[%s261] sm:$0xff]
        %v681 = vld [vmem:[%s261 + $0x8] sm:$0xff]
        %v682 = vld [vmem:[%s261 + $0x18] sm:$0xff]
        %v683 = vld [vmem:[%s261 + $0x20] sm:$0xff]
        %v684 = vld [vmem:[%s261 + $0x30] sm:$0xff]
        %v685 = vld [vmem:[%s261 + $0x38] sm:$0xff]
        %v686 = vld [vmem:[%s261 + $0x48] sm:$0xff]
        %v687 = vld [vmem:[%s261 + $0x50] sm:$0xff]
        %v688 = vld [vmem:[%s261 + $0x60] sm:$0xff]
        %v689 = vld [vmem:[%s261 + $0x68] sm:$0xff]
        %v690 = vld [vmem:[%s261 + $0x78] sm:$0xff]
        %v691 = vld [vmem:[%s261 + $0x80] sm:$0xff]
        %v692 = vld [vmem:[%s261 + $0x90] sm:$0xff]
        %v693 = vld [vmem:[%s261 + $0x98] sm:$0xff]
        %v694 = vld [vmem:[%s261 + $0xa8] sm:$0xff]
        %v695 = vld [vmem:[%s261 + $0xb0] sm:$0xff]
        %v696 = vld [vmem:[%s261 + $0xc0] sm:$0xff]
        %v697 = vld [vmem:[%s261 + $0xc8] sm:$0xff]
        %v698 = vld [vmem:[%s261 + $0xd8] sm:$0xff]
        %v699 = vld [vmem:[%s261 + $0xe0] sm:$0xff]
        %v700 = vld [vmem:[%s261 + $0xf0] sm:$0xff]
        %v701 = vld [vmem:[%s261 + $0xf8] sm:$0xff]
        %v702 = vld [vmem:[%s261 + $0x108] sm:$0xff]
        %v703 = vld [vmem:[%s261 + $0x110] sm:$0xff]
        %v704 = vld [vmem:[%s261 + $0x120] sm:$0xff]
        %v705 = vld [vmem:[%s261 + $0x128] sm:$0xff]
        %v706 = vld [vmem:[%s261 + $0x138] sm:$0xff]
        %v707 = vld [vmem:[%s261 + $0x140] sm:$0xff]
        %v708 = vld [vmem:[%s261 + $0x150] sm:$0xff]
        %v709 = vld [vmem:[%s261 + $0x158] sm:$0xff]
        %v710 = vld [vmem:[%s261 + $0x168] sm:$0xff]
        %v711 = vld [vmem:[%s261 + $0x170] sm:$0xff]
        %744 = vrot.lane.b32.xlu0 %v680, 64
        %v745 = vpop.permute.xlu0 %744
        %746 = vrot.lane.b32.xlu0 %v681, 64
        %v747 = vpop.permute.xlu0 %746
        %748 = vrot.lane.b32.xlu0 %v682, 64
        %v749 = vpop.permute.xlu0 %748
        %750 = vrot.lane.b32.xlu0 %v683, 64
        %v751 = vpop.permute.xlu0 %750
        %752 = vrot.lane.b32.xlu0 %v684, 64
        %v753 = vpop.permute.xlu0 %752
        %754 = vrot.lane.b32.xlu0 %v685, 64
        %v755 = vpop.permute.xlu0 %754
        %756 = vrot.lane.b32.xlu0 %v686, 64
        %v757 = vpop.permute.xlu0 %756
        %758 = vrot.lane.b32.xlu0 %v687, 64
        %v759 = vpop.permute.xlu0 %758
        %760 = vrot.lane.b32.xlu0 %v688, 64
        %v761 = vpop.permute.xlu0 %760
        %762 = vrot.lane.b32.xlu0 %v689, 64
        %v763 = vpop.permute.xlu0 %762
        %764 = vrot.lane.b32.xlu0 %v690, 64
        %v765 = vpop.permute.xlu0 %764
        %766 = vrot.lane.b32.xlu0 %v691, 64
        %v767 = vpop.permute.xlu0 %766
        %768 = vrot.lane.b32.xlu0 %v692, 64
        %v769 = vpop.permute.xlu0 %768
        %770 = vrot.lane.b32.xlu0 %v693, 64
        %v771 = vpop.permute.xlu0 %770
        %772 = vrot.lane.b32.xlu0 %v694, 64
        %v773 = vpop.permute.xlu0 %772
        %774 = vrot.lane.b32.xlu0 %v695, 64
        %v775 = vpop.permute.xlu0 %774
        %776 = vrot.lane.b32.xlu0 %v696, 64
        %v777 = vpop.permute.xlu0 %776
        %778 = vrot.lane.b32.xlu0 %v697, 64
        %v779 = vpop.permute.xlu0 %778
        %780 = vrot.lane.b32.xlu0 %v698, 64
        %v781 = vpop.permute.xlu0 %780
        %782 = vrot.lane.b32.xlu0 %v699, 64
        %v783 = vpop.permute.xlu0 %782
        %784 = vrot.lane.b32.xlu0 %v700, 64
        %v785 = vpop.permute.xlu0 %784
        %786 = vrot.lane.b32.xlu0 %v701, 64
        %v787 = vpop.permute.xlu0 %786
        %788 = vrot.lane.b32.xlu0 %v702, 64
        %v789 = vpop.permute.xlu0 %788
        %790 = vrot.lane.b32.xlu0 %v703, 64
        %v791 = vpop.permute.xlu0 %790
        %792 = vrot.lane.b32.xlu0 %v704, 64
        %v793 = vpop.permute.xlu0 %792
        %794 = vrot.lane.b32.xlu0 %v705, 64
        %v795 = vpop.permute.xlu0 %794
        %796 = vrot.lane.b32.xlu0 %v706, 64
        %v797 = vpop.permute.xlu0 %796
        %798 = vrot.lane.b32.xlu0 %v707, 64
        %v799 = vpop.permute.xlu0 %798
        %800 = vrot.lane.b32.xlu0 %v708, 64
        %v801 = vpop.permute.xlu0 %800
        %802 = vrot.lane.b32.xlu0 %v709, 64
        %v803 = vpop.permute.xlu0 %802
        %804 = vrot.lane.b32.xlu0 %v710, 64
        %v805 = vpop.permute.xlu0 %804
        %806 = vrot.lane.b32.xlu0 %v711, 64
        %v807 = vpop.permute.xlu0 %806
        %840 = vst.msk [vmem:[#allocation3 + $0x8] sm:$0xff] %vm583, %v745
        %841 = vst.msk [vmem:[#allocation3 + $0x30] sm:$0xff] %vm583, %v747
        %842 = vst.msk [vmem:[#allocation3 + $0x58] sm:$0xff] %vm583, %v749
        %843 = vst.msk [vmem:[#allocation3 + $0x80] sm:$0xff] %vm583, %v751
        %844 = vst.msk [vmem:[#allocation3 + $0xa8] sm:$0xff] %vm583, %v753
        %845 = vst.msk [vmem:[#allocation3 + $0xd0] sm:$0xff] %vm583, %v755
        %846 = vst.msk [vmem:[#allocation3 + $0xf8] sm:$0xff] %vm583, %v757
        %847 = vst.msk [vmem:[#allocation3 + $0x120] sm:$0xff] %vm583, %v759
        %848 = vst.msk [vmem:[#allocation3 + $0x148] sm:$0xff] %vm583, %v761
        %849 = vst.msk [vmem:[#allocation3 + $0x170] sm:$0xff] %vm583, %v763
        %850 = vst.msk [vmem:[#allocation3 + $0x198] sm:$0xff] %vm583, %v765
        %851 = vst.msk [vmem:[#allocation3 + $0x1c0] sm:$0xff] %vm583, %v767
        %852 = vst.msk [vmem:[#allocation3 + $0x1e8] sm:$0xff] %vm583, %v769
        %853 = vst.msk [vmem:[#allocation3 + $0x210] sm:$0xff] %vm583, %v771
        %854 = vst.msk [vmem:[#allocation3 + $0x238] sm:$0xff] %vm583, %v773
        %855 = vst.msk [vmem:[#allocation3 + $0x260] sm:$0xff] %vm583, %v775
        %856 = vst.msk [vmem:[#allocation3 + $0x288] sm:$0xff] %vm583, %v777
        %857 = vst.msk [vmem:[#allocation3 + $0x2b0] sm:$0xff] %vm583, %v779
        %858 = vst.msk [vmem:[#allocation3 + $0x2d8] sm:$0xff] %vm583, %v781
        %859 = vst.msk [vmem:[#allocation3 + $0x300] sm:$0xff] %vm583, %v783
        %860 = vst.msk [vmem:[#allocation3 + $0x328] sm:$0xff] %vm583, %v785
        %861 = vst.msk [vmem:[#allocation3 + $0x350] sm:$0xff] %vm583, %v787
        %862 = vst.msk [vmem:[#allocation3 + $0x378] sm:$0xff] %vm583, %v789
        %863 = vst.msk [vmem:[#allocation3 + $0x3a0] sm:$0xff] %vm583, %v791
        %864 = vst.msk [vmem:[#allocation3 + $0x3c8] sm:$0xff] %vm583, %v793
        %865 = vst.msk [vmem:[#allocation3 + $0x3f0] sm:$0xff] %vm583, %v795
        %866 = vst.msk [vmem:[#allocation3 + $0x418] sm:$0xff] %vm583, %v797
        %867 = vst.msk [vmem:[#allocation3 + $0x440] sm:$0xff] %vm583, %v799
        %868 = vst.msk [vmem:[#allocation3 + $0x468] sm:$0xff] %vm583, %v801
        %869 = vst.msk [vmem:[#allocation3 + $0x490] sm:$0xff] %vm583, %v803
        %870 = vst.msk [vmem:[#allocation3 + $0x4b8] sm:$0xff] %vm583, %v805
        %871 = vst.msk [vmem:[#allocation3 + $0x4e0] sm:$0xff] %vm583, %v807
        %v872 = vld [vmem:[%s261 + $0x1] sm:$0xff]
        %v873 = vld [vmem:[%s261 + $0x9] sm:$0xff]
        %v874 = vld [vmem:[%s261 + $0x19] sm:$0xff]
        %v875 = vld [vmem:[%s261 + $0x21] sm:$0xff]
        %v876 = vld [vmem:[%s261 + $0x31] sm:$0xff]
        %v877 = vld [vmem:[%s261 + $0x39] sm:$0xff]
        %v878 = vld [vmem:[%s261 + $0x49] sm:$0xff]
        %v879 = vld [vmem:[%s261 + $0x51] sm:$0xff]
        %v880 = vld [vmem:[%s261 + $0x61] sm:$0xff]
        %v881 = vld [vmem:[%s261 + $0x69] sm:$0xff]
        %v882 = vld [vmem:[%s261 + $0x79] sm:$0xff]
        %v883 = vld [vmem:[%s261 + $0x81] sm:$0xff]
        %v884 = vld [vmem:[%s261 + $0x91] sm:$0xff]
        %v885 = vld [vmem:[%s261 + $0x99] sm:$0xff]
        %v886 = vld [vmem:[%s261 + $0xa9] sm:$0xff]
        %v887 = vld [vmem:[%s261 + $0xb1] sm:$0xff]
        %v888 = vld [vmem:[%s261 + $0xc1] sm:$0xff]
        %v889 = vld [vmem:[%s261 + $0xc9] sm:$0xff]
        %v890 = vld [vmem:[%s261 + $0xd9] sm:$0xff]
        %v891 = vld [vmem:[%s261 + $0xe1] sm:$0xff]
        %v892 = vld [vmem:[%s261 + $0xf1] sm:$0xff]
        %v893 = vld [vmem:[%s261 + $0xf9] sm:$0xff]
        %v894 = vld [vmem:[%s261 + $0x109] sm:$0xff]
        %v895 = vld [vmem:[%s261 + $0x111] sm:$0xff]
        %v896 = vld [vmem:[%s261 + $0x121] sm:$0xff]
        %v897 = vld [vmem:[%s261 + $0x129] sm:$0xff]
        %v898 = vld [vmem:[%s261 + $0x139] sm:$0xff]
        %v899 = vld [vmem:[%s261 + $0x141] sm:$0xff]
        %v900 = vld [vmem:[%s261 + $0x151] sm:$0xff]
        %v901 = vld [vmem:[%s261 + $0x159] sm:$0xff]
        %v902 = vld [vmem:[%s261 + $0x169] sm:$0xff]
        %v903 = vld [vmem:[%s261 + $0x171] sm:$0xff]
        %904 = vst.msk [vmem:[#allocation3 + $0x10] sm:$0xff] %vm252, %v872
        %905 = vst.msk [vmem:[#allocation3 + $0x38] sm:$0xff] %vm252, %v873
        %906 = vst.msk [vmem:[#allocation3 + $0x60] sm:$0xff] %vm252, %v874
        %907 = vst.msk [vmem:[#allocation3 + $0x88] sm:$0xff] %vm252, %v875
        %908 = vst.msk [vmem:[#allocation3 + $0xb0] sm:$0xff] %vm252, %v876
        %909 = vst.msk [vmem:[#allocation3 + $0xd8] sm:$0xff] %vm252, %v877
        %910 = vst.msk [vmem:[#allocation3 + $0x100] sm:$0xff] %vm252, %v878
        %911 = vst.msk [vmem:[#allocation3 + $0x128] sm:$0xff] %vm252, %v879
        %912 = vst.msk [vmem:[#allocation3 + $0x150] sm:$0xff] %vm252, %v880
        %913 = vst.msk [vmem:[#allocation3 + $0x178] sm:$0xff] %vm252, %v881
        %914 = vst.msk [vmem:[#allocation3 + $0x1a0] sm:$0xff] %vm252, %v882
        %915 = vst.msk [vmem:[#allocation3 + $0x1c8] sm:$0xff] %vm252, %v883
        %916 = vst.msk [vmem:[#allocation3 + $0x1f0] sm:$0xff] %vm252, %v884
        %917 = vst.msk [vmem:[#allocation3 + $0x218] sm:$0xff] %vm252, %v885
        %918 = vst.msk [vmem:[#allocation3 + $0x240] sm:$0xff] %vm252, %v886
        %919 = vst.msk [vmem:[#allocation3 + $0x268] sm:$0xff] %vm252, %v887
        %920 = vst.msk [vmem:[#allocation3 + $0x290] sm:$0xff] %vm252, %v888
        %921 = vst.msk [vmem:[#allocation3 + $0x2b8] sm:$0xff] %vm252, %v889
        %922 = vst.msk [vmem:[#allocation3 + $0x2e0] sm:$0xff] %vm252, %v890
        %923 = vst.msk [vmem:[#allocation3 + $0x308] sm:$0xff] %vm252, %v891
        %924 = vst.msk [vmem:[#allocation3 + $0x330] sm:$0xff] %vm252, %v892
        %925 = vst.msk [vmem:[#allocation3 + $0x358] sm:$0xff] %vm252, %v893
        %926 = vst.msk [vmem:[#allocation3 + $0x380] sm:$0xff] %vm252, %v894
        %927 = vst.msk [vmem:[#allocation3 + $0x3a8] sm:$0xff] %vm252, %v895
        %928 = vst.msk [vmem:[#allocation3 + $0x3d0] sm:$0xff] %vm252, %v896
        %929 = vst.msk [vmem:[#allocation3 + $0x3f8] sm:$0xff] %vm252, %v897
        %930 = vst.msk [vmem:[#allocation3 + $0x420] sm:$0xff] %vm252, %v898
        %931 = vst.msk [vmem:[#allocation3 + $0x448] sm:$0xff] %vm252, %v899
        %932 = vst.msk [vmem:[#allocation3 + $0x470] sm:$0xff] %vm252, %v900
        %933 = vst.msk [vmem:[#allocation3 + $0x498] sm:$0xff] %vm252, %v901
        %934 = vst.msk [vmem:[#allocation3 + $0x4c0] sm:$0xff] %vm252, %v902
        %935 = vst.msk [vmem:[#allocation3 + $0x4e8] sm:$0xff] %vm252, %v903
        %v936 = vld [vmem:[%s261 + $0x2] sm:$0xff]
        %v937 = vld [vmem:[%s261 + $0xa] sm:$0xff]
        %v938 = vld [vmem:[%s261 + $0x1a] sm:$0xff]
        %v939 = vld [vmem:[%s261 + $0x22] sm:$0xff]
        %v940 = vld [vmem:[%s261 + $0x32] sm:$0xff]
        %v941 = vld [vmem:[%s261 + $0x3a] sm:$0xff]
        %v942 = vld [vmem:[%s261 + $0x4a] sm:$0xff]
        %v943 = vld [vmem:[%s261 + $0x52] sm:$0xff]
        %v944 = vld [vmem:[%s261 + $0x62] sm:$0xff]
        %v945 = vld [vmem:[%s261 + $0x6a] sm:$0xff]
        %v946 = vld [vmem:[%s261 + $0x7a] sm:$0xff]
        %v947 = vld [vmem:[%s261 + $0x82] sm:$0xff]
        %v948 = vld [vmem:[%s261 + $0x92] sm:$0xff]
        %v949 = vld [vmem:[%s261 + $0x9a] sm:$0xff]
        %v950 = vld [vmem:[%s261 + $0xaa] sm:$0xff]
        %v951 = vld [vmem:[%s261 + $0xb2] sm:$0xff]
        %v952 = vld [vmem:[%s261 + $0xc2] sm:$0xff]
        %v953 = vld [vmem:[%s261 + $0xca] sm:$0xff]
        %v954 = vld [vmem:[%s261 + $0xda] sm:$0xff]
        %v955 = vld [vmem:[%s261 + $0xe2] sm:$0xff]
        %v956 = vld [vmem:[%s261 + $0xf2] sm:$0xff]
        %v957 = vld [vmem:[%s261 + $0xfa] sm:$0xff]
        %v958 = vld [vmem:[%s261 + $0x10a] sm:$0xff]
        %v959 = vld [vmem:[%s261 + $0x112] sm:$0xff]
        %v960 = vld [vmem:[%s261 + $0x122] sm:$0xff]
        %v961 = vld [vmem:[%s261 + $0x12a] sm:$0xff]
        %v962 = vld [vmem:[%s261 + $0x13a] sm:$0xff]
        %v963 = vld [vmem:[%s261 + $0x142] sm:$0xff]
        %v964 = vld [vmem:[%s261 + $0x152] sm:$0xff]
        %v965 = vld [vmem:[%s261 + $0x15a] sm:$0xff]
        %v966 = vld [vmem:[%s261 + $0x16a] sm:$0xff]
        %v967 = vld [vmem:[%s261 + $0x172] sm:$0xff]
        %1000 = vrot.lane.b32.xlu0 %v936, 64
        %v1001 = vpop.permute.xlu0 %1000
        %1002 = vrot.lane.b32.xlu0 %v937, 64
        %v1003 = vpop.permute.xlu0 %1002
        %1004 = vrot.lane.b32.xlu0 %v938, 64
        %v1005 = vpop.permute.xlu0 %1004
        %1006 = vrot.lane.b32.xlu0 %v939, 64
        %v1007 = vpop.permute.xlu0 %1006
        %1008 = vrot.lane.b32.xlu0 %v940, 64
        %v1009 = vpop.permute.xlu0 %1008
        %1010 = vrot.lane.b32.xlu0 %v941, 64
        %v1011 = vpop.permute.xlu0 %1010
        %1012 = vrot.lane.b32.xlu0 %v942, 64
        %v1013 = vpop.permute.xlu0 %1012
        %1014 = vrot.lane.b32.xlu0 %v943, 64
        %v1015 = vpop.permute.xlu0 %1014
        %1016 = vrot.lane.b32.xlu0 %v944, 64
        %v1017 = vpop.permute.xlu0 %1016
        %1018 = vrot.lane.b32.xlu0 %v945, 64
        %v1019 = vpop.permute.xlu0 %1018
        %1020 = vrot.lane.b32.xlu0 %v946, 64
        %v1021 = vpop.permute.xlu0 %1020
        %1022 = vrot.lane.b32.xlu0 %v947, 64
        %v1023 = vpop.permute.xlu0 %1022
        %1024 = vrot.lane.b32.xlu0 %v948, 64
        %v1025 = vpop.permute.xlu0 %1024
        %1026 = vrot.lane.b32.xlu0 %v949, 64
        %v1027 = vpop.permute.xlu0 %1026
        %1028 = vrot.lane.b32.xlu0 %v950, 64
        %v1029 = vpop.permute.xlu0 %1028
        %1030 = vrot.lane.b32.xlu0 %v951, 64
        %v1031 = vpop.permute.xlu0 %1030
        %1032 = vrot.lane.b32.xlu0 %v952, 64
        %v1033 = vpop.permute.xlu0 %1032
        %1034 = vrot.lane.b32.xlu0 %v953, 64
        %v1035 = vpop.permute.xlu0 %1034
        %1036 = vrot.lane.b32.xlu0 %v954, 64
        %v1037 = vpop.permute.xlu0 %1036
        %1038 = vrot.lane.b32.xlu0 %v955, 64
        %v1039 = vpop.permute.xlu0 %1038
        %1040 = vrot.lane.b32.xlu0 %v956, 64
        %v1041 = vpop.permute.xlu0 %1040
        %1042 = vrot.lane.b32.xlu0 %v957, 64
        %v1043 = vpop.permute.xlu0 %1042
        %1044 = vrot.lane.b32.xlu0 %v958, 64
        %v1045 = vpop.permute.xlu0 %1044
        %1046 = vrot.lane.b32.xlu0 %v959, 64
        %v1047 = vpop.permute.xlu0 %1046
        %1048 = vrot.lane.b32.xlu0 %v960, 64
        %v1049 = vpop.permute.xlu0 %1048
        %1050 = vrot.lane.b32.xlu0 %v961, 64
        %v1051 = vpop.permute.xlu0 %1050
        %1052 = vrot.lane.b32.xlu0 %v962, 64
        %v1053 = vpop.permute.xlu0 %1052
        %1054 = vrot.lane.b32.xlu0 %v963, 64
        %v1055 = vpop.permute.xlu0 %1054
        %1056 = vrot.lane.b32.xlu0 %v964, 64
        %v1057 = vpop.permute.xlu0 %1056
        %1058 = vrot.lane.b32.xlu0 %v965, 64
        %v1059 = vpop.permute.xlu0 %1058
        %1060 = vrot.lane.b32.xlu0 %v966, 64
        %v1061 = vpop.permute.xlu0 %1060
        %1062 = vrot.lane.b32.xlu0 %v967, 64
        %v1063 = vpop.permute.xlu0 %1062
        %1096 = vst.msk [vmem:[#allocation3 + $0x10] sm:$0xff] %vm583, %v1001
        %1097 = vst.msk [vmem:[#allocation3 + $0x38] sm:$0xff] %vm583, %v1003
        %1098 = vst.msk [vmem:[#allocation3 + $0x60] sm:$0xff] %vm583, %v1005
        %1099 = vst.msk [vmem:[#allocation3 + $0x88] sm:$0xff] %vm583, %v1007
        %1100 = vst.msk [vmem:[#allocation3 + $0xb0] sm:$0xff] %vm583, %v1009
        %1101 = vst.msk [vmem:[#allocation3 + $0xd8] sm:$0xff] %vm583, %v1011
        %1102 = vst.msk [vmem:[#allocation3 + $0x100] sm:$0xff] %vm583, %v1013
        %1103 = vst.msk [vmem:[#allocation3 + $0x128] sm:$0xff] %vm583, %v1015
        %1104 = vst.msk [vmem:[#allocation3 + $0x150] sm:$0xff] %vm583, %v1017
        %1105 = vst.msk [vmem:[#allocation3 + $0x178] sm:$0xff] %vm583, %v1019
        %1106 = vst.msk [vmem:[#allocation3 + $0x1a0] sm:$0xff] %vm583, %v1021
        %1107 = vst.msk [vmem:[#allocation3 + $0x1c8] sm:$0xff] %vm583, %v1023
        %1108 = vst.msk [vmem:[#allocation3 + $0x1f0] sm:$0xff] %vm583, %v1025
        %1109 = vst.msk [vmem:[#allocation3 + $0x218] sm:$0xff] %vm583, %v1027
        %1110 = vst.msk [vmem:[#allocation3 + $0x240] sm:$0xff] %vm583, %v1029
        %1111 = vst.msk [vmem:[#allocation3 + $0x268] sm:$0xff] %vm583, %v1031
        %1112 = vst.msk [vmem:[#allocation3 + $0x290] sm:$0xff] %vm583, %v1033
        %1113 = vst.msk [vmem:[#allocation3 + $0x2b8] sm:$0xff] %vm583, %v1035
        %1114 = vst.msk [vmem:[#allocation3 + $0x2e0] sm:$0xff] %vm583, %v1037
        %1115 = vst.msk [vmem:[#allocation3 + $0x308] sm:$0xff] %vm583, %v1039
        %1116 = vst.msk [vmem:[#allocation3 + $0x330] sm:$0xff] %vm583, %v1041
        %1117 = vst.msk [vmem:[#allocation3 + $0x358] sm:$0xff] %vm583, %v1043
        %1118 = vst.msk [vmem:[#allocation3 + $0x380] sm:$0xff] %vm583, %v1045
        %1119 = vst.msk [vmem:[#allocation3 + $0x3a8] sm:$0xff] %vm583, %v1047
        %1120 = vst.msk [vmem:[#allocation3 + $0x3d0] sm:$0xff] %vm583, %v1049
        %1121 = vst.msk [vmem:[#allocation3 + $0x3f8] sm:$0xff] %vm583, %v1051
        %1122 = vst.msk [vmem:[#allocation3 + $0x420] sm:$0xff] %vm583, %v1053
        %1123 = vst.msk [vmem:[#allocation3 + $0x448] sm:$0xff] %vm583, %v1055
        %1124 = vst.msk [vmem:[#allocation3 + $0x470] sm:$0xff] %vm583, %v1057
        %1125 = vst.msk [vmem:[#allocation3 + $0x498] sm:$0xff] %vm583, %v1059
        %1126 = vst.msk [vmem:[#allocation3 + $0x4c0] sm:$0xff] %vm583, %v1061
        %1127 = vst.msk [vmem:[#allocation3 + $0x4e8] sm:$0xff] %vm583, %v1063
        %s1128 = scalar_lea.vmem [#allocation2], 48
        %v1129 = vld [vmem:[%s1128] sm:$0xff]
        %v1130 = vld [vmem:[%s1128 + $0x8] sm:$0xff]
        %v1131 = vld [vmem:[%s1128 + $0x18] sm:$0xff]
        %v1132 = vld [vmem:[%s1128 + $0x20] sm:$0xff]
        %v1133 = vld [vmem:[%s1128 + $0x30] sm:$0xff]
        %v1134 = vld [vmem:[%s1128 + $0x38] sm:$0xff]
        %v1135 = vld [vmem:[%s1128 + $0x48] sm:$0xff]
        %v1136 = vld [vmem:[%s1128 + $0x50] sm:$0xff]
        %v1137 = vld [vmem:[%s1128 + $0x60] sm:$0xff]
        %v1138 = vld [vmem:[%s1128 + $0x68] sm:$0xff]
        %v1139 = vld [vmem:[%s1128 + $0x78] sm:$0xff]
        %v1140 = vld [vmem:[%s1128 + $0x80] sm:$0xff]
        %v1141 = vld [vmem:[%s1128 + $0x90] sm:$0xff]
        %v1142 = vld [vmem:[%s1128 + $0x98] sm:$0xff]
        %v1143 = vld [vmem:[%s1128 + $0xa8] sm:$0xff]
        %v1144 = vld [vmem:[%s1128 + $0xb0] sm:$0xff]
        %v1145 = vld [vmem:[%s1128 + $0xc0] sm:$0xff]
        %v1146 = vld [vmem:[%s1128 + $0xc8] sm:$0xff]
        %v1147 = vld [vmem:[%s1128 + $0xd8] sm:$0xff]
        %v1148 = vld [vmem:[%s1128 + $0xe0] sm:$0xff]
        %v1149 = vld [vmem:[%s1128 + $0xf0] sm:$0xff]
        %v1150 = vld [vmem:[%s1128 + $0xf8] sm:$0xff]
        %v1151 = vld [vmem:[%s1128 + $0x108] sm:$0xff]
        %v1152 = vld [vmem:[%s1128 + $0x110] sm:$0xff]
        %v1153 = vld [vmem:[%s1128 + $0x120] sm:$0xff]
        %v1154 = vld [vmem:[%s1128 + $0x128] sm:$0xff]
        %v1155 = vld [vmem:[%s1128 + $0x138] sm:$0xff]
        %v1156 = vld [vmem:[%s1128 + $0x140] sm:$0xff]
        %v1157 = vld [vmem:[%s1128 + $0x150] sm:$0xff]
        %v1158 = vld [vmem:[%s1128 + $0x158] sm:$0xff]
        %v1159 = vld [vmem:[%s1128 + $0x168] sm:$0xff]
        %v1160 = vld [vmem:[%s1128 + $0x170] sm:$0xff]
        %1161 = vst.msk [vmem:[#allocation3 + $0x18] sm:$0xff] %vm252, %v1129
        %1162 = vst.msk [vmem:[#allocation3 + $0x40] sm:$0xff] %vm252, %v1130
        %1163 = vst.msk [vmem:[#allocation3 + $0x68] sm:$0xff] %vm252, %v1131
        %1164 = vst.msk [vmem:[#allocation3 + $0x90] sm:$0xff] %vm252, %v1132
        %1165 = vst.msk [vmem:[#allocation3 + $0xb8] sm:$0xff] %vm252, %v1133
        %1166 = vst.msk [vmem:[#allocation3 + $0xe0] sm:$0xff] %vm252, %v1134
        %1167 = vst.msk [vmem:[#allocation3 + $0x108] sm:$0xff] %vm252, %v1135
        %1168 = vst.msk [vmem:[#allocation3 + $0x130] sm:$0xff] %vm252, %v1136
        %1169 = vst.msk [vmem:[#allocation3 + $0x158] sm:$0xff] %vm252, %v1137
        %1170 = vst.msk [vmem:[#allocation3 + $0x180] sm:$0xff] %vm252, %v1138
        %1171 = vst.msk [vmem:[#allocation3 + $0x1a8] sm:$0xff] %vm252, %v1139
        %1172 = vst.msk [vmem:[#allocation3 + $0x1d0] sm:$0xff] %vm252, %v1140
        %1173 = vst.msk [vmem:[#allocation3 + $0x1f8] sm:$0xff] %vm252, %v1141
        %1174 = vst.msk [vmem:[#allocation3 + $0x220] sm:$0xff] %vm252, %v1142
        %1175 = vst.msk [vmem:[#allocation3 + $0x248] sm:$0xff] %vm252, %v1143
        %1176 = vst.msk [vmem:[#allocation3 + $0x270] sm:$0xff] %vm252, %v1144
        %1177 = vst.msk [vmem:[#allocation3 + $0x298] sm:$0xff] %vm252, %v1145
        %1178 = vst.msk [vmem:[#allocation3 + $0x2c0] sm:$0xff] %vm252, %v1146
        %1179 = vst.msk [vmem:[#allocation3 + $0x2e8] sm:$0xff] %vm252, %v1147
        %1180 = vst.msk [vmem:[#allocation3 + $0x310] sm:$0xff] %vm252, %v1148
        %1181 = vst.msk [vmem:[#allocation3 + $0x338] sm:$0xff] %vm252, %v1149
        %1182 = vst.msk [vmem:[#allocation3 + $0x360] sm:$0xff] %vm252, %v1150
        %1183 = vst.msk [vmem:[#allocation3 + $0x388] sm:$0xff] %vm252, %v1151
        %1184 = vst.msk [vmem:[#allocation3 + $0x3b0] sm:$0xff] %vm252, %v1152
        %1185 = vst.msk [vmem:[#allocation3 + $0x3d8] sm:$0xff] %vm252, %v1153
        %1186 = vst.msk [vmem:[#allocation3 + $0x400] sm:$0xff] %vm252, %v1154
        %1187 = vst.msk [vmem:[#allocation3 + $0x428] sm:$0xff] %vm252, %v1155
        %1188 = vst.msk [vmem:[#allocation3 + $0x450] sm:$0xff] %vm252, %v1156
        %1189 = vst.msk [vmem:[#allocation3 + $0x478] sm:$0xff] %vm252, %v1157
        %1190 = vst.msk [vmem:[#allocation3 + $0x4a0] sm:$0xff] %vm252, %v1158
        %1191 = vst.msk [vmem:[#allocation3 + $0x4c8] sm:$0xff] %vm252, %v1159
        %1192 = vst.msk [vmem:[#allocation3 + $0x4f0] sm:$0xff] %vm252, %v1160
        %v1193 = vld [vmem:[%s1128 + $0x1] sm:$0xff]
        %v1194 = vld [vmem:[%s1128 + $0x9] sm:$0xff]
        %v1195 = vld [vmem:[%s1128 + $0x19] sm:$0xff]
        %v1196 = vld [vmem:[%s1128 + $0x21] sm:$0xff]
        %v1197 = vld [vmem:[%s1128 + $0x31] sm:$0xff]
        %v1198 = vld [vmem:[%s1128 + $0x39] sm:$0xff]
        %v1199 = vld [vmem:[%s1128 + $0x49] sm:$0xff]
        %v1200 = vld [vmem:[%s1128 + $0x51] sm:$0xff]
        %v1201 = vld [vmem:[%s1128 + $0x61] sm:$0xff]
        %v1202 = vld [vmem:[%s1128 + $0x69] sm:$0xff]
        %v1203 = vld [vmem:[%s1128 + $0x79] sm:$0xff]
        %v1204 = vld [vmem:[%s1128 + $0x81] sm:$0xff]
        %v1205 = vld [vmem:[%s1128 + $0x91] sm:$0xff]
        %v1206 = vld [vmem:[%s1128 + $0x99] sm:$0xff]
        %v1207 = vld [vmem:[%s1128 + $0xa9] sm:$0xff]
        %v1208 = vld [vmem:[%s1128 + $0xb1] sm:$0xff]
        %v1209 = vld [vmem:[%s1128 + $0xc1] sm:$0xff]
        %v1210 = vld [vmem:[%s1128 + $0xc9] sm:$0xff]
        %v1211 = vld [vmem:[%s1128 + $0xd9] sm:$0xff]
        %v1212 = vld [vmem:[%s1128 + $0xe1] sm:$0xff]
        %v1213 = vld [vmem:[%s1128 + $0xf1] sm:$0xff]
        %v1214 = vld [vmem:[%s1128 + $0xf9] sm:$0xff]
        %v1215 = vld [vmem:[%s1128 + $0x109] sm:$0xff]
        %v1216 = vld [vmem:[%s1128 + $0x111] sm:$0xff]
        %v1217 = vld [vmem:[%s1128 + $0x121] sm:$0xff]
        %v1218 = vld [vmem:[%s1128 + $0x129] sm:$0xff]
        %v1219 = vld [vmem:[%s1128 + $0x139] sm:$0xff]
        %v1220 = vld [vmem:[%s1128 + $0x141] sm:$0xff]
        %v1221 = vld [vmem:[%s1128 + $0x151] sm:$0xff]
        %v1222 = vld [vmem:[%s1128 + $0x159] sm:$0xff]
        %v1223 = vld [vmem:[%s1128 + $0x169] sm:$0xff]
        %v1224 = vld [vmem:[%s1128 + $0x171] sm:$0xff]
        %1257 = vrot.lane.b32.xlu0 %v1193, 64
        %v1258 = vpop.permute.xlu0 %1257
        %1259 = vrot.lane.b32.xlu0 %v1194, 64
        %v1260 = vpop.permute.xlu0 %1259
        %1261 = vrot.lane.b32.xlu0 %v1195, 64
        %v1262 = vpop.permute.xlu0 %1261
        %1263 = vrot.lane.b32.xlu0 %v1196, 64
        %v1264 = vpop.permute.xlu0 %1263
        %1265 = vrot.lane.b32.xlu0 %v1197, 64
        %v1266 = vpop.permute.xlu0 %1265
        %1267 = vrot.lane.b32.xlu0 %v1198, 64
        %v1268 = vpop.permute.xlu0 %1267
        %1269 = vrot.lane.b32.xlu0 %v1199, 64
        %v1270 = vpop.permute.xlu0 %1269
        %1271 = vrot.lane.b32.xlu0 %v1200, 64
        %v1272 = vpop.permute.xlu0 %1271
        %1273 = vrot.lane.b32.xlu0 %v1201, 64
        %v1274 = vpop.permute.xlu0 %1273
        %1275 = vrot.lane.b32.xlu0 %v1202, 64
        %v1276 = vpop.permute.xlu0 %1275
        %1277 = vrot.lane.b32.xlu0 %v1203, 64
        %v1278 = vpop.permute.xlu0 %1277
        %1279 = vrot.lane.b32.xlu0 %v1204, 64
        %v1280 = vpop.permute.xlu0 %1279
        %1281 = vrot.lane.b32.xlu0 %v1205, 64
        %v1282 = vpop.permute.xlu0 %1281
        %1283 = vrot.lane.b32.xlu0 %v1206, 64
        %v1284 = vpop.permute.xlu0 %1283
        %1285 = vrot.lane.b32.xlu0 %v1207, 64
        %v1286 = vpop.permute.xlu0 %1285
        %1287 = vrot.lane.b32.xlu0 %v1208, 64
        %v1288 = vpop.permute.xlu0 %1287
        %1289 = vrot.lane.b32.xlu0 %v1209, 64
        %v1290 = vpop.permute.xlu0 %1289
        %1291 = vrot.lane.b32.xlu0 %v1210, 64
        %v1292 = vpop.permute.xlu0 %1291
        %1293 = vrot.lane.b32.xlu0 %v1211, 64
        %v1294 = vpop.permute.xlu0 %1293
        %1295 = vrot.lane.b32.xlu0 %v1212, 64
        %v1296 = vpop.permute.xlu0 %1295
        %1297 = vrot.lane.b32.xlu0 %v1213, 64
        %v1298 = vpop.permute.xlu0 %1297
        %1299 = vrot.lane.b32.xlu0 %v1214, 64
        %v1300 = vpop.permute.xlu0 %1299
        %1301 = vrot.lane.b32.xlu0 %v1215, 64
        %v1302 = vpop.permute.xlu0 %1301
        %1303 = vrot.lane.b32.xlu0 %v1216, 64
        %v1304 = vpop.permute.xlu0 %1303
        %1305 = vrot.lane.b32.xlu0 %v1217, 64
        %v1306 = vpop.permute.xlu0 %1305
        %1307 = vrot.lane.b32.xlu0 %v1218, 64
        %v1308 = vpop.permute.xlu0 %1307
        %1309 = vrot.lane.b32.xlu0 %v1219, 64
        %v1310 = vpop.permute.xlu0 %1309
        %1311 = vrot.lane.b32.xlu0 %v1220, 64
        %v1312 = vpop.permute.xlu0 %1311
        %1313 = vrot.lane.b32.xlu0 %v1221, 64
        %v1314 = vpop.permute.xlu0 %1313
        %1315 = vrot.lane.b32.xlu0 %v1222, 64
        %v1316 = vpop.permute.xlu0 %1315
        %1317 = vrot.lane.b32.xlu0 %v1223, 64
        %v1318 = vpop.permute.xlu0 %1317
        %1319 = vrot.lane.b32.xlu0 %v1224, 64
        %v1320 = vpop.permute.xlu0 %1319
        %1353 = vst.msk [vmem:[#allocation3 + $0x18] sm:$0xff] %vm583, %v1258
        %1354 = vst.msk [vmem:[#allocation3 + $0x40] sm:$0xff] %vm583, %v1260
        %1355 = vst.msk [vmem:[#allocation3 + $0x68] sm:$0xff] %vm583, %v1262
        %1356 = vst.msk [vmem:[#allocation3 + $0x90] sm:$0xff] %vm583, %v1264
        %1357 = vst.msk [vmem:[#allocation3 + $0xb8] sm:$0xff] %vm583, %v1266
        %1358 = vst.msk [vmem:[#allocation3 + $0xe0] sm:$0xff] %vm583, %v1268
        %1359 = vst.msk [vmem:[#allocation3 + $0x108] sm:$0xff] %vm583, %v1270
        %1360 = vst.msk [vmem:[#allocation3 + $0x130] sm:$0xff] %vm583, %v1272
        %1361 = vst.msk [vmem:[#allocation3 + $0x158] sm:$0xff] %vm583, %v1274
        %1362 = vst.msk [vmem:[#allocation3 + $0x180] sm:$0xff] %vm583, %v1276
        %1363 = vst.msk [vmem:[#allocation3 + $0x1a8] sm:$0xff] %vm583, %v1278
        %1364 = vst.msk [vmem:[#allocation3 + $0x1d0] sm:$0xff] %vm583, %v1280
        %1365 = vst.msk [vmem:[#allocation3 + $0x1f8] sm:$0xff] %vm583, %v1282
        %1366 = vst.msk [vmem:[#allocation3 + $0x220] sm:$0xff] %vm583, %v1284
        %1367 = vst.msk [vmem:[#allocation3 + $0x248] sm:$0xff] %vm583, %v1286
        %1368 = vst.msk [vmem:[#allocation3 + $0x270] sm:$0xff] %vm583, %v1288
        %1369 = vst.msk [vmem:[#allocation3 + $0x298] sm:$0xff] %vm583, %v1290
        %1370 = vst.msk [vmem:[#allocation3 + $0x2c0] sm:$0xff] %vm583, %v1292
        %1371 = vst.msk [vmem:[#allocation3 + $0x2e8] sm:$0xff] %vm583, %v1294
        %1372 = vst.msk [vmem:[#allocation3 + $0x310] sm:$0xff] %vm583, %v1296
        %1373 = vst.msk [vmem:[#allocation3 + $0x338] sm:$0xff] %vm583, %v1298
        %1374 = vst.msk [vmem:[#allocation3 + $0x360] sm:$0xff] %vm583, %v1300
        %1375 = vst.msk [vmem:[#allocation3 + $0x388] sm:$0xff] %vm583, %v1302
        %1376 = vst.msk [vmem:[#allocation3 + $0x3b0] sm:$0xff] %vm583, %v1304
        %1377 = vst.msk [vmem:[#allocation3 + $0x3d8] sm:$0xff] %vm583, %v1306
        %1378 = vst.msk [vmem:[#allocation3 + $0x400] sm:$0xff] %vm583, %v1308
        %1379 = vst.msk [vmem:[#allocation3 + $0x428] sm:$0xff] %vm583, %v1310
        %1380 = vst.msk [vmem:[#allocation3 + $0x450] sm:$0xff] %vm583, %v1312
        %1381 = vst.msk [vmem:[#allocation3 + $0x478] sm:$0xff] %vm583, %v1314
        %1382 = vst.msk [vmem:[#allocation3 + $0x4a0] sm:$0xff] %vm583, %v1316
        %1383 = vst.msk [vmem:[#allocation3 + $0x4c8] sm:$0xff] %vm583, %v1318
        %1384 = vst.msk [vmem:[#allocation3 + $0x4f0] sm:$0xff] %vm583, %v1320
        %v1385 = vld [vmem:[%s1128 + $0x2] sm:$0xff]
        %v1386 = vld [vmem:[%s1128 + $0xa] sm:$0xff]
        %v1387 = vld [vmem:[%s1128 + $0x1a] sm:$0xff]
        %v1388 = vld [vmem:[%s1128 + $0x22] sm:$0xff]
        %v1389 = vld [vmem:[%s1128 + $0x32] sm:$0xff]
        %v1390 = vld [vmem:[%s1128 + $0x3a] sm:$0xff]
        %v1391 = vld [vmem:[%s1128 + $0x4a] sm:$0xff]
        %v1392 = vld [vmem:[%s1128 + $0x52] sm:$0xff]
        %v1393 = vld [vmem:[%s1128 + $0x62] sm:$0xff]
        %v1394 = vld [vmem:[%s1128 + $0x6a] sm:$0xff]
        %v1395 = vld [vmem:[%s1128 + $0x7a] sm:$0xff]
        %v1396 = vld [vmem:[%s1128 + $0x82] sm:$0xff]
        %v1397 = vld [vmem:[%s1128 + $0x92] sm:$0xff]
        %v1398 = vld [vmem:[%s1128 + $0x9a] sm:$0xff]
        %v1399 = vld [vmem:[%s1128 + $0xaa] sm:$0xff]
        %v1400 = vld [vmem:[%s1128 + $0xb2] sm:$0xff]
        %v1401 = vld [vmem:[%s1128 + $0xc2] sm:$0xff]
        %v1402 = vld [vmem:[%s1128 + $0xca] sm:$0xff]
        %v1403 = vld [vmem:[%s1128 + $0xda] sm:$0xff]
        %v1404 = vld [vmem:[%s1128 + $0xe2] sm:$0xff]
        %v1405 = vld [vmem:[%s1128 + $0xf2] sm:$0xff]
        %v1406 = vld [vmem:[%s1128 + $0xfa] sm:$0xff]
        %v1407 = vld [vmem:[%s1128 + $0x10a] sm:$0xff]
        %v1408 = vld [vmem:[%s1128 + $0x112] sm:$0xff]
        %v1409 = vld [vmem:[%s1128 + $0x122] sm:$0xff]
        %v1410 = vld [vmem:[%s1128 + $0x12a] sm:$0xff]
        %v1411 = vld [vmem:[%s1128 + $0x13a] sm:$0xff]
        %v1412 = vld [vmem:[%s1128 + $0x142] sm:$0xff]
        %v1413 = vld [vmem:[%s1128 + $0x152] sm:$0xff]
        %v1414 = vld [vmem:[%s1128 + $0x15a] sm:$0xff]
        %v1415 = vld [vmem:[%s1128 + $0x16a] sm:$0xff]
        %v1416 = vld [vmem:[%s1128 + $0x172] sm:$0xff]
        %1417 = vst.msk [vmem:[#allocation3 + $0x20] sm:$0xff] %vm252, %v1385
        %1418 = vst.msk [vmem:[#allocation3 + $0x48] sm:$0xff] %vm252, %v1386
        %1419 = vst.msk [vmem:[#allocation3 + $0x70] sm:$0xff] %vm252, %v1387
        %1420 = vst.msk [vmem:[#allocation3 + $0x98] sm:$0xff] %vm252, %v1388
        %1421 = vst.msk [vmem:[#allocation3 + $0xc0] sm:$0xff] %vm252, %v1389
        %1422 = vst.msk [vmem:[#allocation3 + $0xe8] sm:$0xff] %vm252, %v1390
        %1423 = vst.msk [vmem:[#allocation3 + $0x110] sm:$0xff] %vm252, %v1391
        %1424 = vst.msk [vmem:[#allocation3 + $0x138] sm:$0xff] %vm252, %v1392
        %1425 = vst.msk [vmem:[#allocation3 + $0x160] sm:$0xff] %vm252, %v1393
        %1426 = vst.msk [vmem:[#allocation3 + $0x188] sm:$0xff] %vm252, %v1394
        %1427 = vst.msk [vmem:[#allocation3 + $0x1b0] sm:$0xff] %vm252, %v1395
        %1428 = vst.msk [vmem:[#allocation3 + $0x1d8] sm:$0xff] %vm252, %v1396
        %1429 = vst.msk [vmem:[#allocation3 + $0x200] sm:$0xff] %vm252, %v1397
        %1430 = vst.msk [vmem:[#allocation3 + $0x228] sm:$0xff] %vm252, %v1398
        %1431 = vst.msk [vmem:[#allocation3 + $0x250] sm:$0xff] %vm252, %v1399
        %1432 = vst.msk [vmem:[#allocation3 + $0x278] sm:$0xff] %vm252, %v1400
        %1433 = vst.msk [vmem:[#allocation3 + $0x2a0] sm:$0xff] %vm252, %v1401
        %1434 = vst.msk [vmem:[#allocation3 + $0x2c8] sm:$0xff] %vm252, %v1402
        %1435 = vst.msk [vmem:[#allocation3 + $0x2f0] sm:$0xff] %vm252, %v1403
        %1436 = vst.msk [vmem:[#allocation3 + $0x318] sm:$0xff] %vm252, %v1404
        %1437 = vst.msk [vmem:[#allocation3 + $0x340] sm:$0xff] %vm252, %v1405
        %1438 = vst.msk [vmem:[#allocation3 + $0x368] sm:$0xff] %vm252, %v1406
        %1439 = vst.msk [vmem:[#allocation3 + $0x390] sm:$0xff] %vm252, %v1407
        %1440 = vst.msk [vmem:[#allocation3 + $0x3b8] sm:$0xff] %vm252, %v1408
        %1441 = vst.msk [vmem:[#allocation3 + $0x3e0] sm:$0xff] %vm252, %v1409
        %1442 = vst.msk [vmem:[#allocation3 + $0x408] sm:$0xff] %vm252, %v1410
        %1443 = vst.msk [vmem:[#allocation3 + $0x430] sm:$0xff] %vm252, %v1411
        %1444 = vst.msk [vmem:[#allocation3 + $0x458] sm:$0xff] %vm252, %v1412
        %1445 = vst.msk [vmem:[#allocation3 + $0x480] sm:$0xff] %vm252, %v1413
        %1446 = vst.msk [vmem:[#allocation3 + $0x4a8] sm:$0xff] %vm252, %v1414
        %1447 = vst.msk [vmem:[#allocation3 + $0x4d0] sm:$0xff] %vm252, %v1415
        %1448 = vst.msk [vmem:[#allocation3 + $0x4f8] sm:$0xff] %vm252, %v1416
        %v1449 = vld [vmem:[#allocation3] sm:$0xff]
        %v1450 = vld [vmem:[#allocation3 + $0x8] sm:$0xff]
        %v1451 = vld [vmem:[#allocation3 + $0x10] sm:$0xff]
        %v1452 = vld [vmem:[#allocation3 + $0x18] sm:$0xff]
        %v1453 = vld [vmem:[#allocation3 + $0x20] sm:$0xff]
        %v1454 = vld [vmem:[#allocation3 + $0x28] sm:$0xff]
        %v1455 = vld [vmem:[#allocation3 + $0x30] sm:$0xff]
        %v1456 = vld [vmem:[#allocation3 + $0x38] sm:$0xff]
        %v1457 = vld [vmem:[#allocation3 + $0x40] sm:$0xff]
        %v1458 = vld [vmem:[#allocation3 + $0x48] sm:$0xff]
        %v1459 = vld [vmem:[#allocation3 + $0x50] sm:$0xff]
        %v1460 = vld [vmem:[#allocation3 + $0x58] sm:$0xff]
        %v1461 = vld [vmem:[#allocation3 + $0x60] sm:$0xff]
        %v1462 = vld [vmem:[#allocation3 + $0x68] sm:$0xff]
        %v1463 = vld [vmem:[#allocation3 + $0x70] sm:$0xff]
        %v1464 = vld [vmem:[#allocation3 + $0x78] sm:$0xff]
        %v1465 = vld [vmem:[#allocation3 + $0x80] sm:$0xff]
        %v1466 = vld [vmem:[#allocation3 + $0x88] sm:$0xff]
        %v1467 = vld [vmem:[#allocation3 + $0x90] sm:$0xff]
        %v1468 = vld [vmem:[#allocation3 + $0x98] sm:$0xff]
        %v1469 = vld [vmem:[#allocation3 + $0xa0] sm:$0xff]
        %v1470 = vld [vmem:[#allocation3 + $0xa8] sm:$0xff]
        %v1471 = vld [vmem:[#allocation3 + $0xb0] sm:$0xff]
        %v1472 = vld [vmem:[#allocation3 + $0xb8] sm:$0xff]
        %v1473 = vld [vmem:[#allocation3 + $0xc0] sm:$0xff]
        %v1474 = vld [vmem:[#allocation3 + $0xc8] sm:$0xff]
        %v1475 = vld [vmem:[#allocation3 + $0xd0] sm:$0xff]
        %v1476 = vld [vmem:[#allocation3 + $0xd8] sm:$0xff]
        %v1477 = vld [vmem:[#allocation3 + $0xe0] sm:$0xff]
        %v1478 = vld [vmem:[#allocation3 + $0xe8] sm:$0xff]
        %v1479 = vld [vmem:[#allocation3 + $0xf0] sm:$0xff]
        %v1480 = vld [vmem:[#allocation3 + $0xf8] sm:$0xff]
        %v1481 = vld [vmem:[#allocation3 + $0x100] sm:$0xff]
        %v1482 = vld [vmem:[#allocation3 + $0x108] sm:$0xff]
        %v1483 = vld [vmem:[#allocation3 + $0x110] sm:$0xff]
        %v1484 = vld [vmem:[#allocation3 + $0x118] sm:$0xff]
        %v1485 = vld [vmem:[#allocation3 + $0x120] sm:$0xff]
        %v1486 = vld [vmem:[#allocation3 + $0x128] sm:$0xff]
        %v1487 = vld [vmem:[#allocation3 + $0x130] sm:$0xff]
        %v1488 = vld [vmem:[#allocation3 + $0x138] sm:$0xff]
        %v1489 = vld [vmem:[#allocation3 + $0x140] sm:$0xff]
        %v1490 = vld [vmem:[#allocation3 + $0x148] sm:$0xff]
        %v1491 = vld [vmem:[#allocation3 + $0x150] sm:$0xff]
        %v1492 = vld [vmem:[#allocation3 + $0x158] sm:$0xff]
        %v1493 = vld [vmem:[#allocation3 + $0x160] sm:$0xff]
        %v1494 = vld [vmem:[#allocation3 + $0x168] sm:$0xff]
        %v1495 = vld [vmem:[#allocation3 + $0x170] sm:$0xff]
        %v1496 = vld [vmem:[#allocation3 + $0x178] sm:$0xff]
        %v1497 = vld [vmem:[#allocation3 + $0x180] sm:$0xff]
        %v1498 = vld [vmem:[#allocation3 + $0x188] sm:$0xff]
        %v1499 = vld [vmem:[#allocation3 + $0x190] sm:$0xff]
        %v1500 = vld [vmem:[#allocation3 + $0x198] sm:$0xff]
        %v1501 = vld [vmem:[#allocation3 + $0x1a0] sm:$0xff]
        %v1502 = vld [vmem:[#allocation3 + $0x1a8] sm:$0xff]
        %v1503 = vld [vmem:[#allocation3 + $0x1b0] sm:$0xff]
        %v1504 = vld [vmem:[#allocation3 + $0x1b8] sm:$0xff]
        %v1505 = vld [vmem:[#allocation3 + $0x1c0] sm:$0xff]
        %v1506 = vld [vmem:[#allocation3 + $0x1c8] sm:$0xff]
        %v1507 = vld [vmem:[#allocation3 + $0x1d0] sm:$0xff]
        %v1508 = vld [vmem:[#allocation3 + $0x1d8] sm:$0xff]
        %v1509 = vld [vmem:[#allocation3 + $0x1e0] sm:$0xff]
        %v1510 = vld [vmem:[#allocation3 + $0x1e8] sm:$0xff]
        %v1511 = vld [vmem:[#allocation3 + $0x1f0] sm:$0xff]
        %v1512 = vld [vmem:[#allocation3 + $0x1f8] sm:$0xff]
        %v1513 = vld [vmem:[#allocation3 + $0x200] sm:$0xff]
        %v1514 = vld [vmem:[#allocation3 + $0x208] sm:$0xff]
        %v1515 = vld [vmem:[#allocation3 + $0x210] sm:$0xff]
        %v1516 = vld [vmem:[#allocation3 + $0x218] sm:$0xff]
        %v1517 = vld [vmem:[#allocation3 + $0x220] sm:$0xff]
        %v1518 = vld [vmem:[#allocation3 + $0x228] sm:$0xff]
        %v1519 = vld [vmem:[#allocation3 + $0x230] sm:$0xff]
        %v1520 = vld [vmem:[#allocation3 + $0x238] sm:$0xff]
        %v1521 = vld [vmem:[#allocation3 + $0x240] sm:$0xff]
        %v1522 = vld [vmem:[#allocation3 + $0x248] sm:$0xff]
        %v1523 = vld [vmem:[#allocation3 + $0x250] sm:$0xff]
        %v1524 = vld [vmem:[#allocation3 + $0x258] sm:$0xff]
        %v1525 = vld [vmem:[#allocation3 + $0x260] sm:$0xff]
        %v1526 = vld [vmem:[#allocation3 + $0x268] sm:$0xff]
        %v1527 = vld [vmem:[#allocation3 + $0x270] sm:$0xff]
        %v1528 = vld [vmem:[#allocation3 + $0x278] sm:$0xff]
        %v1529 = vld [vmem:[#allocation3 + $0x280] sm:$0xff]
        %v1530 = vld [vmem:[#allocation3 + $0x288] sm:$0xff]
        %v1531 = vld [vmem:[#allocation3 + $0x290] sm:$0xff]
        %v1532 = vld [vmem:[#allocation3 + $0x298] sm:$0xff]
        %v1533 = vld [vmem:[#allocation3 + $0x2a0] sm:$0xff]
        %v1534 = vld [vmem:[#allocation3 + $0x2a8] sm:$0xff]
        %v1535 = vld [vmem:[#allocation3 + $0x2b0] sm:$0xff]
        %v1536 = vld [vmem:[#allocation3 + $0x2b8] sm:$0xff]
        %v1537 = vld [vmem:[#allocation3 + $0x2c0] sm:$0xff]
        %v1538 = vld [vmem:[#allocation3 + $0x2c8] sm:$0xff]
        %v1539 = vld [vmem:[#allocation3 + $0x2d0] sm:$0xff]
        %v1540 = vld [vmem:[#allocation3 + $0x2d8] sm:$0xff]
        %v1541 = vld [vmem:[#allocation3 + $0x2e0] sm:$0xff]
        %v1542 = vld [vmem:[#allocation3 + $0x2e8] sm:$0xff]
        %v1543 = vld [vmem:[#allocation3 + $0x2f0] sm:$0xff]
        %v1544 = vld [vmem:[#allocation3 + $0x2f8] sm:$0xff]
        %v1545 = vld [vmem:[#allocation3 + $0x300] sm:$0xff]
        %v1546 = vld [vmem:[#allocation3 + $0x308] sm:$0xff]
        %v1547 = vld [vmem:[#allocation3 + $0x310] sm:$0xff]
        %v1548 = vld [vmem:[#allocation3 + $0x318] sm:$0xff]
        %v1549 = vld [vmem:[#allocation3 + $0x320] sm:$0xff]
        %v1550 = vld [vmem:[#allocation3 + $0x328] sm:$0xff]
        %v1551 = vld [vmem:[#allocation3 + $0x330] sm:$0xff]
        %v1552 = vld [vmem:[#allocation3 + $0x338] sm:$0xff]
        %v1553 = vld [vmem:[#allocation3 + $0x340] sm:$0xff]
        %v1554 = vld [vmem:[#allocation3 + $0x348] sm:$0xff]
        %v1555 = vld [vmem:[#allocation3 + $0x350] sm:$0xff]
        %v1556 = vld [vmem:[#allocation3 + $0x358] sm:$0xff]
        %v1557 = vld [vmem:[#allocation3 + $0x360] sm:$0xff]
        %v1558 = vld [vmem:[#allocation3 + $0x368] sm:$0xff]
        %v1559 = vld [vmem:[#allocation3 + $0x370] sm:$0xff]
        %v1560 = vld [vmem:[#allocation3 + $0x378] sm:$0xff]
        %v1561 = vld [vmem:[#allocation3 + $0x380] sm:$0xff]
        %v1562 = vld [vmem:[#allocation3 + $0x388] sm:$0xff]
        %v1563 = vld [vmem:[#allocation3 + $0x390] sm:$0xff]
        %v1564 = vld [vmem:[#allocation3 + $0x398] sm:$0xff]
        %v1565 = vld [vmem:[#allocation3 + $0x3a0] sm:$0xff]
        %v1566 = vld [vmem:[#allocation3 + $0x3a8] sm:$0xff]
        %v1567 = vld [vmem:[#allocation3 + $0x3b0] sm:$0xff]
        %v1568 = vld [vmem:[#allocation3 + $0x3b8] sm:$0xff]
        %v1569 = vld [vmem:[#allocation3 + $0x3c0] sm:$0xff]
        %v1570 = vld [vmem:[#allocation3 + $0x3c8] sm:$0xff]
        %v1571 = vld [vmem:[#allocation3 + $0x3d0] sm:$0xff]
        %v1572 = vld [vmem:[#allocation3 + $0x3d8] sm:$0xff]
        %v1573 = vld [vmem:[#allocation3 + $0x3e0] sm:$0xff]
        %v1574 = vld [vmem:[#allocation3 + $0x3e8] sm:$0xff]
        %v1575 = vld [vmem:[#allocation3 + $0x3f0] sm:$0xff]
        %v1576 = vld [vmem:[#allocation3 + $0x3f8] sm:$0xff]
        %v1577 = vld [vmem:[#allocation3 + $0x400] sm:$0xff]
        %v1578 = vld [vmem:[#allocation3 + $0x408] sm:$0xff]
        %v1579 = vld [vmem:[#allocation3 + $0x410] sm:$0xff]
        %v1580 = vld [vmem:[#allocation3 + $0x418] sm:$0xff]
        %v1581 = vld [vmem:[#allocation3 + $0x420] sm:$0xff]
        %v1582 = vld [vmem:[#allocation3 + $0x428] sm:$0xff]
        %v1583 = vld [vmem:[#allocation3 + $0x430] sm:$0xff]
        %v1584 = vld [vmem:[#allocation3 + $0x438] sm:$0xff]
        %v1585 = vld [vmem:[#allocation3 + $0x440] sm:$0xff]
        %v1586 = vld [vmem:[#allocation3 + $0x448] sm:$0xff]
        %v1587 = vld [vmem:[#allocation3 + $0x450] sm:$0xff]
        %v1588 = vld [vmem:[#allocation3 + $0x458] sm:$0xff]
        %v1589 = vld [vmem:[#allocation3 + $0x460] sm:$0xff]
        %v1590 = vld [vmem:[#allocation3 + $0x468] sm:$0xff]
        %v1591 = vld [vmem:[#allocation3 + $0x470] sm:$0xff]
        %v1592 = vld [vmem:[#allocation3 + $0x478] sm:$0xff]
        %v1593 = vld [vmem:[#allocation3 + $0x480] sm:$0xff]
        %v1594 = vld [vmem:[#allocation3 + $0x488] sm:$0xff]
        %v1595 = vld [vmem:[#allocation3 + $0x490] sm:$0xff]
        %v1596 = vld [vmem:[#allocation3 + $0x498] sm:$0xff]
        %v1597 = vld [vmem:[#allocation3 + $0x4a0] sm:$0xff]
        %v1598 = vld [vmem:[#allocation3 + $0x4a8] sm:$0xff]
        %v1599 = vld [vmem:[#allocation3 + $0x4b0] sm:$0xff]
        %v1600 = vld [vmem:[#allocation3 + $0x4b8] sm:$0xff]
        %v1601 = vld [vmem:[#allocation3 + $0x4c0] sm:$0xff]
        %v1602 = vld [vmem:[#allocation3 + $0x4c8] sm:$0xff]
        %v1603 = vld [vmem:[#allocation3 + $0x4d0] sm:$0xff]
        %v1604 = vld [vmem:[#allocation3 + $0x4d8] sm:$0xff]
        %v1605 = vld [vmem:[#allocation3 + $0x4e0] sm:$0xff]
        %v1606 = vld [vmem:[#allocation3 + $0x4e8] sm:$0xff]
        %v1607 = vld [vmem:[#allocation3 + $0x4f0] sm:$0xff]
        %v1608 = vld [vmem:[#allocation3 + $0x4f8] sm:$0xff]
        %v1609 = vld [vmem:[%s1] sm:$0xff]
        %v1610 = vld [vmem:[%s1 + $0x8] sm:$0xff]
        %v1611 = vld [vmem:[%s1 + $0x10] sm:$0xff]
        %v1612 = vld [vmem:[%s1 + $0x18] sm:$0xff]
        %v1613 = vld [vmem:[%s1 + $0x20] sm:$0xff]
        %v1614 = vld [vmem:[%s1 + $0x28] sm:$0xff]
        %v1615 = vld [vmem:[%s1 + $0x30] sm:$0xff]
        %v1616 = vld [vmem:[%s1 + $0x38] sm:$0xff]
        %v1617 = vld [vmem:[%s1 + $0x40] sm:$0xff]
        %v1618 = vld [vmem:[%s1 + $0x48] sm:$0xff]
        %v1619 = vld [vmem:[%s1 + $0x50] sm:$0xff]
        %v1620 = vld [vmem:[%s1 + $0x58] sm:$0xff]
        %v1621 = vld [vmem:[%s1 + $0x60] sm:$0xff]
        %v1622 = vld [vmem:[%s1 + $0x68] sm:$0xff]
        %v1623 = vld [vmem:[%s1 + $0x70] sm:$0xff]
        %v1624 = vld [vmem:[%s1 + $0x78] sm:$0xff]
        %v1625 = vld [vmem:[%s1 + $0x80] sm:$0xff]
        %v1626 = vld [vmem:[%s1 + $0x88] sm:$0xff]
        %v1627 = vld [vmem:[%s1 + $0x90] sm:$0xff]
        %v1628 = vld [vmem:[%s1 + $0x98] sm:$0xff]
        %v1629 = vld [vmem:[%s1 + $0xa0] sm:$0xff]
        %v1630 = vld [vmem:[%s1 + $0xa8] sm:$0xff]
        %v1631 = vld [vmem:[%s1 + $0xb0] sm:$0xff]
        %v1632 = vld [vmem:[%s1 + $0xb8] sm:$0xff]
        %v1633 = vld [vmem:[%s1 + $0xc0] sm:$0xff]
        %v1634 = vld [vmem:[%s1 + $0xc8] sm:$0xff]
        %v1635 = vld [vmem:[%s1 + $0xd0] sm:$0xff]
        %v1636 = vld [vmem:[%s1 + $0xd8] sm:$0xff]
        %v1637 = vld [vmem:[%s1 + $0xe0] sm:$0xff]
        %v1638 = vld [vmem:[%s1 + $0xe8] sm:$0xff]
        %v1639 = vld [vmem:[%s1 + $0xf0] sm:$0xff]
        %v1640 = vld [vmem:[%s1 + $0xf8] sm:$0xff]
        %v1641 = vld [vmem:[%s1 + $0x100] sm:$0xff]
        %v1642 = vld [vmem:[%s1 + $0x108] sm:$0xff]
        %v1643 = vld [vmem:[%s1 + $0x110] sm:$0xff]
        %v1644 = vld [vmem:[%s1 + $0x118] sm:$0xff]
        %v1645 = vld [vmem:[%s1 + $0x120] sm:$0xff]
        %v1646 = vld [vmem:[%s1 + $0x128] sm:$0xff]
        %v1647 = vld [vmem:[%s1 + $0x130] sm:$0xff]
        %v1648 = vld [vmem:[%s1 + $0x138] sm:$0xff]
        %v1649 = vld [vmem:[%s1 + $0x140] sm:$0xff]
        %v1650 = vld [vmem:[%s1 + $0x148] sm:$0xff]
        %v1651 = vld [vmem:[%s1 + $0x150] sm:$0xff]
        %v1652 = vld [vmem:[%s1 + $0x158] sm:$0xff]
        %v1653 = vld [vmem:[%s1 + $0x160] sm:$0xff]
        %v1654 = vld [vmem:[%s1 + $0x168] sm:$0xff]
        %v1655 = vld [vmem:[%s1 + $0x170] sm:$0xff]
        %v1656 = vld [vmem:[%s1 + $0x178] sm:$0xff]
        %v1657 = vld [vmem:[%s1 + $0x180] sm:$0xff]
        %v1658 = vld [vmem:[%s1 + $0x188] sm:$0xff]
        %v1659 = vld [vmem:[%s1 + $0x190] sm:$0xff]
        %v1660 = vld [vmem:[%s1 + $0x198] sm:$0xff]
        %v1661 = vld [vmem:[%s1 + $0x1a0] sm:$0xff]
        %v1662 = vld [vmem:[%s1 + $0x1a8] sm:$0xff]
        %v1663 = vld [vmem:[%s1 + $0x1b0] sm:$0xff]
        %v1664 = vld [vmem:[%s1 + $0x1b8] sm:$0xff]
        %v1665 = vld [vmem:[%s1 + $0x1c0] sm:$0xff]
        %v1666 = vld [vmem:[%s1 + $0x1c8] sm:$0xff]
        %v1667 = vld [vmem:[%s1 + $0x1d0] sm:$0xff]
        %v1668 = vld [vmem:[%s1 + $0x1d8] sm:$0xff]
        %v1669 = vld [vmem:[%s1 + $0x1e0] sm:$0xff]
        %v1670 = vld [vmem:[%s1 + $0x1e8] sm:$0xff]
        %v1671 = vld [vmem:[%s1 + $0x1f0] sm:$0xff]
        %v1672 = vld [vmem:[%s1 + $0x1f8] sm:$0xff]
        %v1673 = vld [vmem:[%s1 + $0x200] sm:$0xff]
        %v1674 = vld [vmem:[%s1 + $0x208] sm:$0xff]
        %v1675 = vld [vmem:[%s1 + $0x210] sm:$0xff]
        %v1676 = vld [vmem:[%s1 + $0x218] sm:$0xff]
        %v1677 = vld [vmem:[%s1 + $0x220] sm:$0xff]
        %v1678 = vld [vmem:[%s1 + $0x228] sm:$0xff]
        %v1679 = vld [vmem:[%s1 + $0x230] sm:$0xff]
        %v1680 = vld [vmem:[%s1 + $0x238] sm:$0xff]
        %v1681 = vld [vmem:[%s2] sm:$0x1]
        %v1683 = vlaneseq
        %v1684 = vshrl.u32 %v1683, 7
        %v1685 = vsub.s32 0, %v1684
        %v1686 = vrot.slane %v1681, %v1685
        %v1689 = vsel %vm252, %v1453, 0
        %v1692 = vsel %vm252, %v1458, 0
        %v1695 = vsel %vm252, %v1463, 0
        %v1698 = vsel %vm252, %v1468, 0
        %v1701 = vsel %vm252, %v1473, 0
        %v1704 = vsel %vm252, %v1478, 0
        %v1707 = vsel %vm252, %v1483, 0
        %v1710 = vsel %vm252, %v1488, 0
        %v1713 = vsel %vm252, %v1493, 0
        %v1716 = vsel %vm252, %v1498, 0
        %v1719 = vsel %vm252, %v1503, 0
        %v1722 = vsel %vm252, %v1508, 0
        %v1725 = vsel %vm252, %v1513, 0
        %v1728 = vsel %vm252, %v1518, 0
        %v1731 = vsel %vm252, %v1523, 0
        %v1734 = vsel %vm252, %v1528, 0
        %v1737 = vsel %vm252, %v1533, 0
        %v1740 = vsel %vm252, %v1538, 0
        %v1743 = vsel %vm252, %v1543, 0
        %v1746 = vsel %vm252, %v1548, 0
        %v1749 = vsel %vm252, %v1553, 0
        %v1752 = vsel %vm252, %v1558, 0
        %v1755 = vsel %vm252, %v1563, 0
        %v1758 = vsel %vm252, %v1568, 0
        %v1761 = vsel %vm252, %v1573, 0
        %v1764 = vsel %vm252, %v1578, 0
        %v1767 = vsel %vm252, %v1583, 0
        %v1770 = vsel %vm252, %v1588, 0
        %v1773 = vsel %vm252, %v1593, 0
        %v1776 = vsel %vm252, %v1598, 0
        %v1779 = vsel %vm252, %v1603, 0
        %v1782 = vsel %vm252, %v1608, 0
        %1784 = vmatprep.subr.mxu0 0.0
        %1785 = vmatpush1.msra.mxu0 %v1609
        %1786 = vmatprep.subr.mxu0 0.0
        %1787 = vmatpush1.msra.mxu0 %v1610
        %1788 = vmatprep.subr.mxu0 0.0
        %1789 = vmatpush1.msra.mxu0 %v1611
        %1790 = vmatprep.subr.mxu0 0.0
        %1791 = vmatpush1.msra.mxu0 %v1612
        %1792 = vmatprep.subr.mxu0 0.0
        %1793 = vmatpush1.msra.mxu0 %v1613
        %1794 = vmatprep.subr.mxu0 0.0
        %1795 = vmatpush1.msra.mxu0 %v1614
        %1796 = vmatprep.subr.mxu0 0.0
        %1797 = vmatpush1.msra.mxu0 %v1615
        %1798 = vmatprep.subr.mxu0 0.0
        %1799 = vmatpush1.msra.mxu0 %v1616
        %1800 = vmatprep.subr.mxu0 0.0
        %1801 = vmatpush1.msra.mxu0 %v1617
        %1802 = vmatprep.subr.mxu0 0.0
        %1803 = vmatpush1.msra.mxu0 %v1618
        %1804 = vmatprep.subr.mxu0 0.0
        %1805 = vmatpush1.msra.mxu0 %v1619
        %1806 = vmatprep.subr.mxu0 0.0
        %1807 = vmatpush1.msra.mxu0 %v1620
        %1808 = vmatprep.subr.mxu0 0.0
        %1809 = vmatpush1.msra.mxu0 %v1621
        %1810 = vmatprep.subr.mxu0 0.0
        %1811 = vmatpush1.msra.mxu0 %v1622
        %1812 = vmatprep.subr.mxu0 0.0
        %1813 = vmatpush1.msra.mxu0 %v1623
        %1814 = vmatprep.subr.mxu0 0.0
        %1815 = vmatpush1.msra.mxu0 %v1624
        %1816 = vmatprep.subr.mxu0 0.0
        %1817 = vmatpush1.msra.mxu0 %v1625
        %1818 = vmatprep.subr.mxu0 0.0
        %1819 = vmatpush1.msra.mxu0 %v1626
        %1820 = vmatprep.subr.mxu0 0.0
        %1821 = vmatpush1.msra.mxu0 %v1627
        %1822 = vmatprep.subr.mxu0 0.0
        %1823 = vmatpush1.msra.mxu0 %v1628
        %1824 = vmatprep.subr.mxu0 0.0
        %1825 = vmatpush1.msra.mxu0 %v1629
        %1826 = vmatprep.subr.mxu0 0.0
        %1827 = vmatpush1.msra.mxu0 %v1630
        %1828 = vmatprep.subr.mxu0 0.0
        %1829 = vmatpush1.msra.mxu0 %v1631
        %1830 = vmatprep.subr.mxu0 0.0
        %1831 = vmatpush1.msra.mxu0 %v1632
        %1832 = vmatprep.subr.mxu0 0.0
        %1833 = vmatpush1.msra.mxu0 %v1633
        %1834 = vmatprep.subr.mxu0 0.0
        %1835 = vmatpush1.msra.mxu0 %v1634
        %1836 = vmatprep.subr.mxu0 0.0
        %1837 = vmatpush1.msra.mxu0 %v1635
        %1838 = vmatprep.subr.mxu0 0.0
        %1839 = vmatpush1.msra.mxu0 %v1636
        %1840 = vmatprep.subr.mxu0 0.0
        %1841 = vmatpush1.msra.mxu0 %v1637
        %1842 = vmatprep.subr.mxu0 0.0
        %1843 = vmatpush1.msra.mxu0 %v1638
        %1844 = vmatprep.subr.mxu0 0.0
        %1845 = vmatpush1.msra.mxu0 %v1639
        %1846 = vmatprep.subr.mxu0 0.0
        %1847 = vmatpush1.msra.mxu0 %v1640
        %1848 = vmatprep.mubr.f32.mxu0 %v1450
        %1849 = vmatmul.mubr.f32.gmra.mrb[0].mxu0 %v1449
        %v1850 = vpop.f32.mrb[0].mxu0
        %v1851 = vadd.f32 %v1686, %v1850
        %v1852 = vpop.f32.mrb[0].mxu0
        %1853 = vmatprep.mubr.f32.mxu0 %v1455
        %1854 = vmatmul.mubr.f32.gmra.mrb[0].mxu0 %v1454
        %v1855 = vpop.f32.mrb[0].mxu0
        %v1856 = vadd.f32 %v1686, %v1855
        %v1857 = vpop.f32.mrb[0].mxu0
        %1858 = vmatprep.mubr.f32.mxu0 %v1460
        %1859 = vmatmul.mubr.f32.gmra.mrb[0].mxu0 %v1459
        %v1860 = vpop.f32.mrb[0].mxu0
        %v1861 = vadd.f32 %v1686, %v1860
        %v1862 = vpop.f32.mrb[0].mxu0
        %1863 = vmatprep.mubr.f32.mxu0 %v1465
        %1864 = vmatmul.mubr.f32.gmra.mrb[0].mxu0 %v1464
        %v1865 = vpop.f32.mrb[0].mxu0
        %v1866 = vadd.f32 %v1686, %v1865
        %v1867 = vpop.f32.mrb[0].mxu0
        %1868 = vmatprep.mubr.f32.mxu0 %v1470
        %1869 = vmatmul.mubr.f32.gmra.mrb[0].mxu0 %v1469
        %v1870 = vpop.f32.mrb[0].mxu0
        %v1871 = vadd.f32 %v1686, %v1870
        %v1872 = vpop.f32.mrb[0].mxu0
        %1873 = vmatprep.mubr.f32.mxu0 %v1475
        %1874 = vmatmul.mubr.f32.gmra.mrb[0].mxu0 %v1474
        %v1875 = vpop.f32.mrb[0].mxu0
        %v1876 = vadd.f32 %v1686, %v1875
        %v1877 = vpop.f32.mrb[0].mxu0
        %1878 = vmatprep.mubr.f32.mxu0 %v1480
        %1879 = vmatmul.mubr.f32.gmra.mrb[0].mxu0 %v1479
        %v1880 = vpop.f32.mrb[0].mxu0
        %v1881 = vadd.f32 %v1686, %v1880
        %v1882 = vpop.f32.mrb[0].mxu0
        %1883 = vmatprep.mubr.f32.mxu0 %v1485
        %1884 = vmatmul.mubr.f32.gmra.mrb[0].mxu0 %v1484
        %v1885 = vpop.f32.mrb[0].mxu0
        %v1886 = vadd.f32 %v1686, %v1885
        %v1887 = vpop.f32.mrb[0].mxu0
        %1888 = vmatprep.mubr.f32.mxu0 %v1490
        %1889 = vmatmul.mubr.f32.gmra.mrb[0].mxu0 %v1489
        %v1890 = vpop.f32.mrb[0].mxu0
        %v1891 = vadd.f32 %v1686, %v1890
        %v1892 = vpop.f32.mrb[0].mxu0
        %1893 = vmatprep.mubr.f32.mxu0 %v1495
        %1894 = vmatmul.mubr.f32.gmra.mrb[0].mxu0 %v1494
        %v1895 = vpop.f32.mrb[0].mxu0
        %v1896 = vadd.f32 %v1686, %v1895
        %v1897 = vpop.f32.mrb[0].mxu0
        %1898 = vmatprep.mubr.f32.mxu0 %v1500
        %1899 = vmatmul.mubr.f32.gmra.mrb[0].mxu0 %v1499
        %v1900 = vpop.f32.mrb[0].mxu0
        %v1901 = vadd.f32 %v1686, %v1900
        %v1902 = vpop.f32.mrb[0].mxu0
        %1903 = vmatprep.mubr.f32.mxu0 %v1505
        %1904 = vmatmul.mubr.f32.gmra.mrb[0].mxu0 %v1504
        %v1905 = vpop.f32.mrb[0].mxu0
        %v1906 = vadd.f32 %v1686, %v1905
        %v1907 = vpop.f32.mrb[0].mxu0
        %1908 = vmatprep.mubr.f32.mxu0 %v1510
        %1909 = vmatmul.mubr.f32.gmra.mrb[0].mxu0 %v1509
        %v1910 = vpop.f32.mrb[0].mxu0
        %v1911 = vadd.f32 %v1686, %v1910
        %v1912 = vpop.f32.mrb[0].mxu0
        %1913 = vmatprep.mubr.f32.mxu0 %v1515
        %1914 = vmatmul.mubr.f32.gmra.mrb[0].mxu0 %v1514
        %v1915 = vpop.f32.mrb[0].mxu0
        %v1916 = vadd.f32 %v1686, %v1915
        %v1917 = vpop.f32.mrb[0].mxu0
        %1918 = vmatprep.mubr.f32.mxu0 %v1520
        %1919 = vmatmul.mubr.f32.gmra.mrb[0].mxu0 %v1519
        %v1920 = vpop.f32.mrb[0].mxu0
        %v1921 = vadd.f32 %v1686, %v1920
        %v1922 = vpop.f32.mrb[0].mxu0
        %1923 = vmatprep.mubr.f32.mxu0 %v1525
        %1924 = vmatmul.mubr.f32.gmra.mrb[0].mxu0 %v1524
        %v1925 = vpop.f32.mrb[0].mxu0
        %v1926 = vadd.f32 %v1686, %v1925
        %v1927 = vpop.f32.mrb[0].mxu0
        %1928 = vmatprep.mubr.f32.mxu0 %v1530
        %1929 = vmatmul.mubr.f32.gmra.mrb[0].mxu0 %v1529
        %v1930 = vpop.f32.mrb[0].mxu0
        %v1931 = vadd.f32 %v1686, %v1930
        %v1932 = vpop.f32.mrb[0].mxu0
        %1933 = vmatprep.mubr.f32.mxu0 %v1535
        %1934 = vmatmul.mubr.f32.gmra.mrb[0].mxu0 %v1534
        %v1935 = vpop.f32.mrb[0].mxu0
        %v1936 = vadd.f32 %v1686, %v1935
        %v1937 = vpop.f32.mrb[0].mxu0
        %1938 = vmatprep.mubr.f32.mxu0 %v1540
        %1939 = vmatmul.mubr.f32.gmra.mrb[0].mxu0 %v1539
        %v1940 = vpop.f32.mrb[0].mxu0
        %v1941 = vadd.f32 %v1686, %v1940
        %v1942 = vpop.f32.mrb[0].mxu0
        %1943 = vmatprep.mubr.f32.mxu0 %v1545
        %1944 = vmatmul.mubr.f32.gmra.mrb[0].mxu0 %v1544
        %v1945 = vpop.f32.mrb[0].mxu0
        %v1946 = vadd.f32 %v1686, %v1945
        %v1947 = vpop.f32.mrb[0].mxu0
        %1948 = vmatprep.mubr.f32.mxu0 %v1550
        %1949 = vmatmul.mubr.f32.gmra.mrb[0].mxu0 %v1549
        %v1950 = vpop.f32.mrb[0].mxu0
        %v1951 = vadd.f32 %v1686, %v1950
        %v1952 = vpop.f32.mrb[0].mxu0
        %1953 = vmatprep.mubr.f32.mxu0 %v1555
        %1954 = vmatmul.mubr.f32.gmra.mrb[0].mxu0 %v1554
        %v1955 = vpop.f32.mrb[0].mxu0
        %v1956 = vadd.f32 %v1686, %v1955
        %v1957 = vpop.f32.mrb[0].mxu0
        %1958 = vmatprep.mubr.f32.mxu0 %v1560
        %1959 = vmatmul.mubr.f32.gmra.mrb[0].mxu0 %v1559
        %v1960 = vpop.f32.mrb[0].mxu0
        %v1961 = vadd.f32 %v1686, %v1960
        %v1962 = vpop.f32.mrb[0].mxu0
        %1963 = vmatprep.mubr.f32.mxu0 %v1565
        %1964 = vmatmul.mubr.f32.gmra.mrb[0].mxu0 %v1564
        %v1965 = vpop.f32.mrb[0].mxu0
        %v1966 = vadd.f32 %v1686, %v1965
        %v1967 = vpop.f32.mrb[0].mxu0
        %1968 = vmatprep.mubr.f32.mxu0 %v1570
        %1969 = vmatmul.mubr.f32.gmra.mrb[0].mxu0 %v1569
        %v1970 = vpop.f32.mrb[0].mxu0
        %v1971 = vadd.f32 %v1686, %v1970
        %v1972 = vpop.f32.mrb[0].mxu0
        %1973 = vmatprep.mubr.f32.mxu0 %v1575
        %1974 = vmatmul.mubr.f32.gmra.mrb[0].mxu0 %v1574
        %v1975 = vpop.f32.mrb[0].mxu0
        %v1976 = vadd.f32 %v1686, %v1975
        %v1977 = vpop.f32.mrb[0].mxu0
        %1978 = vmatprep.mubr.f32.mxu0 %v1580
        %1979 = vmatmul.mubr.f32.gmra.mrb[0].mxu0 %v1579
        %v1980 = vpop.f32.mrb[0].mxu0
        %v1981 = vadd.f32 %v1686, %v1980
        %v1982 = vpop.f32.mrb[0].mxu0
        %1983 = vmatprep.mubr.f32.mxu0 %v1585
        %1984 = vmatmul.mubr.f32.gmra.mrb[0].mxu0 %v1584
        %v1985 = vpop.f32.mrb[0].mxu0
        %v1986 = vadd.f32 %v1686, %v1985
        %v1987 = vpop.f32.mrb[0].mxu0
        %1988 = vmatprep.mubr.f32.mxu0 %v1590
        %1989 = vmatmul.mubr.f32.gmra.mrb[0].mxu0 %v1589
        %v1990 = vpop.f32.mrb[0].mxu0
        %v1991 = vadd.f32 %v1686, %v1990
        %v1992 = vpop.f32.mrb[0].mxu0
        %1993 = vmatprep.mubr.f32.mxu0 %v1595
        %1994 = vmatmul.mubr.f32.gmra.mrb[0].mxu0 %v1594
        %v1995 = vpop.f32.mrb[0].mxu0
        %v1996 = vadd.f32 %v1686, %v1995
        %v1997 = vpop.f32.mrb[0].mxu0
        %1998 = vmatprep.mubr.f32.mxu0 %v1600
        %1999 = vmatmul.mubr.f32.gmra.mrb[0].mxu0 %v1599
        %v2000 = vpop.f32.mrb[0].mxu0
        %v2001 = vadd.f32 %v1686, %v2000
        %v2002 = vpop.f32.mrb[0].mxu0
        %2003 = vmatprep.mubr.f32.mxu0 %v1605
        %2004 = vmatmul.mubr.f32.gmra.mrb[0].mxu0 %v1604
        %v2005 = vpop.f32.mrb[0].mxu0
        %v2006 = vadd.f32 %v1686, %v2005
        %v2007 = vpop.f32.mrb[0].mxu0
        %2008 = vdwg.mxu0
        %2009 = vmatprep.subr.mxu0 0.0
        %2010 = vmatpush1.msra.mxu0 %v1641
        %2011 = vmatprep.subr.mxu0 0.0
        %2012 = vmatpush1.msra.mxu0 %v1642
        %2013 = vmatprep.subr.mxu0 0.0
        %2014 = vmatpush1.msra.mxu0 %v1643
        %2015 = vmatprep.subr.mxu0 0.0
        %2016 = vmatpush1.msra.mxu0 %v1644
        %2017 = vmatprep.subr.mxu0 0.0
        %2018 = vmatpush1.msra.mxu0 %v1645
        %2019 = vmatprep.subr.mxu0 0.0
        %2020 = vmatpush1.msra.mxu0 %v1646
        %2021 = vmatprep.subr.mxu0 0.0
        %2022 = vmatpush1.msra.mxu0 %v1647
        %2023 = vmatprep.subr.mxu0 0.0
        %2024 = vmatpush1.msra.mxu0 %v1648
        %2025 = vmatprep.subr.mxu0 0.0
        %2026 = vmatpush1.msra.mxu0 %v1649
        %2027 = vmatprep.subr.mxu0 0.0
        %2028 = vmatpush1.msra.mxu0 %v1650
        %2029 = vmatprep.subr.mxu0 0.0
        %2030 = vmatpush1.msra.mxu0 %v1651
        %2031 = vmatprep.subr.mxu0 0.0
        %2032 = vmatpush1.msra.mxu0 %v1652
        %2033 = vmatprep.subr.mxu0 0.0
        %2034 = vmatpush1.msra.mxu0 %v1653
        %2035 = vmatprep.subr.mxu0 0.0
        %2036 = vmatpush1.msra.mxu0 %v1654
        %2037 = vmatprep.subr.mxu0 0.0
        %2038 = vmatpush1.msra.mxu0 %v1655
        %2039 = vmatprep.subr.mxu0 0.0
        %2040 = vmatpush1.msra.mxu0 %v1656
        %2041 = vmatprep.subr.mxu0 0.0
        %2042 = vmatpush1.msra.mxu0 %v1657
        %2043 = vmatprep.subr.mxu0 0.0
        %2044 = vmatpush1.msra.mxu0 %v1658
        %2045 = vmatprep.subr.mxu0 0.0
        %2046 = vmatpush1.msra.mxu0 %v1659
        %2047 = vmatprep.subr.mxu0 0.0
        %2048 = vmatpush1.msra.mxu0 %v1660
        %2049 = vmatprep.subr.mxu0 0.0
        %2050 = vmatpush1.msra.mxu0 %v1661
        %2051 = vmatprep.subr.mxu0 0.0
        %2052 = vmatpush1.msra.mxu0 %v1662
        %2053 = vmatprep.subr.mxu0 0.0
        %2054 = vmatpush1.msra.mxu0 %v1663
        %2055 = vmatprep.subr.mxu0 0.0
        %2056 = vmatpush1.msra.mxu0 %v1664
        %2057 = vmatprep.subr.mxu0 0.0
        %2058 = vmatpush1.msra.mxu0 %v1665
        %2059 = vmatprep.subr.mxu0 0.0
        %2060 = vmatpush1.msra.mxu0 %v1666
        %2061 = vmatprep.subr.mxu0 0.0
        %2062 = vmatpush1.msra.mxu0 %v1667
        %2063 = vmatprep.subr.mxu0 0.0
        %2064 = vmatpush1.msra.mxu0 %v1668
        %2065 = vmatprep.subr.mxu0 0.0
        %2066 = vmatpush1.msra.mxu0 %v1669
        %2067 = vmatprep.subr.mxu0 0.0
        %2068 = vmatpush1.msra.mxu0 %v1670
        %2069 = vmatprep.subr.mxu0 0.0
        %2070 = vmatpush1.msra.mxu0 %v1671
        %2071 = vmatprep.subr.mxu0 0.0
        %2072 = vmatpush1.msra.mxu0 %v1672
        %2073 = vmatprep.mubr.f32.mxu0 %v1452
        %2074 = vmatmul.mubr.f32.gmra.mrb[0].mxu0 %v1451
        %v2075 = vpop.f32.mrb[0].mxu0
        %v2076 = vadd.f32 %v1851, %v2075
        %v2077 = vpop.f32.mrb[0].mxu0
        %2078 = vmatprep.mubr.f32.mxu0 %v1457
        %2079 = vmatmul.mubr.f32.gmra.mrb[0].mxu0 %v1456
        %v2080 = vpop.f32.mrb[0].mxu0
        %v2081 = vadd.f32 %v1856, %v2080
        %v2082 = vpop.f32.mrb[0].mxu0
        %2083 = vmatprep.mubr.f32.mxu0 %v1462
        %2084 = vmatmul.mubr.f32.gmra.mrb[0].mxu0 %v1461
        %v2085 = vpop.f32.mrb[0].mxu0
        %v2086 = vadd.f32 %v1861, %v2085
        %v2087 = vpop.f32.mrb[0].mxu0
        %2088 = vmatprep.mubr.f32.mxu0 %v1467
        %2089 = vmatmul.mubr.f32.gmra.mrb[0].mxu0 %v1466
        %v2090 = vpop.f32.mrb[0].mxu0
        %v2091 = vadd.f32 %v1866, %v2090
        %v2092 = vpop.f32.mrb[0].mxu0
        %2093 = vmatprep.mubr.f32.mxu0 %v1472
        %2094 = vmatmul.mubr.f32.gmra.mrb[0].mxu0 %v1471
        %v2095 = vpop.f32.mrb[0].mxu0
        %v2096 = vadd.f32 %v1871, %v2095
        %v2097 = vpop.f32.mrb[0].mxu0
        %2098 = vmatprep.mubr.f32.mxu0 %v1477
        %2099 = vmatmul.mubr.f32.gmra.mrb[0].mxu0 %v1476
        %v2100 = vpop.f32.mrb[0].mxu0
        %v2101 = vadd.f32 %v1876, %v2100
        %v2102 = vpop.f32.mrb[0].mxu0
        %2103 = vmatprep.mubr.f32.mxu0 %v1482
        %2104 = vmatmul.mubr.f32.gmra.mrb[0].mxu0 %v1481
        %v2105 = vpop.f32.mrb[0].mxu0
        %v2106 = vadd.f32 %v1881, %v2105
        %v2107 = vpop.f32.mrb[0].mxu0
        %2108 = vmatprep.mubr.f32.mxu0 %v1487
        %2109 = vmatmul.mubr.f32.gmra.mrb[0].mxu0 %v1486
        %v2110 = vpop.f32.mrb[0].mxu0
        %v2111 = vadd.f32 %v1886, %v2110
        %v2112 = vpop.f32.mrb[0].mxu0
        %2113 = vmatprep.mubr.f32.mxu0 %v1492
        %2114 = vmatmul.mubr.f32.gmra.mrb[0].mxu0 %v1491
        %v2115 = vpop.f32.mrb[0].mxu0
        %v2116 = vadd.f32 %v1891, %v2115
        %v2117 = vpop.f32.mrb[0].mxu0
        %2118 = vmatprep.mubr.f32.mxu0 %v1497
        %2119 = vmatmul.mubr.f32.gmra.mrb[0].mxu0 %v1496
        %v2120 = vpop.f32.mrb[0].mxu0
        %v2121 = vadd.f32 %v1896, %v2120
        %v2122 = vpop.f32.mrb[0].mxu0
        %2123 = vmatprep.mubr.f32.mxu0 %v1502
        %2124 = vmatmul.mubr.f32.gmra.mrb[0].mxu0 %v1501
        %v2125 = vpop.f32.mrb[0].mxu0
        %v2126 = vadd.f32 %v1901, %v2125
        %v2127 = vpop.f32.mrb[0].mxu0
        %2128 = vmatprep.mubr.f32.mxu0 %v1507
        %2129 = vmatmul.mubr.f32.gmra.mrb[0].mxu0 %v1506
        %v2130 = vpop.f32.mrb[0].mxu0
        %v2131 = vadd.f32 %v1906, %v2130
        %v2132 = vpop.f32.mrb[0].mxu0
        %2133 = vmatprep.mubr.f32.mxu0 %v1512
        %2134 = vmatmul.mubr.f32.gmra.mrb[0].mxu0 %v1511
        %v2135 = vpop.f32.mrb[0].mxu0
        %v2136 = vadd.f32 %v1911, %v2135
        %v2137 = vpop.f32.mrb[0].mxu0
        %2138 = vmatprep.mubr.f32.mxu0 %v1517
        %2139 = vmatmul.mubr.f32.gmra.mrb[0].mxu0 %v1516
        %v2140 = vpop.f32.mrb[0].mxu0
        %v2141 = vadd.f32 %v1916, %v2140
        %v2142 = vpop.f32.mrb[0].mxu0
        %2143 = vmatprep.mubr.f32.mxu0 %v1522
        %2144 = vmatmul.mubr.f32.gmra.mrb[0].mxu0 %v1521
        %v2145 = vpop.f32.mrb[0].mxu0
        %v2146 = vadd.f32 %v1921, %v2145
        %v2147 = vpop.f32.mrb[0].mxu0
        %2148 = vmatprep.mubr.f32.mxu0 %v1527
        %2149 = vmatmul.mubr.f32.gmra.mrb[0].mxu0 %v1526
        %v2150 = vpop.f32.mrb[0].mxu0
        %v2151 = vadd.f32 %v1926, %v2150
        %v2152 = vpop.f32.mrb[0].mxu0
        %2153 = vmatprep.mubr.f32.mxu0 %v1532
        %2154 = vmatmul.mubr.f32.gmra.mrb[0].mxu0 %v1531
        %v2155 = vpop.f32.mrb[0].mxu0
        %v2156 = vadd.f32 %v1931, %v2155
        %v2157 = vpop.f32.mrb[0].mxu0
        %2158 = vmatprep.mubr.f32.mxu0 %v1537
        %2159 = vmatmul.mubr.f32.gmra.mrb[0].mxu0 %v1536
        %v2160 = vpop.f32.mrb[0].mxu0
        %v2161 = vadd.f32 %v1936, %v2160
        %v2162 = vpop.f32.mrb[0].mxu0
        %2163 = vmatprep.mubr.f32.mxu0 %v1542
        %2164 = vmatmul.mubr.f32.gmra.mrb[0].mxu0 %v1541
        %v2165 = vpop.f32.mrb[0].mxu0
        %v2166 = vadd.f32 %v1941, %v2165
        %v2167 = vpop.f32.mrb[0].mxu0
        %2168 = vmatprep.mubr.f32.mxu0 %v1547
        %2169 = vmatmul.mubr.f32.gmra.mrb[0].mxu0 %v1546
        %v2170 = vpop.f32.mrb[0].mxu0
        %v2171 = vadd.f32 %v1946, %v2170
        %v2172 = vpop.f32.mrb[0].mxu0
        %2173 = vmatprep.mubr.f32.mxu0 %v1552
        %2174 = vmatmul.mubr.f32.gmra.mrb[0].mxu0 %v1551
        %v2175 = vpop.f32.mrb[0].mxu0
        %v2176 = vadd.f32 %v1951, %v2175
        %v2177 = vpop.f32.mrb[0].mxu0
        %2178 = vmatprep.mubr.f32.mxu0 %v1557
        %2179 = vmatmul.mubr.f32.gmra.mrb[0].mxu0 %v1556
        %v2180 = vpop.f32.mrb[0].mxu0
        %v2181 = vadd.f32 %v1956, %v2180
        %v2182 = vpop.f32.mrb[0].mxu0
        %2183 = vmatprep.mubr.f32.mxu0 %v1562
        %2184 = vmatmul.mubr.f32.gmra.mrb[0].mxu0 %v1561
        %v2185 = vpop.f32.mrb[0].mxu0
        %v2186 = vadd.f32 %v1961, %v2185
        %v2187 = vpop.f32.mrb[0].mxu0
        %2188 = vmatprep.mubr.f32.mxu0 %v1567
        %2189 = vmatmul.mubr.f32.gmra.mrb[0].mxu0 %v1566
        %v2190 = vpop.f32.mrb[0].mxu0
        %v2191 = vadd.f32 %v1966, %v2190
        %v2192 = vpop.f32.mrb[0].mxu0
        %2193 = vmatprep.mubr.f32.mxu0 %v1572
        %2194 = vmatmul.mubr.f32.gmra.mrb[0].mxu0 %v1571
        %v2195 = vpop.f32.mrb[0].mxu0
        %v2196 = vadd.f32 %v1971, %v2195
        %v2197 = vpop.f32.mrb[0].mxu0
        %2198 = vmatprep.mubr.f32.mxu0 %v1577
        %2199 = vmatmul.mubr.f32.gmra.mrb[0].mxu0 %v1576
        %v2200 = vpop.f32.mrb[0].mxu0
        %v2201 = vadd.f32 %v1976, %v2200
        %v2202 = vpop.f32.mrb[0].mxu0
        %2203 = vmatprep.mubr.f32.mxu0 %v1582
        %2204 = vmatmul.mubr.f32.gmra.mrb[0].mxu0 %v1581
        %v2205 = vpop.f32.mrb[0].mxu0
        %v2206 = vadd.f32 %v1981, %v2205
        %v2207 = vpop.f32.mrb[0].mxu0
        %2208 = vmatprep.mubr.f32.mxu0 %v1587
        %2209 = vmatmul.mubr.f32.gmra.mrb[0].mxu0 %v1586
        %v2210 = vpop.f32.mrb[0].mxu0
        %v2211 = vadd.f32 %v1986, %v2210
        %v2212 = vpop.f32.mrb[0].mxu0
        %2213 = vmatprep.mubr.f32.mxu0 %v1592
        %2214 = vmatmul.mubr.f32.gmra.mrb[0].mxu0 %v1591
        %v2215 = vpop.f32.mrb[0].mxu0
        %v2216 = vadd.f32 %v1991, %v2215
        %v2217 = vpop.f32.mrb[0].mxu0
        %2218 = vmatprep.mubr.f32.mxu0 %v1597
        %2219 = vmatmul.mubr.f32.gmra.mrb[0].mxu0 %v1596
        %v2220 = vpop.f32.mrb[0].mxu0
        %v2221 = vadd.f32 %v1996, %v2220
        %v2222 = vpop.f32.mrb[0].mxu0
        %2223 = vmatprep.mubr.f32.mxu0 %v1602
        %2224 = vmatmul.mubr.f32.gmra.mrb[0].mxu0 %v1601
        %v2225 = vpop.f32.mrb[0].mxu0
        %v2226 = vadd.f32 %v2001, %v2225
        %v2227 = vpop.f32.mrb[0].mxu0
        %2228 = vmatprep.mubr.f32.mxu0 %v1607
        %2229 = vmatmul.mubr.f32.gmra.mrb[0].mxu0 %v1606
        %v2230 = vpop.f32.mrb[0].mxu0
        %v2231 = vadd.f32 %v2006, %v2230
        %v2232 = vpop.f32.mrb[0].mxu0
        %2233 = vdwg.mxu0
        %2234 = vmatprep.subr.mxu0 0.0
        %2235 = vmatpush1.msra.mxu0 %v1673
        %2236 = vmatprep.subr.mxu0 0.0
        %2237 = vmatpush1.msra.mxu0 %v1674
        %2238 = vmatprep.subr.mxu0 0.0
        %2239 = vmatpush1.msra.mxu0 %v1675
        %2240 = vmatprep.subr.mxu0 0.0
        %2241 = vmatpush1.msra.mxu0 %v1676
        %2242 = vmatprep.subr.mxu0 0.0
        %2243 = vmatpush1.msra.mxu0 %v1677
        %2244 = vmatprep.subr.mxu0 0.0
        %2245 = vmatpush1.msra.mxu0 %v1678
        %2246 = vmatprep.subr.mxu0 0.0
        %2247 = vmatpush1.msra.mxu0 %v1679
        %2248 = vmatprep.subr.mxu0 0.0
        %2249 = vmatpush1.msra.mxu0 %v1680
        %2250 = vmatprep.subr.mxu0 0.0
        %2251 = vmatpush1.msra.mxu0 0.0
        %2252 = vmatprep.subr.mxu0 0.0
        %2253 = vmatpush1.msra.mxu0 0.0
        %2254 = vmatprep.subr.mxu0 0.0
        %2255 = vmatpush1.msra.mxu0 0.0
        %2256 = vmatprep.subr.mxu0 0.0
        %2257 = vmatpush1.msra.mxu0 0.0
        %2258 = vmatprep.subr.mxu0 0.0
        %2259 = vmatpush1.msra.mxu0 0.0
        %2260 = vmatprep.subr.mxu0 0.0
        %2261 = vmatpush1.msra.mxu0 0.0
        %2262 = vmatprep.subr.mxu0 0.0
        %2263 = vmatpush1.msra.mxu0 0.0
        %2264 = vmatprep.subr.mxu0 0.0
        %2265 = vmatpush1.msra.mxu0 0.0
        %2266 = vmatprep.subr.mxu0 0.0
        %2267 = vmatpush1.msra.mxu0 0.0
        %2268 = vmatprep.subr.mxu0 0.0
        %2269 = vmatpush1.msra.mxu0 0.0
        %2270 = vmatprep.subr.mxu0 0.0
        %2271 = vmatpush1.msra.mxu0 0.0
        %2272 = vmatprep.subr.mxu0 0.0
        %2273 = vmatpush1.msra.mxu0 0.0
        %2274 = vmatprep.subr.mxu0 0.0
        %2275 = vmatpush1.msra.mxu0 0.0
        %2276 = vmatprep.subr.mxu0 0.0
        %2277 = vmatpush1.msra.mxu0 0.0
        %2278 = vmatprep.subr.mxu0 0.0
        %2279 = vmatpush1.msra.mxu0 0.0
        %2280 = vmatprep.subr.mxu0 0.0
        %2281 = vmatpush1.msra.mxu0 0.0
        %2282 = vmatprep.subr.mxu0 0.0
        %2283 = vmatpush1.msra.mxu0 0.0
        %2284 = vmatprep.subr.mxu0 0.0
        %2285 = vmatpush1.msra.mxu0 0.0
        %2286 = vmatprep.subr.mxu0 0.0
        %2287 = vmatpush1.msra.mxu0 0.0
        %2288 = vmatprep.subr.mxu0 0.0
        %2289 = vmatpush1.msra.mxu0 0.0
        %2290 = vmatprep.subr.mxu0 0.0
        %2291 = vmatpush1.msra.mxu0 0.0
        %2292 = vmatprep.subr.mxu0 0.0
        %2293 = vmatpush1.msra.mxu0 0.0
        %2294 = vmatprep.subr.mxu0 0.0
        %2295 = vmatpush1.msra.mxu0 0.0
        %2296 = vmatprep.subr.mxu0 0.0
        %2297 = vmatpush1.msra.mxu0 0.0
        %2298 = vmatprep.mubr.f32.mxu0 0.0
        %2299 = vmatmul.mubr.f32.gmra.mrb[0].mxu0 %v1689
        %v2300 = vpop.f32.mrb[0].mxu0
        %v2301 = vadd.f32 %v2076, %v2300
        %v2302 = vpop.f32.mrb[0].mxu0
        %2303 = vmatprep.mubr.f32.mxu0 0.0
        %2304 = vmatmul.mubr.f32.gmra.mrb[0].mxu0 %v1692
        %v2305 = vpop.f32.mrb[0].mxu0
        %v2306 = vadd.f32 %v2081, %v2305
        %v2307 = vpop.f32.mrb[0].mxu0
        %2308 = vmatprep.mubr.f32.mxu0 0.0
        %2309 = vmatmul.mubr.f32.gmra.mrb[0].mxu0 %v1695
        %v2310 = vpop.f32.mrb[0].mxu0
        %v2311 = vadd.f32 %v2086, %v2310
        %v2312 = vpop.f32.mrb[0].mxu0
        %2313 = vmatprep.mubr.f32.mxu0 0.0
        %2314 = vmatmul.mubr.f32.gmra.mrb[0].mxu0 %v1698
        %v2315 = vpop.f32.mrb[0].mxu0
        %v2316 = vadd.f32 %v2091, %v2315
        %v2317 = vpop.f32.mrb[0].mxu0
        %2318 = vmatprep.mubr.f32.mxu0 0.0
        %2319 = vmatmul.mubr.f32.gmra.mrb[0].mxu0 %v1701
        %v2320 = vpop.f32.mrb[0].mxu0
        %v2321 = vadd.f32 %v2096, %v2320
        %v2322 = vpop.f32.mrb[0].mxu0
        %2323 = vmatprep.mubr.f32.mxu0 0.0
        %2324 = vmatmul.mubr.f32.gmra.mrb[0].mxu0 %v1704
        %v2325 = vpop.f32.mrb[0].mxu0
        %v2326 = vadd.f32 %v2101, %v2325
        %v2327 = vpop.f32.mrb[0].mxu0
        %2328 = vmatprep.mubr.f32.mxu0 0.0
        %2329 = vmatmul.mubr.f32.gmra.mrb[0].mxu0 %v1707
        %v2330 = vpop.f32.mrb[0].mxu0
        %v2331 = vadd.f32 %v2106, %v2330
        %v2332 = vpop.f32.mrb[0].mxu0
        %2333 = vmatprep.mubr.f32.mxu0 0.0
        %2334 = vmatmul.mubr.f32.gmra.mrb[0].mxu0 %v1710
        %v2335 = vpop.f32.mrb[0].mxu0
        %v2336 = vadd.f32 %v2111, %v2335
        %v2337 = vpop.f32.mrb[0].mxu0
        %2338 = vmatprep.mubr.f32.mxu0 0.0
        %2339 = vmatmul.mubr.f32.gmra.mrb[0].mxu0 %v1713
        %v2340 = vpop.f32.mrb[0].mxu0
        %v2341 = vadd.f32 %v2116, %v2340
        %v2342 = vpop.f32.mrb[0].mxu0
        %2343 = vmatprep.mubr.f32.mxu0 0.0
        %2344 = vmatmul.mubr.f32.gmra.mrb[0].mxu0 %v1716
        %v2345 = vpop.f32.mrb[0].mxu0
        %v2346 = vadd.f32 %v2121, %v2345
        %v2347 = vpop.f32.mrb[0].mxu0
        %2348 = vmatprep.mubr.f32.mxu0 0.0
        %2349 = vmatmul.mubr.f32.gmra.mrb[0].mxu0 %v1719
        %v2350 = vpop.f32.mrb[0].mxu0
        %v2351 = vadd.f32 %v2126, %v2350
        %v2352 = vpop.f32.mrb[0].mxu0
        %2353 = vmatprep.mubr.f32.mxu0 0.0
        %2354 = vmatmul.mubr.f32.gmra.mrb[0].mxu0 %v1722
        %v2355 = vpop.f32.mrb[0].mxu0
        %v2356 = vadd.f32 %v2131, %v2355
        %v2357 = vpop.f32.mrb[0].mxu0
        %2358 = vmatprep.mubr.f32.mxu0 0.0
        %2359 = vmatmul.mubr.f32.gmra.mrb[0].mxu0 %v1725
        %v2360 = vpop.f32.mrb[0].mxu0
        %v2361 = vadd.f32 %v2136, %v2360
        %v2362 = vpop.f32.mrb[0].mxu0
        %2363 = vmatprep.mubr.f32.mxu0 0.0
        %2364 = vmatmul.mubr.f32.gmra.mrb[0].mxu0 %v1728
        %v2365 = vpop.f32.mrb[0].mxu0
        %v2366 = vadd.f32 %v2141, %v2365
        %v2367 = vpop.f32.mrb[0].mxu0
        %2368 = vmatprep.mubr.f32.mxu0 0.0
        %2369 = vmatmul.mubr.f32.gmra.mrb[0].mxu0 %v1731
        %v2370 = vpop.f32.mrb[0].mxu0
        %v2371 = vadd.f32 %v2146, %v2370
        %v2372 = vpop.f32.mrb[0].mxu0
        %2373 = vmatprep.mubr.f32.mxu0 0.0
        %2374 = vmatmul.mubr.f32.gmra.mrb[0].mxu0 %v1734
        %v2375 = vpop.f32.mrb[0].mxu0
        %v2376 = vadd.f32 %v2151, %v2375
        %v2377 = vpop.f32.mrb[0].mxu0
        %2378 = vmatprep.mubr.f32.mxu0 0.0
        %2379 = vmatmul.mubr.f32.gmra.mrb[0].mxu0 %v1737
        %v2380 = vpop.f32.mrb[0].mxu0
        %v2381 = vadd.f32 %v2156, %v2380
        %v2382 = vpop.f32.mrb[0].mxu0
        %2383 = vmatprep.mubr.f32.mxu0 0.0
        %2384 = vmatmul.mubr.f32.gmra.mrb[0].mxu0 %v1740
        %v2385 = vpop.f32.mrb[0].mxu0
        %v2386 = vadd.f32 %v2161, %v2385
        %v2387 = vpop.f32.mrb[0].mxu0
        %2388 = vmatprep.mubr.f32.mxu0 0.0
        %2389 = vmatmul.mubr.f32.gmra.mrb[0].mxu0 %v1743
        %v2390 = vpop.f32.mrb[0].mxu0
        %v2391 = vadd.f32 %v2166, %v2390
        %v2392 = vpop.f32.mrb[0].mxu0
        %2393 = vmatprep.mubr.f32.mxu0 0.0
        %2394 = vmatmul.mubr.f32.gmra.mrb[0].mxu0 %v1746
        %v2395 = vpop.f32.mrb[0].mxu0
        %v2396 = vadd.f32 %v2171, %v2395
        %v2397 = vpop.f32.mrb[0].mxu0
        %2398 = vmatprep.mubr.f32.mxu0 0.0
        %2399 = vmatmul.mubr.f32.gmra.mrb[0].mxu0 %v1749
        %v2400 = vpop.f32.mrb[0].mxu0
        %v2401 = vadd.f32 %v2176, %v2400
        %v2402 = vpop.f32.mrb[0].mxu0
        %2403 = vmatprep.mubr.f32.mxu0 0.0
        %2404 = vmatmul.mubr.f32.gmra.mrb[0].mxu0 %v1752
        %v2405 = vpop.f32.mrb[0].mxu0
        %v2406 = vadd.f32 %v2181, %v2405
        %v2407 = vpop.f32.mrb[0].mxu0
        %2408 = vmatprep.mubr.f32.mxu0 0.0
        %2409 = vmatmul.mubr.f32.gmra.mrb[0].mxu0 %v1755
        %v2410 = vpop.f32.mrb[0].mxu0
        %v2411 = vadd.f32 %v2186, %v2410
        %v2412 = vpop.f32.mrb[0].mxu0
        %2413 = vmatprep.mubr.f32.mxu0 0.0
        %2414 = vmatmul.mubr.f32.gmra.mrb[0].mxu0 %v1758
        %v2415 = vpop.f32.mrb[0].mxu0
        %v2416 = vadd.f32 %v2191, %v2415
        %v2417 = vpop.f32.mrb[0].mxu0
        %2418 = vmatprep.mubr.f32.mxu0 0.0
        %2419 = vmatmul.mubr.f32.gmra.mrb[0].mxu0 %v1761
        %v2420 = vpop.f32.mrb[0].mxu0
        %v2421 = vadd.f32 %v2196, %v2420
        %v2422 = vpop.f32.mrb[0].mxu0
        %2423 = vmatprep.mubr.f32.mxu0 0.0
        %2424 = vmatmul.mubr.f32.gmra.mrb[0].mxu0 %v1764
        %v2425 = vpop.f32.mrb[0].mxu0
        %v2426 = vadd.f32 %v2201, %v2425
        %v2427 = vpop.f32.mrb[0].mxu0
        %2428 = vmatprep.mubr.f32.mxu0 0.0
        %2429 = vmatmul.mubr.f32.gmra.mrb[0].mxu0 %v1767
        %v2430 = vpop.f32.mrb[0].mxu0
        %v2431 = vadd.f32 %v2206, %v2430
        %v2432 = vpop.f32.mrb[0].mxu0
        %2433 = vmatprep.mubr.f32.mxu0 0.0
        %2434 = vmatmul.mubr.f32.gmra.mrb[0].mxu0 %v1770
        %v2435 = vpop.f32.mrb[0].mxu0
        %v2436 = vadd.f32 %v2211, %v2435
        %v2437 = vpop.f32.mrb[0].mxu0
        %2438 = vmatprep.mubr.f32.mxu0 0.0
        %2439 = vmatmul.mubr.f32.gmra.mrb[0].mxu0 %v1773
        %v2440 = vpop.f32.mrb[0].mxu0
        %v2441 = vadd.f32 %v2216, %v2440
        %v2442 = vpop.f32.mrb[0].mxu0
        %2443 = vmatprep.mubr.f32.mxu0 0.0
        %2444 = vmatmul.mubr.f32.gmra.mrb[0].mxu0 %v1776
        %v2445 = vpop.f32.mrb[0].mxu0
        %v2446 = vadd.f32 %v2221, %v2445
        %v2447 = vpop.f32.mrb[0].mxu0
        %2448 = vmatprep.mubr.f32.mxu0 0.0
        %2449 = vmatmul.mubr.f32.gmra.mrb[0].mxu0 %v1779
        %v2450 = vpop.f32.mrb[0].mxu0
        %v2451 = vadd.f32 %v2226, %v2450
        %v2452 = vpop.f32.mrb[0].mxu0
        %2453 = vmatprep.mubr.f32.mxu0 0.0
        %2454 = vmatmul.mubr.f32.gmra.mrb[0].mxu0 %v1782
        %v2455 = vpop.f32.mrb[0].mxu0
        %v2456 = vadd.f32 %v2231, %v2455
        %v2457 = vpop.f32.mrb[0].mxu0
        %2458 = vdwg.mxu0
        %v2459 = vld [vmem:[#allocation4] sm:$0x1]
        %s2460 = vtos %v2459
        %vm2461 = vcmp.gt.f32.partialorder %v2301, 0.0
        %vm2462 = vcmp.gt.f32.partialorder %v2306, 0.0
        %vm2463 = vcmp.gt.f32.partialorder %v2311, 0.0
        %vm2464 = vcmp.gt.f32.partialorder %v2316, 0.0
        %vm2465 = vcmp.gt.f32.partialorder %v2321, 0.0
        %vm2466 = vcmp.gt.f32.partialorder %v2326, 0.0
        %vm2467 = vcmp.gt.f32.partialorder %v2331, 0.0
        %vm2468 = vcmp.gt.f32.partialorder %v2336, 0.0
        %vm2469 = vcmp.gt.f32.partialorder %v2341, 0.0
        %vm2470 = vcmp.gt.f32.partialorder %v2346, 0.0
        %vm2471 = vcmp.gt.f32.partialorder %v2351, 0.0
        %vm2472 = vcmp.gt.f32.partialorder %v2356, 0.0
        %vm2473 = vcmp.gt.f32.partialorder %v2361, 0.0
        %vm2474 = vcmp.gt.f32.partialorder %v2366, 0.0
        %vm2475 = vcmp.gt.f32.partialorder %v2371, 0.0
        %vm2476 = vcmp.gt.f32.partialorder %v2376, 0.0
        %vm2477 = vcmp.gt.f32.partialorder %v2381, 0.0
        %vm2478 = vcmp.gt.f32.partialorder %v2386, 0.0
        %vm2479 = vcmp.gt.f32.partialorder %v2391, 0.0
        %vm2480 = vcmp.gt.f32.partialorder %v2396, 0.0
        %vm2481 = vcmp.gt.f32.partialorder %v2401, 0.0
        %vm2482 = vcmp.gt.f32.partialorder %v2406, 0.0
        %vm2483 = vcmp.gt.f32.partialorder %v2411, 0.0
        %vm2484 = vcmp.gt.f32.partialorder %v2416, 0.0
        %vm2485 = vcmp.gt.f32.partialorder %v2421, 0.0
        %vm2486 = vcmp.gt.f32.partialorder %v2426, 0.0
        %vm2487 = vcmp.gt.f32.partialorder %v2431, 0.0
        %vm2488 = vcmp.gt.f32.partialorder %v2436, 0.0
        %vm2489 = vcmp.gt.f32.partialorder %v2441, 0.0
        %vm2490 = vcmp.gt.f32.partialorder %v2446, 0.0
        %vm2491 = vcmp.gt.f32.partialorder %v2451, 0.0
        %vm2492 = vcmp.gt.f32.partialorder %v2456, 0.0
        %v2493 = vstv %s2460
        %v2494 = vmul.f32 %v2493, %v2301
        %v2495 = vmul.f32 %v2493, %v2306
        %v2496 = vmul.f32 %v2493, %v2311
        %v2497 = vmul.f32 %v2493, %v2316
        %v2498 = vmul.f32 %v2493, %v2321
        %v2499 = vmul.f32 %v2493, %v2326
        %v2500 = vmul.f32 %v2493, %v2331
        %v2501 = vmul.f32 %v2493, %v2336
        %v2502 = vmul.f32 %v2493, %v2341
        %v2503 = vmul.f32 %v2493, %v2346
        %v2504 = vmul.f32 %v2493, %v2351
        %v2505 = vmul.f32 %v2493, %v2356
        %v2506 = vmul.f32 %v2493, %v2361
        %v2507 = vmul.f32 %v2493, %v2366
        %v2508 = vmul.f32 %v2493, %v2371
        %v2509 = vmul.f32 %v2493, %v2376
        %v2510 = vmul.f32 %v2493, %v2381
        %v2511 = vmul.f32 %v2493, %v2386
        %v2512 = vmul.f32 %v2493, %v2391
        %v2513 = vmul.f32 %v2493, %v2396
        %v2514 = vmul.f32 %v2493, %v2401
        %v2515 = vmul.f32 %v2493, %v2406
        %v2516 = vmul.f32 %v2493, %v2411
        %v2517 = vmul.f32 %v2493, %v2416
        %v2518 = vmul.f32 %v2493, %v2421
        %v2519 = vmul.f32 %v2493, %v2426
        %v2520 = vmul.f32 %v2493, %v2431
        %v2521 = vmul.f32 %v2493, %v2436
        %v2522 = vmul.f32 %v2493, %v2441
        %v2523 = vmul.f32 %v2493, %v2446
        %v2524 = vmul.f32 %v2493, %v2451
        %v2525 = vmul.f32 %v2493, %v2456
        %v2526 = vsel %vm2461, %v2301, %v2494
        %v2527 = vsel %vm2462, %v2306, %v2495
        %v2528 = vsel %vm2463, %v2311, %v2496
        %v2529 = vsel %vm2464, %v2316, %v2497
        %v2530 = vsel %vm2465, %v2321, %v2498
        %v2531 = vsel %vm2466, %v2326, %v2499
        %v2532 = vsel %vm2467, %v2331, %v2500
        %v2533 = vsel %vm2468, %v2336, %v2501
        %v2534 = vsel %vm2469, %v2341, %v2502
        %v2535 = vsel %vm2470, %v2346, %v2503
        %v2536 = vsel %vm2471, %v2351, %v2504
        %v2537 = vsel %vm2472, %v2356, %v2505
        %v2538 = vsel %vm2473, %v2361, %v2506
        %v2539 = vsel %vm2474, %v2366, %v2507
        %v2540 = vsel %vm2475, %v2371, %v2508
        %v2541 = vsel %vm2476, %v2376, %v2509
        %v2542 = vsel %vm2477, %v2381, %v2510
        %v2543 = vsel %vm2478, %v2386, %v2511
        %v2544 = vsel %vm2479, %v2391, %v2512
        %v2545 = vsel %vm2480, %v2396, %v2513
        %v2546 = vsel %vm2481, %v2401, %v2514
        %v2547 = vsel %vm2482, %v2406, %v2515
        %v2548 = vsel %vm2483, %v2411, %v2516
        %v2549 = vsel %vm2484, %v2416, %v2517
        %v2550 = vsel %vm2485, %v2421, %v2518
        %v2551 = vsel %vm2486, %v2426, %v2519
        %v2552 = vsel %vm2487, %v2431, %v2520
        %v2553 = vsel %vm2488, %v2436, %v2521
        %v2554 = vsel %vm2489, %v2441, %v2522
        %v2555 = vsel %vm2490, %v2446, %v2523
        %v2556 = vsel %vm2491, %v2451, %v2524
        %v2557 = vsel %vm2492, %v2456, %v2525
        %2558 = vst.msk [vmem:[%s261 + $0x1] sm:$0xff] %vm252, %v2526
        %2559 = vst.msk [vmem:[%s261 + $0x9] sm:$0xff] %vm252, %v2527
        %2560 = vst.msk [vmem:[%s261 + $0x19] sm:$0xff] %vm252, %v2528
        %2561 = vst.msk [vmem:[%s261 + $0x21] sm:$0xff] %vm252, %v2529
        %2562 = vst.msk [vmem:[%s261 + $0x31] sm:$0xff] %vm252, %v2530
        %2563 = vst.msk [vmem:[%s261 + $0x39] sm:$0xff] %vm252, %v2531
        %2564 = vst.msk [vmem:[%s261 + $0x49] sm:$0xff] %vm252, %v2532
        %2565 = vst.msk [vmem:[%s261 + $0x51] sm:$0xff] %vm252, %v2533
        %2566 = vst.msk [vmem:[%s261 + $0x61] sm:$0xff] %vm252, %v2534
        %2567 = vst.msk [vmem:[%s261 + $0x69] sm:$0xff] %vm252, %v2535
        %2568 = vst.msk [vmem:[%s261 + $0x79] sm:$0xff] %vm252, %v2536
        %2569 = vst.msk [vmem:[%s261 + $0x81] sm:$0xff] %vm252, %v2537
        %2570 = vst.msk [vmem:[%s261 + $0x91] sm:$0xff] %vm252, %v2538
        %2571 = vst.msk [vmem:[%s261 + $0x99] sm:$0xff] %vm252, %v2539
        %2572 = vst.msk [vmem:[%s261 + $0xa9] sm:$0xff] %vm252, %v2540
        %2573 = vst.msk [vmem:[%s261 + $0xb1] sm:$0xff] %vm252, %v2541
        %2574 = vst.msk [vmem:[%s261 + $0xc1] sm:$0xff] %vm252, %v2542
        %2575 = vst.msk [vmem:[%s261 + $0xc9] sm:$0xff] %vm252, %v2543
        %2576 = vst.msk [vmem:[%s261 + $0xd9] sm:$0xff] %vm252, %v2544
        %2577 = vst.msk [vmem:[%s261 + $0xe1] sm:$0xff] %vm252, %v2545
        %2578 = vst.msk [vmem:[%s261 + $0xf1] sm:$0xff] %vm252, %v2546
        %2579 = vst.msk [vmem:[%s261 + $0xf9] sm:$0xff] %vm252, %v2547
        %2580 = vst.msk [vmem:[%s261 + $0x109] sm:$0xff] %vm252, %v2548
        %2581 = vst.msk [vmem:[%s261 + $0x111] sm:$0xff] %vm252, %v2549
        %2582 = vst.msk [vmem:[%s261 + $0x121] sm:$0xff] %vm252, %v2550
        %2583 = vst.msk [vmem:[%s261 + $0x129] sm:$0xff] %vm252, %v2551
        %2584 = vst.msk [vmem:[%s261 + $0x139] sm:$0xff] %vm252, %v2552
        %2585 = vst.msk [vmem:[%s261 + $0x141] sm:$0xff] %vm252, %v2553
        %2586 = vst.msk [vmem:[%s261 + $0x151] sm:$0xff] %vm252, %v2554
        %2587 = vst.msk [vmem:[%s261 + $0x159] sm:$0xff] %vm252, %v2555
        %2588 = vst.msk [vmem:[%s261 + $0x169] sm:$0xff] %vm252, %v2556
        %2589 = vst.msk [vmem:[%s261 + $0x171] sm:$0xff] %vm252, %v2557
        %v2590 = vld [vmem:[#allocation2] sm:$0xff]
        %v2591 = vld [vmem:[#allocation2 + $0x8] sm:$0xff]
        %v2592 = vld [vmem:[#allocation2 + $0x18] sm:$0xff]
        %v2593 = vld [vmem:[#allocation2 + $0x20] sm:$0xff]
        %v2594 = vld [vmem:[#allocation2 + $0x30] sm:$0xff]
        %v2595 = vld [vmem:[#allocation2 + $0x38] sm:$0xff]
        %v2596 = vld [vmem:[#allocation2 + $0x48] sm:$0xff]
        %v2597 = vld [vmem:[#allocation2 + $0x50] sm:$0xff]
        %v2598 = vld [vmem:[#allocation2 + $0x60] sm:$0xff]
        %v2599 = vld [vmem:[#allocation2 + $0x68] sm:$0xff]
        %v2600 = vld [vmem:[#allocation2 + $0x78] sm:$0xff]
        %v2601 = vld [vmem:[#allocation2 + $0x80] sm:$0xff]
        %v2602 = vld [vmem:[#allocation2 + $0x90] sm:$0xff]
        %v2603 = vld [vmem:[#allocation2 + $0x98] sm:$0xff]
        %v2604 = vld [vmem:[#allocation2 + $0xa8] sm:$0xff]
        %v2605 = vld [vmem:[#allocation2 + $0xb0] sm:$0xff]
        %v2606 = vld [vmem:[#allocation2 + $0xc0] sm:$0xff]
        %v2607 = vld [vmem:[#allocation2 + $0xc8] sm:$0xff]
        %v2608 = vld [vmem:[#allocation2 + $0xd8] sm:$0xff]
        %v2609 = vld [vmem:[#allocation2 + $0xe0] sm:$0xff]
        %v2610 = vld [vmem:[#allocation2 + $0xf0] sm:$0xff]
        %v2611 = vld [vmem:[#allocation2 + $0xf8] sm:$0xff]
        %v2612 = vld [vmem:[#allocation2 + $0x108] sm:$0xff]
        %v2613 = vld [vmem:[#allocation2 + $0x110] sm:$0xff]
        %v2614 = vld [vmem:[#allocation2 + $0x120] sm:$0xff]
        %v2615 = vld [vmem:[#allocation2 + $0x128] sm:$0xff]
        %v2616 = vld [vmem:[#allocation2 + $0x138] sm:$0xff]
        %v2617 = vld [vmem:[#allocation2 + $0x140] sm:$0xff]
        %v2618 = vld [vmem:[#allocation2 + $0x150] sm:$0xff]
        %v2619 = vld [vmem:[#allocation2 + $0x158] sm:$0xff]
        %v2620 = vld [vmem:[#allocation2 + $0x168] sm:$0xff]
        %v2621 = vld [vmem:[#allocation2 + $0x170] sm:$0xff]
        %2622 = vst.msk [vmem:[#allocation3] sm:$0xff] %vm252, %v2590
        %2623 = vst.msk [vmem:[#allocation3 + $0x28] sm:$0xff] %vm252, %v2591
        %2624 = vst.msk [vmem:[#allocation3 + $0x50] sm:$0xff] %vm252, %v2592
        %2625 = vst.msk [vmem:[#allocation3 + $0x78] sm:$0xff] %vm252, %v2593
        %2626 = vst.msk [vmem:[#allocation3 + $0xa0] sm:$0xff] %vm252, %v2594
        %2627 = vst.msk [vmem:[#allocation3 + $0xc8] sm:$0xff] %vm252, %v2595
        %2628 = vst.msk [vmem:[#allocation3 + $0xf0] sm:$0xff] %vm252, %v2596
        %2629 = vst.msk [vmem:[#allocation3 + $0x118] sm:$0xff] %vm252, %v2597
        %2630 = vst.msk [vmem:[#allocation3 + $0x140] sm:$0xff] %vm252, %v2598
        %2631 = vst.msk [vmem:[#allocation3 + $0x168] sm:$0xff] %vm252, %v2599
        %2632 = vst.msk [vmem:[#allocation3 + $0x190] sm:$0xff] %vm252, %v2600
        %2633 = vst.msk [vmem:[#allocation3 + $0x1b8] sm:$0xff] %vm252, %v2601
        %2634 = vst.msk [vmem:[#allocation3 + $0x1e0] sm:$0xff] %vm252, %v2602
        %2635 = vst.msk [vmem:[#allocation3 + $0x208] sm:$0xff] %vm252, %v2603
        %2636 = vst.msk [vmem:[#allocation3 + $0x230] sm:$0xff] %vm252, %v2604
        %2637 = vst.msk [vmem:[#allocation3 + $0x258] sm:$0xff] %vm252, %v2605
        %2638 = vst.msk [vmem:[#allocation3 + $0x280] sm:$0xff] %vm252, %v2606
        %2639 = vst.msk [vmem:[#allocation3 + $0x2a8] sm:$0xff] %vm252, %v2607
        %2640 = vst.msk [vmem:[#allocation3 + $0x2d0] sm:$0xff] %vm252, %v2608
        %2641 = vst.msk [vmem:[#allocation3 + $0x2f8] sm:$0xff] %vm252, %v2609
        %2642 = vst.msk [vmem:[#allocation3 + $0x320] sm:$0xff] %vm252, %v2610
        %2643 = vst.msk [vmem:[#allocation3 + $0x348] sm:$0xff] %vm252, %v2611
        %2644 = vst.msk [vmem:[#allocation3 + $0x370] sm:$0xff] %vm252, %v2612
        %2645 = vst.msk [vmem:[#allocation3 + $0x398] sm:$0xff] %vm252, %v2613
        %2646 = vst.msk [vmem:[#allocation3 + $0x3c0] sm:$0xff] %vm252, %v2614
        %2647 = vst.msk [vmem:[#allocation3 + $0x3e8] sm:$0xff] %vm252, %v2615
        %2648 = vst.msk [vmem:[#allocation3 + $0x410] sm:$0xff] %vm252, %v2616
        %2649 = vst.msk [vmem:[#allocation3 + $0x438] sm:$0xff] %vm252, %v2617
        %2650 = vst.msk [vmem:[#allocation3 + $0x460] sm:$0xff] %vm252, %v2618
        %2651 = vst.msk [vmem:[#allocation3 + $0x488] sm:$0xff] %vm252, %v2619
        %2652 = vst.msk [vmem:[#allocation3 + $0x4b0] sm:$0xff] %vm252, %v2620
        %2653 = vst.msk [vmem:[#allocation3 + $0x4d8] sm:$0xff] %vm252, %v2621
        %v2654 = vld [vmem:[#allocation2 + $0x1] sm:$0xff]
        %v2655 = vld [vmem:[#allocation2 + $0x9] sm:$0xff]
        %v2656 = vld [vmem:[#allocation2 + $0x19] sm:$0xff]
        %v2657 = vld [vmem:[#allocation2 + $0x21] sm:$0xff]
        %v2658 = vld [vmem:[#allocation2 + $0x31] sm:$0xff]
        %v2659 = vld [vmem:[#allocation2 + $0x39] sm:$0xff]
        %v2660 = vld [vmem:[#allocation2 + $0x49] sm:$0xff]
        %v2661 = vld [vmem:[#allocation2 + $0x51] sm:$0xff]
        %v2662 = vld [vmem:[#allocation2 + $0x61] sm:$0xff]
        %v2663 = vld [vmem:[#allocation2 + $0x69] sm:$0xff]
        %v2664 = vld [vmem:[#allocation2 + $0x79] sm:$0xff]
        %v2665 = vld [vmem:[#allocation2 + $0x81] sm:$0xff]
        %v2666 = vld [vmem:[#allocation2 + $0x91] sm:$0xff]
        %v2667 = vld [vmem:[#allocation2 + $0x99] sm:$0xff]
        %v2668 = vld [vmem:[#allocation2 + $0xa9] sm:$0xff]
        %v2669 = vld [vmem:[#allocation2 + $0xb1] sm:$0xff]
        %v2670 = vld [vmem:[#allocation2 + $0xc1] sm:$0xff]
        %v2671 = vld [vmem:[#allocation2 + $0xc9] sm:$0xff]
        %v2672 = vld [vmem:[#allocation2 + $0xd9] sm:$0xff]
        %v2673 = vld [vmem:[#allocation2 + $0xe1] sm:$0xff]
        %v2674 = vld [vmem:[#allocation2 + $0xf1] sm:$0xff]
        %v2675 = vld [vmem:[#allocation2 + $0xf9] sm:$0xff]
        %v2676 = vld [vmem:[#allocation2 + $0x109] sm:$0xff]
        %v2677 = vld [vmem:[#allocation2 + $0x111] sm:$0xff]
        %v2678 = vld [vmem:[#allocation2 + $0x121] sm:$0xff]
        %v2679 = vld [vmem:[#allocation2 + $0x129] sm:$0xff]
        %v2680 = vld [vmem:[#allocation2 + $0x139] sm:$0xff]
        %v2681 = vld [vmem:[#allocation2 + $0x141] sm:$0xff]
        %v2682 = vld [vmem:[#allocation2 + $0x151] sm:$0xff]
        %v2683 = vld [vmem:[#allocation2 + $0x159] sm:$0xff]
        %v2684 = vld [vmem:[#allocation2 + $0x169] sm:$0xff]
        %v2685 = vld [vmem:[#allocation2 + $0x171] sm:$0xff]
        %2718 = vrot.lane.b32.xlu0 %v2654, 64
        %v2719 = vpop.permute.xlu0 %2718
        %2720 = vrot.lane.b32.xlu0 %v2655, 64
        %v2721 = vpop.permute.xlu0 %2720
        %2722 = vrot.lane.b32.xlu0 %v2656, 64
        %v2723 = vpop.permute.xlu0 %2722
        %2724 = vrot.lane.b32.xlu0 %v2657, 64
        %v2725 = vpop.permute.xlu0 %2724
        %2726 = vrot.lane.b32.xlu0 %v2658, 64
        %v2727 = vpop.permute.xlu0 %2726
        %2728 = vrot.lane.b32.xlu0 %v2659, 64
        %v2729 = vpop.permute.xlu0 %2728
        %2730 = vrot.lane.b32.xlu0 %v2660, 64
        %v2731 = vpop.permute.xlu0 %2730
        %2732 = vrot.lane.b32.xlu0 %v2661, 64
        %v2733 = vpop.permute.xlu0 %2732
        %2734 = vrot.lane.b32.xlu0 %v2662, 64
        %v2735 = vpop.permute.xlu0 %2734
        %2736 = vrot.lane.b32.xlu0 %v2663, 64
        %v2737 = vpop.permute.xlu0 %2736
        %2738 = vrot.lane.b32.xlu0 %v2664, 64
        %v2739 = vpop.permute.xlu0 %2738
        %2740 = vrot.lane.b32.xlu0 %v2665, 64
        %v2741 = vpop.permute.xlu0 %2740
        %2742 = vrot.lane.b32.xlu0 %v2666, 64
        %v2743 = vpop.permute.xlu0 %2742
        %2744 = vrot.lane.b32.xlu0 %v2667, 64
        %v2745 = vpop.permute.xlu0 %2744
        %2746 = vrot.lane.b32.xlu0 %v2668, 64
        %v2747 = vpop.permute.xlu0 %2746
        %2748 = vrot.lane.b32.xlu0 %v2669, 64
        %v2749 = vpop.permute.xlu0 %2748
        %2750 = vrot.lane.b32.xlu0 %v2670, 64
        %v2751 = vpop.permute.xlu0 %2750
        %2752 = vrot.lane.b32.xlu0 %v2671, 64
        %v2753 = vpop.permute.xlu0 %2752
        %2754 = vrot.lane.b32.xlu0 %v2672, 64
        %v2755 = vpop.permute.xlu0 %2754
        %2756 = vrot.lane.b32.xlu0 %v2673, 64
        %v2757 = vpop.permute.xlu0 %2756
        %2758 = vrot.lane.b32.xlu0 %v2674, 64
        %v2759 = vpop.permute.xlu0 %2758
        %2760 = vrot.lane.b32.xlu0 %v2675, 64
        %v2761 = vpop.permute.xlu0 %2760
        %2762 = vrot.lane.b32.xlu0 %v2676, 64
        %v2763 = vpop.permute.xlu0 %2762
        %2764 = vrot.lane.b32.xlu0 %v2677, 64
        %v2765 = vpop.permute.xlu0 %2764
        %2766 = vrot.lane.b32.xlu0 %v2678, 64
        %v2767 = vpop.permute.xlu0 %2766
        %2768 = vrot.lane.b32.xlu0 %v2679, 64
        %v2769 = vpop.permute.xlu0 %2768
        %2770 = vrot.lane.b32.xlu0 %v2680, 64
        %v2771 = vpop.permute.xlu0 %2770
        %2772 = vrot.lane.b32.xlu0 %v2681, 64
        %v2773 = vpop.permute.xlu0 %2772
        %2774 = vrot.lane.b32.xlu0 %v2682, 64
        %v2775 = vpop.permute.xlu0 %2774
        %2776 = vrot.lane.b32.xlu0 %v2683, 64
        %v2777 = vpop.permute.xlu0 %2776
        %2778 = vrot.lane.b32.xlu0 %v2684, 64
        %v2779 = vpop.permute.xlu0 %2778
        %2780 = vrot.lane.b32.xlu0 %v2685, 64
        %v2781 = vpop.permute.xlu0 %2780
        %2814 = vst.msk [vmem:[#allocation3] sm:$0xff] %vm583, %v2719
        %2815 = vst.msk [vmem:[#allocation3 + $0x28] sm:$0xff] %vm583, %v2721
        %2816 = vst.msk [vmem:[#allocation3 + $0x50] sm:$0xff] %vm583, %v2723
        %2817 = vst.msk [vmem:[#allocation3 + $0x78] sm:$0xff] %vm583, %v2725
        %2818 = vst.msk [vmem:[#allocation3 + $0xa0] sm:$0xff] %vm583, %v2727
        %2819 = vst.msk [vmem:[#allocation3 + $0xc8] sm:$0xff] %vm583, %v2729
        %2820 = vst.msk [vmem:[#allocation3 + $0xf0] sm:$0xff] %vm583, %v2731
        %2821 = vst.msk [vmem:[#allocation3 + $0x118] sm:$0xff] %vm583, %v2733
        %2822 = vst.msk [vmem:[#allocation3 + $0x140] sm:$0xff] %vm583, %v2735
        %2823 = vst.msk [vmem:[#allocation3 + $0x168] sm:$0xff] %vm583, %v2737
        %2824 = vst.msk [vmem:[#allocation3 + $0x190] sm:$0xff] %vm583, %v2739
        %2825 = vst.msk [vmem:[#allocation3 + $0x1b8] sm:$0xff] %vm583, %v2741
        %2826 = vst.msk [vmem:[#allocation3 + $0x1e0] sm:$0xff] %vm583, %v2743
        %2827 = vst.msk [vmem:[#allocation3 + $0x208] sm:$0xff] %vm583, %v2745
        %2828 = vst.msk [vmem:[#allocation3 + $0x230] sm:$0xff] %vm583, %v2747
        %2829 = vst.msk [vmem:[#allocation3 + $0x258] sm:$0xff] %vm583, %v2749
        %2830 = vst.msk [vmem:[#allocation3 + $0x280] sm:$0xff] %vm583, %v2751
        %2831 = vst.msk [vmem:[#allocation3 + $0x2a8] sm:$0xff] %vm583, %v2753
        %2832 = vst.msk [vmem:[#allocation3 + $0x2d0] sm:$0xff] %vm583, %v2755
        %2833 = vst.msk [vmem:[#allocation3 + $0x2f8] sm:$0xff] %vm583, %v2757
        %2834 = vst.msk [vmem:[#allocation3 + $0x320] sm:$0xff] %vm583, %v2759
        %2835 = vst.msk [vmem:[#allocation3 + $0x348] sm:$0xff] %vm583, %v2761
        %2836 = vst.msk [vmem:[#allocation3 + $0x370] sm:$0xff] %vm583, %v2763
        %2837 = vst.msk [vmem:[#allocation3 + $0x398] sm:$0xff] %vm583, %v2765
        %2838 = vst.msk [vmem:[#allocation3 + $0x3c0] sm:$0xff] %vm583, %v2767
        %2839 = vst.msk [vmem:[#allocation3 + $0x3e8] sm:$0xff] %vm583, %v2769
        %2840 = vst.msk [vmem:[#allocation3 + $0x410] sm:$0xff] %vm583, %v2771
        %2841 = vst.msk [vmem:[#allocation3 + $0x438] sm:$0xff] %vm583, %v2773
        %2842 = vst.msk [vmem:[#allocation3 + $0x460] sm:$0xff] %vm583, %v2775
        %2843 = vst.msk [vmem:[#allocation3 + $0x488] sm:$0xff] %vm583, %v2777
        %2844 = vst.msk [vmem:[#allocation3 + $0x4b0] sm:$0xff] %vm583, %v2779
        %2845 = vst.msk [vmem:[#allocation3 + $0x4d8] sm:$0xff] %vm583, %v2781
        %v2846 = vld [vmem:[#allocation2 + $0x2] sm:$0xff]
        %v2847 = vld [vmem:[#allocation2 + $0xa] sm:$0xff]
        %v2848 = vld [vmem:[#allocation2 + $0x1a] sm:$0xff]
        %v2849 = vld [vmem:[#allocation2 + $0x22] sm:$0xff]
        %v2850 = vld [vmem:[#allocation2 + $0x32] sm:$0xff]
        %v2851 = vld [vmem:[#allocation2 + $0x3a] sm:$0xff]
        %v2852 = vld [vmem:[#allocation2 + $0x4a] sm:$0xff]
        %v2853 = vld [vmem:[#allocation2 + $0x52] sm:$0xff]
        %v2854 = vld [vmem:[#allocation2 + $0x62] sm:$0xff]
        %v2855 = vld [vmem:[#allocation2 + $0x6a] sm:$0xff]
        %v2856 = vld [vmem:[#allocation2 + $0x7a] sm:$0xff]
        %v2857 = vld [vmem:[#allocation2 + $0x82] sm:$0xff]
        %v2858 = vld [vmem:[#allocation2 + $0x92] sm:$0xff]
        %v2859 = vld [vmem:[#allocation2 + $0x9a] sm:$0xff]
        %v2860 = vld [vmem:[#allocation2 + $0xaa] sm:$0xff]
        %v2861 = vld [vmem:[#allocation2 + $0xb2] sm:$0xff]
        %v2862 = vld [vmem:[#allocation2 + $0xc2] sm:$0xff]
        %v2863 = vld [vmem:[#allocation2 + $0xca] sm:$0xff]
        %v2864 = vld [vmem:[#allocation2 + $0xda] sm:$0xff]
        %v2865 = vld [vmem:[#allocation2 + $0xe2] sm:$0xff]
        %v2866 = vld [vmem:[#allocation2 + $0xf2] sm:$0xff]
        %v2867 = vld [vmem:[#allocation2 + $0xfa] sm:$0xff]
        %v2868 = vld [vmem:[#allocation2 + $0x10a] sm:$0xff]
        %v2869 = vld [vmem:[#allocation2 + $0x112] sm:$0xff]
        %v2870 = vld [vmem:[#allocation2 + $0x122] sm:$0xff]
        %v2871 = vld [vmem:[#allocation2 + $0x12a] sm:$0xff]
        %v2872 = vld [vmem:[#allocation2 + $0x13a] sm:$0xff]
        %v2873 = vld [vmem:[#allocation2 + $0x142] sm:$0xff]
        %v2874 = vld [vmem:[#allocation2 + $0x152] sm:$0xff]
        %v2875 = vld [vmem:[#allocation2 + $0x15a] sm:$0xff]
        %v2876 = vld [vmem:[#allocation2 + $0x16a] sm:$0xff]
        %v2877 = vld [vmem:[#allocation2 + $0x172] sm:$0xff]
        %2878 = vst.msk [vmem:[#allocation3 + $0x8] sm:$0xff] %vm252, %v2846
        %2879 = vst.msk [vmem:[#allocation3 + $0x30] sm:$0xff] %vm252, %v2847
        %2880 = vst.msk [vmem:[#allocation3 + $0x58] sm:$0xff] %vm252, %v2848
        %2881 = vst.msk [vmem:[#allocation3 + $0x80] sm:$0xff] %vm252, %v2849
        %2882 = vst.msk [vmem:[#allocation3 + $0xa8] sm:$0xff] %vm252, %v2850
        %2883 = vst.msk [vmem:[#allocation3 + $0xd0] sm:$0xff] %vm252, %v2851
        %2884 = vst.msk [vmem:[#allocation3 + $0xf8] sm:$0xff] %vm252, %v2852
        %2885 = vst.msk [vmem:[#allocation3 + $0x120] sm:$0xff] %vm252, %v2853
        %2886 = vst.msk [vmem:[#allocation3 + $0x148] sm:$0xff] %vm252, %v2854
        %2887 = vst.msk [vmem:[#allocation3 + $0x170] sm:$0xff] %vm252, %v2855
        %2888 = vst.msk [vmem:[#allocation3 + $0x198] sm:$0xff] %vm252, %v2856
        %2889 = vst.msk [vmem:[#allocation3 + $0x1c0] sm:$0xff] %vm252, %v2857
        %2890 = vst.msk [vmem:[#allocation3 + $0x1e8] sm:$0xff] %vm252, %v2858
        %2891 = vst.msk [vmem:[#allocation3 + $0x210] sm:$0xff] %vm252, %v2859
        %2892 = vst.msk [vmem:[#allocation3 + $0x238] sm:$0xff] %vm252, %v2860
        %2893 = vst.msk [vmem:[#allocation3 + $0x260] sm:$0xff] %vm252, %v2861
        %2894 = vst.msk [vmem:[#allocation3 + $0x288] sm:$0xff] %vm252, %v2862
        %2895 = vst.msk [vmem:[#allocation3 + $0x2b0] sm:$0xff] %vm252, %v2863
        %2896 = vst.msk [vmem:[#allocation3 + $0x2d8] sm:$0xff] %vm252, %v2864
        %2897 = vst.msk [vmem:[#allocation3 + $0x300] sm:$0xff] %vm252, %v2865
        %2898 = vst.msk [vmem:[#allocation3 + $0x328] sm:$0xff] %vm252, %v2866
        %2899 = vst.msk [vmem:[#allocation3 + $0x350] sm:$0xff] %vm252, %v2867
        %2900 = vst.msk [vmem:[#allocation3 + $0x378] sm:$0xff] %vm252, %v2868
        %2901 = vst.msk [vmem:[#allocation3 + $0x3a0] sm:$0xff] %vm252, %v2869
        %2902 = vst.msk [vmem:[#allocation3 + $0x3c8] sm:$0xff] %vm252, %v2870
        %2903 = vst.msk [vmem:[#allocation3 + $0x3f0] sm:$0xff] %vm252, %v2871
        %2904 = vst.msk [vmem:[#allocation3 + $0x418] sm:$0xff] %vm252, %v2872
        %2905 = vst.msk [vmem:[#allocation3 + $0x440] sm:$0xff] %vm252, %v2873
        %2906 = vst.msk [vmem:[#allocation3 + $0x468] sm:$0xff] %vm252, %v2874
        %2907 = vst.msk [vmem:[#allocation3 + $0x490] sm:$0xff] %vm252, %v2875
        %2908 = vst.msk [vmem:[#allocation3 + $0x4b8] sm:$0xff] %vm252, %v2876
        %2909 = vst.msk [vmem:[#allocation3 + $0x4e0] sm:$0xff] %vm252, %v2877
        %v2910 = vld [vmem:[%s261] sm:$0xff]
        %v2911 = vld [vmem:[%s261 + $0x8] sm:$0xff]
        %v2912 = vld [vmem:[%s261 + $0x18] sm:$0xff]
        %v2913 = vld [vmem:[%s261 + $0x20] sm:$0xff]
        %v2914 = vld [vmem:[%s261 + $0x30] sm:$0xff]
        %v2915 = vld [vmem:[%s261 + $0x38] sm:$0xff]
        %v2916 = vld [vmem:[%s261 + $0x48] sm:$0xff]
        %v2917 = vld [vmem:[%s261 + $0x50] sm:$0xff]
        %v2918 = vld [vmem:[%s261 + $0x60] sm:$0xff]
        %v2919 = vld [vmem:[%s261 + $0x68] sm:$0xff]
        %v2920 = vld [vmem:[%s261 + $0x78] sm:$0xff]
        %v2921 = vld [vmem:[%s261 + $0x80] sm:$0xff]
        %v2922 = vld [vmem:[%s261 + $0x90] sm:$0xff]
        %v2923 = vld [vmem:[%s261 + $0x98] sm:$0xff]
        %v2924 = vld [vmem:[%s261 + $0xa8] sm:$0xff]
        %v2925 = vld [vmem:[%s261 + $0xb0] sm:$0xff]
        %v2926 = vld [vmem:[%s261 + $0xc0] sm:$0xff]
        %v2927 = vld [vmem:[%s261 + $0xc8] sm:$0xff]
        %v2928 = vld [vmem:[%s261 + $0xd8] sm:$0xff]
        %v2929 = vld [vmem:[%s261 + $0xe0] sm:$0xff]
        %v2930 = vld [vmem:[%s261 + $0xf0] sm:$0xff]
        %v2931 = vld [vmem:[%s261 + $0xf8] sm:$0xff]
        %v2932 = vld [vmem:[%s261 + $0x108] sm:$0xff]
        %v2933 = vld [vmem:[%s261 + $0x110] sm:$0xff]
        %v2934 = vld [vmem:[%s261 + $0x120] sm:$0xff]
        %v2935 = vld [vmem:[%s261 + $0x128] sm:$0xff]
        %v2936 = vld [vmem:[%s261 + $0x138] sm:$0xff]
        %v2937 = vld [vmem:[%s261 + $0x140] sm:$0xff]
        %v2938 = vld [vmem:[%s261 + $0x150] sm:$0xff]
        %v2939 = vld [vmem:[%s261 + $0x158] sm:$0xff]
        %v2940 = vld [vmem:[%s261 + $0x168] sm:$0xff]
        %v2941 = vld [vmem:[%s261 + $0x170] sm:$0xff]
        %2974 = vrot.lane.b32.xlu0 %v2910, 64
        %v2975 = vpop.permute.xlu0 %2974
        %2976 = vrot.lane.b32.xlu0 %v2911, 64
        %v2977 = vpop.permute.xlu0 %2976
        %2978 = vrot.lane.b32.xlu0 %v2912, 64
        %v2979 = vpop.permute.xlu0 %2978
        %2980 = vrot.lane.b32.xlu0 %v2913, 64
        %v2981 = vpop.permute.xlu0 %2980
        %2982 = vrot.lane.b32.xlu0 %v2914, 64
        %v2983 = vpop.permute.xlu0 %2982
        %2984 = vrot.lane.b32.xlu0 %v2915, 64
        %v2985 = vpop.permute.xlu0 %2984
        %2986 = vrot.lane.b32.xlu0 %v2916, 64
        %v2987 = vpop.permute.xlu0 %2986
        %2988 = vrot.lane.b32.xlu0 %v2917, 64
        %v2989 = vpop.permute.xlu0 %2988
        %2990 = vrot.lane.b32.xlu0 %v2918, 64
        %v2991 = vpop.permute.xlu0 %2990
        %2992 = vrot.lane.b32.xlu0 %v2919, 64
        %v2993 = vpop.permute.xlu0 %2992
        %2994 = vrot.lane.b32.xlu0 %v2920, 64
        %v2995 = vpop.permute.xlu0 %2994
        %2996 = vrot.lane.b32.xlu0 %v2921, 64
        %v2997 = vpop.permute.xlu0 %2996
        %2998 = vrot.lane.b32.xlu0 %v2922, 64
        %v2999 = vpop.permute.xlu0 %2998
        %3000 = vrot.lane.b32.xlu0 %v2923, 64
        %v3001 = vpop.permute.xlu0 %3000
        %3002 = vrot.lane.b32.xlu0 %v2924, 64
        %v3003 = vpop.permute.xlu0 %3002
        %3004 = vrot.lane.b32.xlu0 %v2925, 64
        %v3005 = vpop.permute.xlu0 %3004
        %3006 = vrot.lane.b32.xlu0 %v2926, 64
        %v3007 = vpop.permute.xlu0 %3006
        %3008 = vrot.lane.b32.xlu0 %v2927, 64
        %v3009 = vpop.permute.xlu0 %3008
        %3010 = vrot.lane.b32.xlu0 %v2928, 64
        %v3011 = vpop.permute.xlu0 %3010
        %3012 = vrot.lane.b32.xlu0 %v2929, 64
        %v3013 = vpop.permute.xlu0 %3012
        %3014 = vrot.lane.b32.xlu0 %v2930, 64
        %v3015 = vpop.permute.xlu0 %3014
        %3016 = vrot.lane.b32.xlu0 %v2931, 64
        %v3017 = vpop.permute.xlu0 %3016
        %3018 = vrot.lane.b32.xlu0 %v2932, 64
        %v3019 = vpop.permute.xlu0 %3018
        %3020 = vrot.lane.b32.xlu0 %v2933, 64
        %v3021 = vpop.permute.xlu0 %3020
        %3022 = vrot.lane.b32.xlu0 %v2934, 64
        %v3023 = vpop.permute.xlu0 %3022
        %3024 = vrot.lane.b32.xlu0 %v2935, 64
        %v3025 = vpop.permute.xlu0 %3024
        %3026 = vrot.lane.b32.xlu0 %v2936, 64
        %v3027 = vpop.permute.xlu0 %3026
        %3028 = vrot.lane.b32.xlu0 %v2937, 64
        %v3029 = vpop.permute.xlu0 %3028
        %3030 = vrot.lane.b32.xlu0 %v2938, 64
        %v3031 = vpop.permute.xlu0 %3030
        %3032 = vrot.lane.b32.xlu0 %v2939, 64
        %v3033 = vpop.permute.xlu0 %3032
        %3034 = vrot.lane.b32.xlu0 %v2940, 64
        %v3035 = vpop.permute.xlu0 %3034
        %3036 = vrot.lane.b32.xlu0 %v2941, 64
        %v3037 = vpop.permute.xlu0 %3036
        %3070 = vst.msk [vmem:[#allocation3 + $0x8] sm:$0xff] %vm583, %v2975
        %3071 = vst.msk [vmem:[#allocation3 + $0x30] sm:$0xff] %vm583, %v2977
        %3072 = vst.msk [vmem:[#allocation3 + $0x58] sm:$0xff] %vm583, %v2979
        %3073 = vst.msk [vmem:[#allocation3 + $0x80] sm:$0xff] %vm583, %v2981
        %3074 = vst.msk [vmem:[#allocation3 + $0xa8] sm:$0xff] %vm583, %v2983
        %3075 = vst.msk [vmem:[#allocation3 + $0xd0] sm:$0xff] %vm583, %v2985
        %3076 = vst.msk [vmem:[#allocation3 + $0xf8] sm:$0xff] %vm583, %v2987
        %3077 = vst.msk [vmem:[#allocation3 + $0x120] sm:$0xff] %vm583, %v2989
        %3078 = vst.msk [vmem:[#allocation3 + $0x148] sm:$0xff] %vm583, %v2991
        %3079 = vst.msk [vmem:[#allocation3 + $0x170] sm:$0xff] %vm583, %v2993
        %3080 = vst.msk [vmem:[#allocation3 + $0x198] sm:$0xff] %vm583, %v2995
        %3081 = vst.msk [vmem:[#allocation3 + $0x1c0] sm:$0xff] %vm583, %v2997
        %3082 = vst.msk [vmem:[#allocation3 + $0x1e8] sm:$0xff] %vm583, %v2999
        %3083 = vst.msk [vmem:[#allocation3 + $0x210] sm:$0xff] %vm583, %v3001
        %3084 = vst.msk [vmem:[#allocation3 + $0x238] sm:$0xff] %vm583, %v3003
        %3085 = vst.msk [vmem:[#allocation3 + $0x260] sm:$0xff] %vm583, %v3005
        %3086 = vst.msk [vmem:[#allocation3 + $0x288] sm:$0xff] %vm583, %v3007
        %3087 = vst.msk [vmem:[#allocation3 + $0x2b0] sm:$0xff] %vm583, %v3009
        %3088 = vst.msk [vmem:[#allocation3 + $0x2d8] sm:$0xff] %vm583, %v3011
        %3089 = vst.msk [vmem:[#allocation3 + $0x300] sm:$0xff] %vm583, %v3013
        %3090 = vst.msk [vmem:[#allocation3 + $0x328] sm:$0xff] %vm583, %v3015
        %3091 = vst.msk [vmem:[#allocation3 + $0x350] sm:$0xff] %vm583, %v3017
        %3092 = vst.msk [vmem:[#allocation3 + $0x378] sm:$0xff] %vm583, %v3019
        %3093 = vst.msk [vmem:[#allocation3 + $0x3a0] sm:$0xff] %vm583, %v3021
        %3094 = vst.msk [vmem:[#allocation3 + $0x3c8] sm:$0xff] %vm583, %v3023
        %3095 = vst.msk [vmem:[#allocation3 + $0x3f0] sm:$0xff] %vm583, %v3025
        %3096 = vst.msk [vmem:[#allocation3 + $0x418] sm:$0xff] %vm583, %v3027
        %3097 = vst.msk [vmem:[#allocation3 + $0x440] sm:$0xff] %vm583, %v3029
        %3098 = vst.msk [vmem:[#allocation3 + $0x468] sm:$0xff] %vm583, %v3031
        %3099 = vst.msk [vmem:[#allocation3 + $0x490] sm:$0xff] %vm583, %v3033
        %3100 = vst.msk [vmem:[#allocation3 + $0x4b8] sm:$0xff] %vm583, %v3035
        %3101 = vst.msk [vmem:[#allocation3 + $0x4e0] sm:$0xff] %vm583, %v3037
        %v3102 = vld [vmem:[%s261 + $0x1] sm:$0xff]
        %v3103 = vld [vmem:[%s261 + $0x9] sm:$0xff]
        %v3104 = vld [vmem:[%s261 + $0x19] sm:$0xff]
        %v3105 = vld [vmem:[%s261 + $0x21] sm:$0xff]
        %v3106 = vld [vmem:[%s261 + $0x31] sm:$0xff]
        %v3107 = vld [vmem:[%s261 + $0x39] sm:$0xff]
        %v3108 = vld [vmem:[%s261 + $0x49] sm:$0xff]
        %v3109 = vld [vmem:[%s261 + $0x51] sm:$0xff]
        %v3110 = vld [vmem:[%s261 + $0x61] sm:$0xff]
        %v3111 = vld [vmem:[%s261 + $0x69] sm:$0xff]
        %v3112 = vld [vmem:[%s261 + $0x79] sm:$0xff]
        %v3113 = vld [vmem:[%s261 + $0x81] sm:$0xff]
        %v3114 = vld [vmem:[%s261 + $0x91] sm:$0xff]
        %v3115 = vld [vmem:[%s261 + $0x99] sm:$0xff]
        %v3116 = vld [vmem:[%s261 + $0xa9] sm:$0xff]
        %v3117 = vld [vmem:[%s261 + $0xb1] sm:$0xff]
        %v3118 = vld [vmem:[%s261 + $0xc1] sm:$0xff]
        %v3119 = vld [vmem:[%s261 + $0xc9] sm:$0xff]
        %v3120 = vld [vmem:[%s261 + $0xd9] sm:$0xff]
        %v3121 = vld [vmem:[%s261 + $0xe1] sm:$0xff]
        %v3122 = vld [vmem:[%s261 + $0xf1] sm:$0xff]
        %v3123 = vld [vmem:[%s261 + $0xf9] sm:$0xff]
        %v3124 = vld [vmem:[%s261 + $0x109] sm:$0xff]
        %v3125 = vld [vmem:[%s261 + $0x111] sm:$0xff]
        %v3126 = vld [vmem:[%s261 + $0x121] sm:$0xff]
        %v3127 = vld [vmem:[%s261 + $0x129] sm:$0xff]
        %v3128 = vld [vmem:[%s261 + $0x139] sm:$0xff]
        %v3129 = vld [vmem:[%s261 + $0x141] sm:$0xff]
        %v3130 = vld [vmem:[%s261 + $0x151] sm:$0xff]
        %v3131 = vld [vmem:[%s261 + $0x159] sm:$0xff]
        %v3132 = vld [vmem:[%s261 + $0x169] sm:$0xff]
        %v3133 = vld [vmem:[%s261 + $0x171] sm:$0xff]
        %3134 = vst.msk [vmem:[#allocation3 + $0x10] sm:$0xff] %vm252, %v3102
        %3135 = vst.msk [vmem:[#allocation3 + $0x38] sm:$0xff] %vm252, %v3103
        %3136 = vst.msk [vmem:[#allocation3 + $0x60] sm:$0xff] %vm252, %v3104
        %3137 = vst.msk [vmem:[#allocation3 + $0x88] sm:$0xff] %vm252, %v3105
        %3138 = vst.msk [vmem:[#allocation3 + $0xb0] sm:$0xff] %vm252, %v3106
        %3139 = vst.msk [vmem:[#allocation3 + $0xd8] sm:$0xff] %vm252, %v3107
        %3140 = vst.msk [vmem:[#allocation3 + $0x100] sm:$0xff] %vm252, %v3108
        %3141 = vst.msk [vmem:[#allocation3 + $0x128] sm:$0xff] %vm252, %v3109
        %3142 = vst.msk [vmem:[#allocation3 + $0x150] sm:$0xff] %vm252, %v3110
        %3143 = vst.msk [vmem:[#allocation3 + $0x178] sm:$0xff] %vm252, %v3111
        %3144 = vst.msk [vmem:[#allocation3 + $0x1a0] sm:$0xff] %vm252, %v3112
        %3145 = vst.msk [vmem:[#allocation3 + $0x1c8] sm:$0xff] %vm252, %v3113
        %3146 = vst.msk [vmem:[#allocation3 + $0x1f0] sm:$0xff] %vm252, %v3114
        %3147 = vst.msk [vmem:[#allocation3 + $0x218] sm:$0xff] %vm252, %v3115
        %3148 = vst.msk [vmem:[#allocation3 + $0x240] sm:$0xff] %vm252, %v3116
        %3149 = vst.msk [vmem:[#allocation3 + $0x268] sm:$0xff] %vm252, %v3117
        %3150 = vst.msk [vmem:[#allocation3 + $0x290] sm:$0xff] %vm252, %v3118
        %3151 = vst.msk [vmem:[#allocation3 + $0x2b8] sm:$0xff] %vm252, %v3119
        %3152 = vst.msk [vmem:[#allocation3 + $0x2e0] sm:$0xff] %vm252, %v3120
        %3153 = vst.msk [vmem:[#allocation3 + $0x308] sm:$0xff] %vm252, %v3121
        %3154 = vst.msk [vmem:[#allocation3 + $0x330] sm:$0xff] %vm252, %v3122
        %3155 = vst.msk [vmem:[#allocation3 + $0x358] sm:$0xff] %vm252, %v3123
        %3156 = vst.msk [vmem:[#allocation3 + $0x380] sm:$0xff] %vm252, %v3124
        %3157 = vst.msk [vmem:[#allocation3 + $0x3a8] sm:$0xff] %vm252, %v3125
        %3158 = vst.msk [vmem:[#allocation3 + $0x3d0] sm:$0xff] %vm252, %v3126
        %3159 = vst.msk [vmem:[#allocation3 + $0x3f8] sm:$0xff] %vm252, %v3127
        %3160 = vst.msk [vmem:[#allocation3 + $0x420] sm:$0xff] %vm252, %v3128
        %3161 = vst.msk [vmem:[#allocation3 + $0x448] sm:$0xff] %vm252, %v3129
        %3162 = vst.msk [vmem:[#allocation3 + $0x470] sm:$0xff] %vm252, %v3130
        %3163 = vst.msk [vmem:[#allocation3 + $0x498] sm:$0xff] %vm252, %v3131
        %3164 = vst.msk [vmem:[#allocation3 + $0x4c0] sm:$0xff] %vm252, %v3132
        %3165 = vst.msk [vmem:[#allocation3 + $0x4e8] sm:$0xff] %vm252, %v3133
        %v3166 = vld [vmem:[%s261 + $0x2] sm:$0xff]
        %v3167 = vld [vmem:[%s261 + $0xa] sm:$0xff]
        %v3168 = vld [vmem:[%s261 + $0x1a] sm:$0xff]
        %v3169 = vld [vmem:[%s261 + $0x22] sm:$0xff]
        %v3170 = vld [vmem:[%s261 + $0x32] sm:$0xff]
        %v3171 = vld [vmem:[%s261 + $0x3a] sm:$0xff]
        %v3172 = vld [vmem:[%s261 + $0x4a] sm:$0xff]
        %v3173 = vld [vmem:[%s261 + $0x52] sm:$0xff]
        %v3174 = vld [vmem:[%s261 + $0x62] sm:$0xff]
        %v3175 = vld [vmem:[%s261 + $0x6a] sm:$0xff]
        %v3176 = vld [vmem:[%s261 + $0x7a] sm:$0xff]
        %v3177 = vld [vmem:[%s261 + $0x82] sm:$0xff]
        %v3178 = vld [vmem:[%s261 + $0x92] sm:$0xff]
        %v3179 = vld [vmem:[%s261 + $0x9a] sm:$0xff]
        %v3180 = vld [vmem:[%s261 + $0xaa] sm:$0xff]
        %v3181 = vld [vmem:[%s261 + $0xb2] sm:$0xff]
        %v3182 = vld [vmem:[%s261 + $0xc2] sm:$0xff]
        %v3183 = vld [vmem:[%s261 + $0xca] sm:$0xff]
        %v3184 = vld [vmem:[%s261 + $0xda] sm:$0xff]
        %v3185 = vld [vmem:[%s261 + $0xe2] sm:$0xff]
        %v3186 = vld [vmem:[%s261 + $0xf2] sm:$0xff]
        %v3187 = vld [vmem:[%s261 + $0xfa] sm:$0xff]
        %v3188 = vld [vmem:[%s261 + $0x10a] sm:$0xff]
        %v3189 = vld [vmem:[%s261 + $0x112] sm:$0xff]
        %v3190 = vld [vmem:[%s261 + $0x122] sm:$0xff]
        %v3191 = vld [vmem:[%s261 + $0x12a] sm:$0xff]
        %v3192 = vld [vmem:[%s261 + $0x13a] sm:$0xff]
        %v3193 = vld [vmem:[%s261 + $0x142] sm:$0xff]
        %v3194 = vld [vmem:[%s261 + $0x152] sm:$0xff]
        %v3195 = vld [vmem:[%s261 + $0x15a] sm:$0xff]
        %v3196 = vld [vmem:[%s261 + $0x16a] sm:$0xff]
        %v3197 = vld [vmem:[%s261 + $0x172] sm:$0xff]
        %3230 = vrot.lane.b32.xlu0 %v3166, 64
        %v3231 = vpop.permute.xlu0 %3230
        %3232 = vrot.lane.b32.xlu0 %v3167, 64
        %v3233 = vpop.permute.xlu0 %3232
        %3234 = vrot.lane.b32.xlu0 %v3168, 64
        %v3235 = vpop.permute.xlu0 %3234
        %3236 = vrot.lane.b32.xlu0 %v3169, 64
        %v3237 = vpop.permute.xlu0 %3236
        %3238 = vrot.lane.b32.xlu0 %v3170, 64
        %v3239 = vpop.permute.xlu0 %3238
        %3240 = vrot.lane.b32.xlu0 %v3171, 64
        %v3241 = vpop.permute.xlu0 %3240
        %3242 = vrot.lane.b32.xlu0 %v3172, 64
        %v3243 = vpop.permute.xlu0 %3242
        %3244 = vrot.lane.b32.xlu0 %v3173, 64
        %v3245 = vpop.permute.xlu0 %3244
        %3246 = vrot.lane.b32.xlu0 %v3174, 64
        %v3247 = vpop.permute.xlu0 %3246
        %3248 = vrot.lane.b32.xlu0 %v3175, 64
        %v3249 = vpop.permute.xlu0 %3248
        %3250 = vrot.lane.b32.xlu0 %v3176, 64
        %v3251 = vpop.permute.xlu0 %3250
        %3252 = vrot.lane.b32.xlu0 %v3177, 64
        %v3253 = vpop.permute.xlu0 %3252
        %3254 = vrot.lane.b32.xlu0 %v3178, 64
        %v3255 = vpop.permute.xlu0 %3254
        %3256 = vrot.lane.b32.xlu0 %v3179, 64
        %v3257 = vpop.permute.xlu0 %3256
        %3258 = vrot.lane.b32.xlu0 %v3180, 64
        %v3259 = vpop.permute.xlu0 %3258
        %3260 = vrot.lane.b32.xlu0 %v3181, 64
        %v3261 = vpop.permute.xlu0 %3260
        %3262 = vrot.lane.b32.xlu0 %v3182, 64
        %v3263 = vpop.permute.xlu0 %3262
        %3264 = vrot.lane.b32.xlu0 %v3183, 64
        %v3265 = vpop.permute.xlu0 %3264
        %3266 = vrot.lane.b32.xlu0 %v3184, 64
        %v3267 = vpop.permute.xlu0 %3266
        %3268 = vrot.lane.b32.xlu0 %v3185, 64
        %v3269 = vpop.permute.xlu0 %3268
        %3270 = vrot.lane.b32.xlu0 %v3186, 64
        %v3271 = vpop.permute.xlu0 %3270
        %3272 = vrot.lane.b32.xlu0 %v3187, 64
        %v3273 = vpop.permute.xlu0 %3272
        %3274 = vrot.lane.b32.xlu0 %v3188, 64
        %v3275 = vpop.permute.xlu0 %3274
        %3276 = vrot.lane.b32.xlu0 %v3189, 64
        %v3277 = vpop.permute.xlu0 %3276
        %3278 = vrot.lane.b32.xlu0 %v3190, 64
        %v3279 = vpop.permute.xlu0 %3278
        %3280 = vrot.lane.b32.xlu0 %v3191, 64
        %v3281 = vpop.permute.xlu0 %3280
        %3282 = vrot.lane.b32.xlu0 %v3192, 64
        %v3283 = vpop.permute.xlu0 %3282
        %3284 = vrot.lane.b32.xlu0 %v3193, 64
        %v3285 = vpop.permute.xlu0 %3284
        %3286 = vrot.lane.b32.xlu0 %v3194, 64
        %v3287 = vpop.permute.xlu0 %3286
        %3288 = vrot.lane.b32.xlu0 %v3195, 64
        %v3289 = vpop.permute.xlu0 %3288
        %3290 = vrot.lane.b32.xlu0 %v3196, 64
        %v3291 = vpop.permute.xlu0 %3290
        %3292 = vrot.lane.b32.xlu0 %v3197, 64
        %v3293 = vpop.permute.xlu0 %3292
        %3326 = vst.msk [vmem:[#allocation3 + $0x10] sm:$0xff] %vm583, %v3231
        %3327 = vst.msk [vmem:[#allocation3 + $0x38] sm:$0xff] %vm583, %v3233
        %3328 = vst.msk [vmem:[#allocation3 + $0x60] sm:$0xff] %vm583, %v3235
        %3329 = vst.msk [vmem:[#allocation3 + $0x88] sm:$0xff] %vm583, %v3237
        %3330 = vst.msk [vmem:[#allocation3 + $0xb0] sm:$0xff] %vm583, %v3239
        %3331 = vst.msk [vmem:[#allocation3 + $0xd8] sm:$0xff] %vm583, %v3241
        %3332 = vst.msk [vmem:[#allocation3 + $0x100] sm:$0xff] %vm583, %v3243
        %3333 = vst.msk [vmem:[#allocation3 + $0x128] sm:$0xff] %vm583, %v3245
        %3334 = vst.msk [vmem:[#allocation3 + $0x150] sm:$0xff] %vm583, %v3247
        %3335 = vst.msk [vmem:[#allocation3 + $0x178] sm:$0xff] %vm583, %v3249
        %3336 = vst.msk [vmem:[#allocation3 + $0x1a0] sm:$0xff] %vm583, %v3251
        %3337 = vst.msk [vmem:[#allocation3 + $0x1c8] sm:$0xff] %vm583, %v3253
        %3338 = vst.msk [vmem:[#allocation3 + $0x1f0] sm:$0xff] %vm583, %v3255
        %3339 = vst.msk [vmem:[#allocation3 + $0x218] sm:$0xff] %vm583, %v3257
        %3340 = vst.msk [vmem:[#allocation3 + $0x240] sm:$0xff] %vm583, %v3259
        %3341 = vst.msk [vmem:[#allocation3 + $0x268] sm:$0xff] %vm583, %v3261
        %3342 = vst.msk [vmem:[#allocation3 + $0x290] sm:$0xff] %vm583, %v3263
        %3343 = vst.msk [vmem:[#allocation3 + $0x2b8] sm:$0xff] %vm583, %v3265
        %3344 = vst.msk [vmem:[#allocation3 + $0x2e0] sm:$0xff] %vm583, %v3267
        %3345 = vst.msk [vmem:[#allocation3 + $0x308] sm:$0xff] %vm583, %v3269
        %3346 = vst.msk [vmem:[#allocation3 + $0x330] sm:$0xff] %vm583, %v3271
        %3347 = vst.msk [vmem:[#allocation3 + $0x358] sm:$0xff] %vm583, %v3273
        %3348 = vst.msk [vmem:[#allocation3 + $0x380] sm:$0xff] %vm583, %v3275
        %3349 = vst.msk [vmem:[#allocation3 + $0x3a8] sm:$0xff] %vm583, %v3277
        %3350 = vst.msk [vmem:[#allocation3 + $0x3d0] sm:$0xff] %vm583, %v3279
        %3351 = vst.msk [vmem:[#allocation3 + $0x3f8] sm:$0xff] %vm583, %v3281
        %3352 = vst.msk [vmem:[#allocation3 + $0x420] sm:$0xff] %vm583, %v3283
        %3353 = vst.msk [vmem:[#allocation3 + $0x448] sm:$0xff] %vm583, %v3285
        %3354 = vst.msk [vmem:[#allocation3 + $0x470] sm:$0xff] %vm583, %v3287
        %3355 = vst.msk [vmem:[#allocation3 + $0x498] sm:$0xff] %vm583, %v3289
        %3356 = vst.msk [vmem:[#allocation3 + $0x4c0] sm:$0xff] %vm583, %v3291
        %3357 = vst.msk [vmem:[#allocation3 + $0x4e8] sm:$0xff] %vm583, %v3293
        %v3358 = vld [vmem:[%s1128] sm:$0xff]
        %v3359 = vld [vmem:[%s1128 + $0x8] sm:$0xff]
        %v3360 = vld [vmem:[%s1128 + $0x18] sm:$0xff]
        %v3361 = vld [vmem:[%s1128 + $0x20] sm:$0xff]
        %v3362 = vld [vmem:[%s1128 + $0x30] sm:$0xff]
        %v3363 = vld [vmem:[%s1128 + $0x38] sm:$0xff]
        %v3364 = vld [vmem:[%s1128 + $0x48] sm:$0xff]
        %v3365 = vld [vmem:[%s1128 + $0x50] sm:$0xff]
        %v3366 = vld [vmem:[%s1128 + $0x60] sm:$0xff]
        %v3367 = vld [vmem:[%s1128 + $0x68] sm:$0xff]
        %v3368 = vld [vmem:[%s1128 + $0x78] sm:$0xff]
        %v3369 = vld [vmem:[%s1128 + $0x80] sm:$0xff]
        %v3370 = vld [vmem:[%s1128 + $0x90] sm:$0xff]
        %v3371 = vld [vmem:[%s1128 + $0x98] sm:$0xff]
        %v3372 = vld [vmem:[%s1128 + $0xa8] sm:$0xff]
        %v3373 = vld [vmem:[%s1128 + $0xb0] sm:$0xff]
        %v3374 = vld [vmem:[%s1128 + $0xc0] sm:$0xff]
        %v3375 = vld [vmem:[%s1128 + $0xc8] sm:$0xff]
        %v3376 = vld [vmem:[%s1128 + $0xd8] sm:$0xff]
        %v3377 = vld [vmem:[%s1128 + $0xe0] sm:$0xff]
        %v3378 = vld [vmem:[%s1128 + $0xf0] sm:$0xff]
        %v3379 = vld [vmem:[%s1128 + $0xf8] sm:$0xff]
        %v3380 = vld [vmem:[%s1128 + $0x108] sm:$0xff]
        %v3381 = vld [vmem:[%s1128 + $0x110] sm:$0xff]
        %v3382 = vld [vmem:[%s1128 + $0x120] sm:$0xff]
        %v3383 = vld [vmem:[%s1128 + $0x128] sm:$0xff]
        %v3384 = vld [vmem:[%s1128 + $0x138] sm:$0xff]
        %v3385 = vld [vmem:[%s1128 + $0x140] sm:$0xff]
        %v3386 = vld [vmem:[%s1128 + $0x150] sm:$0xff]
        %v3387 = vld [vmem:[%s1128 + $0x158] sm:$0xff]
        %v3388 = vld [vmem:[%s1128 + $0x168] sm:$0xff]
        %v3389 = vld [vmem:[%s1128 + $0x170] sm:$0xff]
        %3390 = vst.msk [vmem:[#allocation3 + $0x18] sm:$0xff] %vm252, %v3358
        %3391 = vst.msk [vmem:[#allocation3 + $0x40] sm:$0xff] %vm252, %v3359
        %3392 = vst.msk [vmem:[#allocation3 + $0x68] sm:$0xff] %vm252, %v3360
        %3393 = vst.msk [vmem:[#allocation3 + $0x90] sm:$0xff] %vm252, %v3361
        %3394 = vst.msk [vmem:[#allocation3 + $0xb8] sm:$0xff] %vm252, %v3362
        %3395 = vst.msk [vmem:[#allocation3 + $0xe0] sm:$0xff] %vm252, %v3363
        %3396 = vst.msk [vmem:[#allocation3 + $0x108] sm:$0xff] %vm252, %v3364
        %3397 = vst.msk [vmem:[#allocation3 + $0x130] sm:$0xff] %vm252, %v3365
        %3398 = vst.msk [vmem:[#allocation3 + $0x158] sm:$0xff] %vm252, %v3366
        %3399 = vst.msk [vmem:[#allocation3 + $0x180] sm:$0xff] %vm252, %v3367
        %3400 = vst.msk [vmem:[#allocation3 + $0x1a8] sm:$0xff] %vm252, %v3368
        %3401 = vst.msk [vmem:[#allocation3 + $0x1d0] sm:$0xff] %vm252, %v3369
        %3402 = vst.msk [vmem:[#allocation3 + $0x1f8] sm:$0xff] %vm252, %v3370
        %3403 = vst.msk [vmem:[#allocation3 + $0x220] sm:$0xff] %vm252, %v3371
        %3404 = vst.msk [vmem:[#allocation3 + $0x248] sm:$0xff] %vm252, %v3372
        %3405 = vst.msk [vmem:[#allocation3 + $0x270] sm:$0xff] %vm252, %v3373
        %3406 = vst.msk [vmem:[#allocation3 + $0x298] sm:$0xff] %vm252, %v3374
        %3407 = vst.msk [vmem:[#allocation3 + $0x2c0] sm:$0xff] %vm252, %v3375
        %3408 = vst.msk [vmem:[#allocation3 + $0x2e8] sm:$0xff] %vm252, %v3376
        %3409 = vst.msk [vmem:[#allocation3 + $0x310] sm:$0xff] %vm252, %v3377
        %3410 = vst.msk [vmem:[#allocation3 + $0x338] sm:$0xff] %vm252, %v3378
        %3411 = vst.msk [vmem:[#allocation3 + $0x360] sm:$0xff] %vm252, %v3379
        %3412 = vst.msk [vmem:[#allocation3 + $0x388] sm:$0xff] %vm252, %v3380
        %3413 = vst.msk [vmem:[#allocation3 + $0x3b0] sm:$0xff] %vm252, %v3381
        %3414 = vst.msk [vmem:[#allocation3 + $0x3d8] sm:$0xff] %vm252, %v3382
        %3415 = vst.msk [vmem:[#allocation3 + $0x400] sm:$0xff] %vm252, %v3383
        %3416 = vst.msk [vmem:[#allocation3 + $0x428] sm:$0xff] %vm252, %v3384
        %3417 = vst.msk [vmem:[#allocation3 + $0x450] sm:$0xff] %vm252, %v3385
        %3418 = vst.msk [vmem:[#allocation3 + $0x478] sm:$0xff] %vm252, %v3386
        %3419 = vst.msk [vmem:[#allocation3 + $0x4a0] sm:$0xff] %vm252, %v3387
        %3420 = vst.msk [vmem:[#allocation3 + $0x4c8] sm:$0xff] %vm252, %v3388
        %3421 = vst.msk [vmem:[#allocation3 + $0x4f0] sm:$0xff] %vm252, %v3389
        %v3422 = vld [vmem:[%s1128 + $0x1] sm:$0xff]
        %v3423 = vld [vmem:[%s1128 + $0x9] sm:$0xff]
        %v3424 = vld [vmem:[%s1128 + $0x19] sm:$0xff]
        %v3425 = vld [vmem:[%s1128 + $0x21] sm:$0xff]
        %v3426 = vld [vmem:[%s1128 + $0x31] sm:$0xff]
        %v3427 = vld [vmem:[%s1128 + $0x39] sm:$0xff]
        %v3428 = vld [vmem:[%s1128 + $0x49] sm:$0xff]
        %v3429 = vld [vmem:[%s1128 + $0x51] sm:$0xff]
        %v3430 = vld [vmem:[%s1128 + $0x61] sm:$0xff]
        %v3431 = vld [vmem:[%s1128 + $0x69] sm:$0xff]
        %v3432 = vld [vmem:[%s1128 + $0x79] sm:$0xff]
        %v3433 = vld [vmem:[%s1128 + $0x81] sm:$0xff]
        %v3434 = vld [vmem:[%s1128 + $0x91] sm:$0xff]
        %v3435 = vld [vmem:[%s1128 + $0x99] sm:$0xff]
        %v3436 = vld [vmem:[%s1128 + $0xa9] sm:$0xff]
        %v3437 = vld [vmem:[%s1128 + $0xb1] sm:$0xff]
        %v3438 = vld [vmem:[%s1128 + $0xc1] sm:$0xff]
        %v3439 = vld [vmem:[%s1128 + $0xc9] sm:$0xff]
        %v3440 = vld [vmem:[%s1128 + $0xd9] sm:$0xff]
        %v3441 = vld [vmem:[%s1128 + $0xe1] sm:$0xff]
        %v3442 = vld [vmem:[%s1128 + $0xf1] sm:$0xff]
        %v3443 = vld [vmem:[%s1128 + $0xf9] sm:$0xff]
        %v3444 = vld [vmem:[%s1128 + $0x109] sm:$0xff]
        %v3445 = vld [vmem:[%s1128 + $0x111] sm:$0xff]
        %v3446 = vld [vmem:[%s1128 + $0x121] sm:$0xff]
        %v3447 = vld [vmem:[%s1128 + $0x129] sm:$0xff]
        %v3448 = vld [vmem:[%s1128 + $0x139] sm:$0xff]
        %v3449 = vld [vmem:[%s1128 + $0x141] sm:$0xff]
        %v3450 = vld [vmem:[%s1128 + $0x151] sm:$0xff]
        %v3451 = vld [vmem:[%s1128 + $0x159] sm:$0xff]
        %v3452 = vld [vmem:[%s1128 + $0x169] sm:$0xff]
        %v3453 = vld [vmem:[%s1128 + $0x171] sm:$0xff]
        %3486 = vrot.lane.b32.xlu0 %v3422, 64
        %v3487 = vpop.permute.xlu0 %3486
        %3488 = vrot.lane.b32.xlu0 %v3423, 64
        %v3489 = vpop.permute.xlu0 %3488
        %3490 = vrot.lane.b32.xlu0 %v3424, 64
        %v3491 = vpop.permute.xlu0 %3490
        %3492 = vrot.lane.b32.xlu0 %v3425, 64
        %v3493 = vpop.permute.xlu0 %3492
        %3494 = vrot.lane.b32.xlu0 %v3426, 64
        %v3495 = vpop.permute.xlu0 %3494
        %3496 = vrot.lane.b32.xlu0 %v3427, 64
        %v3497 = vpop.permute.xlu0 %3496
        %3498 = vrot.lane.b32.xlu0 %v3428, 64
        %v3499 = vpop.permute.xlu0 %3498
        %3500 = vrot.lane.b32.xlu0 %v3429, 64
        %v3501 = vpop.permute.xlu0 %3500
        %3502 = vrot.lane.b32.xlu0 %v3430, 64
        %v3503 = vpop.permute.xlu0 %3502
        %3504 = vrot.lane.b32.xlu0 %v3431, 64
        %v3505 = vpop.permute.xlu0 %3504
        %3506 = vrot.lane.b32.xlu0 %v3432, 64
        %v3507 = vpop.permute.xlu0 %3506
        %3508 = vrot.lane.b32.xlu0 %v3433, 64
        %v3509 = vpop.permute.xlu0 %3508
        %3510 = vrot.lane.b32.xlu0 %v3434, 64
        %v3511 = vpop.permute.xlu0 %3510
        %3512 = vrot.lane.b32.xlu0 %v3435, 64
        %v3513 = vpop.permute.xlu0 %3512
        %3514 = vrot.lane.b32.xlu0 %v3436, 64
        %v3515 = vpop.permute.xlu0 %3514
        %3516 = vrot.lane.b32.xlu0 %v3437, 64
        %v3517 = vpop.permute.xlu0 %3516
        %3518 = vrot.lane.b32.xlu0 %v3438, 64
        %v3519 = vpop.permute.xlu0 %3518
        %3520 = vrot.lane.b32.xlu0 %v3439, 64
        %v3521 = vpop.permute.xlu0 %3520
        %3522 = vrot.lane.b32.xlu0 %v3440, 64
        %v3523 = vpop.permute.xlu0 %3522
        %3524 = vrot.lane.b32.xlu0 %v3441, 64
        %v3525 = vpop.permute.xlu0 %3524
        %3526 = vrot.lane.b32.xlu0 %v3442, 64
        %v3527 = vpop.permute.xlu0 %3526
        %3528 = vrot.lane.b32.xlu0 %v3443, 64
        %v3529 = vpop.permute.xlu0 %3528
        %3530 = vrot.lane.b32.xlu0 %v3444, 64
        %v3531 = vpop.permute.xlu0 %3530
        %3532 = vrot.lane.b32.xlu0 %v3445, 64
        %v3533 = vpop.permute.xlu0 %3532
        %3534 = vrot.lane.b32.xlu0 %v3446, 64
        %v3535 = vpop.permute.xlu0 %3534
        %3536 = vrot.lane.b32.xlu0 %v3447, 64
        %v3537 = vpop.permute.xlu0 %3536
        %3538 = vrot.lane.b32.xlu0 %v3448, 64
        %v3539 = vpop.permute.xlu0 %3538
        %3540 = vrot.lane.b32.xlu0 %v3449, 64
        %v3541 = vpop.permute.xlu0 %3540
        %3542 = vrot.lane.b32.xlu0 %v3450, 64
        %v3543 = vpop.permute.xlu0 %3542
        %3544 = vrot.lane.b32.xlu0 %v3451, 64
        %v3545 = vpop.permute.xlu0 %3544
        %3546 = vrot.lane.b32.xlu0 %v3452, 64
        %v3547 = vpop.permute.xlu0 %3546
        %3548 = vrot.lane.b32.xlu0 %v3453, 64
        %v3549 = vpop.permute.xlu0 %3548
        %3582 = vst.msk [vmem:[#allocation3 + $0x18] sm:$0xff] %vm583, %v3487
        %3583 = vst.msk [vmem:[#allocation3 + $0x40] sm:$0xff] %vm583, %v3489
        %3584 = vst.msk [vmem:[#allocation3 + $0x68] sm:$0xff] %vm583, %v3491
        %3585 = vst.msk [vmem:[#allocation3 + $0x90] sm:$0xff] %vm583, %v3493
        %3586 = vst.msk [vmem:[#allocation3 + $0xb8] sm:$0xff] %vm583, %v3495
        %3587 = vst.msk [vmem:[#allocation3 + $0xe0] sm:$0xff] %vm583, %v3497
        %3588 = vst.msk [vmem:[#allocation3 + $0x108] sm:$0xff] %vm583, %v3499
        %3589 = vst.msk [vmem:[#allocation3 + $0x130] sm:$0xff] %vm583, %v3501
        %3590 = vst.msk [vmem:[#allocation3 + $0x158] sm:$0xff] %vm583, %v3503
        %3591 = vst.msk [vmem:[#allocation3 + $0x180] sm:$0xff] %vm583, %v3505
        %3592 = vst.msk [vmem:[#allocation3 + $0x1a8] sm:$0xff] %vm583, %v3507
        %3593 = vst.msk [vmem:[#allocation3 + $0x1d0] sm:$0xff] %vm583, %v3509
        %3594 = vst.msk [vmem:[#allocation3 + $0x1f8] sm:$0xff] %vm583, %v3511
        %3595 = vst.msk [vmem:[#allocation3 + $0x220] sm:$0xff] %vm583, %v3513
        %3596 = vst.msk [vmem:[#allocation3 + $0x248] sm:$0xff] %vm583, %v3515
        %3597 = vst.msk [vmem:[#allocation3 + $0x270] sm:$0xff] %vm583, %v3517
        %3598 = vst.msk [vmem:[#allocation3 + $0x298] sm:$0xff] %vm583, %v3519
        %3599 = vst.msk [vmem:[#allocation3 + $0x2c0] sm:$0xff] %vm583, %v3521
        %3600 = vst.msk [vmem:[#allocation3 + $0x2e8] sm:$0xff] %vm583, %v3523
        %3601 = vst.msk [vmem:[#allocation3 + $0x310] sm:$0xff] %vm583, %v3525
        %3602 = vst.msk [vmem:[#allocation3 + $0x338] sm:$0xff] %vm583, %v3527
        %3603 = vst.msk [vmem:[#allocation3 + $0x360] sm:$0xff] %vm583, %v3529
        %3604 = vst.msk [vmem:[#allocation3 + $0x388] sm:$0xff] %vm583, %v3531
        %3605 = vst.msk [vmem:[#allocation3 + $0x3b0] sm:$0xff] %vm583, %v3533
        %3606 = vst.msk [vmem:[#allocation3 + $0x3d8] sm:$0xff] %vm583, %v3535
        %3607 = vst.msk [vmem:[#allocation3 + $0x400] sm:$0xff] %vm583, %v3537
        %3608 = vst.msk [vmem:[#allocation3 + $0x428] sm:$0xff] %vm583, %v3539
        %3609 = vst.msk [vmem:[#allocation3 + $0x450] sm:$0xff] %vm583, %v3541
        %3610 = vst.msk [vmem:[#allocation3 + $0x478] sm:$0xff] %vm583, %v3543
        %3611 = vst.msk [vmem:[#allocation3 + $0x4a0] sm:$0xff] %vm583, %v3545
        %3612 = vst.msk [vmem:[#allocation3 + $0x4c8] sm:$0xff] %vm583, %v3547
        %3613 = vst.msk [vmem:[#allocation3 + $0x4f0] sm:$0xff] %vm583, %v3549
        %v3614 = vld [vmem:[%s1128 + $0x2] sm:$0xff]
        %v3615 = vld [vmem:[%s1128 + $0xa] sm:$0xff]
        %v3616 = vld [vmem:[%s1128 + $0x1a] sm:$0xff]
        %v3617 = vld [vmem:[%s1128 + $0x22] sm:$0xff]
        %v3618 = vld [vmem:[%s1128 + $0x32] sm:$0xff]
        %v3619 = vld [vmem:[%s1128 + $0x3a] sm:$0xff]
        %v3620 = vld [vmem:[%s1128 + $0x4a] sm:$0xff]
        %v3621 = vld [vmem:[%s1128 + $0x52] sm:$0xff]
        %v3622 = vld [vmem:[%s1128 + $0x62] sm:$0xff]
        %v3623 = vld [vmem:[%s1128 + $0x6a] sm:$0xff]
        %v3624 = vld [vmem:[%s1128 + $0x7a] sm:$0xff]
        %v3625 = vld [vmem:[%s1128 + $0x82] sm:$0xff]
        %v3626 = vld [vmem:[%s1128 + $0x92] sm:$0xff]
        %v3627 = vld [vmem:[%s1128 + $0x9a] sm:$0xff]
        %v3628 = vld [vmem:[%s1128 + $0xaa] sm:$0xff]
        %v3629 = vld [vmem:[%s1128 + $0xb2] sm:$0xff]
        %v3630 = vld [vmem:[%s1128 + $0xc2] sm:$0xff]
        %v3631 = vld [vmem:[%s1128 + $0xca] sm:$0xff]
        %v3632 = vld [vmem:[%s1128 + $0xda] sm:$0xff]
        %v3633 = vld [vmem:[%s1128 + $0xe2] sm:$0xff]
        %v3634 = vld [vmem:[%s1128 + $0xf2] sm:$0xff]
        %v3635 = vld [vmem:[%s1128 + $0xfa] sm:$0xff]
        %v3636 = vld [vmem:[%s1128 + $0x10a] sm:$0xff]
        %v3637 = vld [vmem:[%s1128 + $0x112] sm:$0xff]
        %v3638 = vld [vmem:[%s1128 + $0x122] sm:$0xff]
        %v3639 = vld [vmem:[%s1128 + $0x12a] sm:$0xff]
        %v3640 = vld [vmem:[%s1128 + $0x13a] sm:$0xff]
        %v3641 = vld [vmem:[%s1128 + $0x142] sm:$0xff]
        %v3642 = vld [vmem:[%s1128 + $0x152] sm:$0xff]
        %v3643 = vld [vmem:[%s1128 + $0x15a] sm:$0xff]
        %v3644 = vld [vmem:[%s1128 + $0x16a] sm:$0xff]
        %v3645 = vld [vmem:[%s1128 + $0x172] sm:$0xff]
        %3646 = vst.msk [vmem:[#allocation3 + $0x20] sm:$0xff] %vm252, %v3614
        %3647 = vst.msk [vmem:[#allocation3 + $0x48] sm:$0xff] %vm252, %v3615
        %3648 = vst.msk [vmem:[#allocation3 + $0x70] sm:$0xff] %vm252, %v3616
        %3649 = vst.msk [vmem:[#allocation3 + $0x98] sm:$0xff] %vm252, %v3617
        %3650 = vst.msk [vmem:[#allocation3 + $0xc0] sm:$0xff] %vm252, %v3618
        %3651 = vst.msk [vmem:[#allocation3 + $0xe8] sm:$0xff] %vm252, %v3619
        %3652 = vst.msk [vmem:[#allocation3 + $0x110] sm:$0xff] %vm252, %v3620
        %3653 = vst.msk [vmem:[#allocation3 + $0x138] sm:$0xff] %vm252, %v3621
        %3654 = vst.msk [vmem:[#allocation3 + $0x160] sm:$0xff] %vm252, %v3622
        %3655 = vst.msk [vmem:[#allocation3 + $0x188] sm:$0xff] %vm252, %v3623
        %3656 = vst.msk [vmem:[#allocation3 + $0x1b0] sm:$0xff] %vm252, %v3624
        %3657 = vst.msk [vmem:[#allocation3 + $0x1d8] sm:$0xff] %vm252, %v3625
        %3658 = vst.msk [vmem:[#allocation3 + $0x200] sm:$0xff] %vm252, %v3626
        %3659 = vst.msk [vmem:[#allocation3 + $0x228] sm:$0xff] %vm252, %v3627
        %3660 = vst.msk [vmem:[#allocation3 + $0x250] sm:$0xff] %vm252, %v3628
        %3661 = vst.msk [vmem:[#allocation3 + $0x278] sm:$0xff] %vm252, %v3629
        %3662 = vst.msk [vmem:[#allocation3 + $0x2a0] sm:$0xff] %vm252, %v3630
        %3663 = vst.msk [vmem:[#allocation3 + $0x2c8] sm:$0xff] %vm252, %v3631
        %3664 = vst.msk [vmem:[#allocation3 + $0x2f0] sm:$0xff] %vm252, %v3632
        %3665 = vst.msk [vmem:[#allocation3 + $0x318] sm:$0xff] %vm252, %v3633
        %3666 = vst.msk [vmem:[#allocation3 + $0x340] sm:$0xff] %vm252, %v3634
        %3667 = vst.msk [vmem:[#allocation3 + $0x368] sm:$0xff] %vm252, %v3635
        %3668 = vst.msk [vmem:[#allocation3 + $0x390] sm:$0xff] %vm252, %v3636
        %3669 = vst.msk [vmem:[#allocation3 + $0x3b8] sm:$0xff] %vm252, %v3637
        %3670 = vst.msk [vmem:[#allocation3 + $0x3e0] sm:$0xff] %vm252, %v3638
        %3671 = vst.msk [vmem:[#allocation3 + $0x408] sm:$0xff] %vm252, %v3639
        %3672 = vst.msk [vmem:[#allocation3 + $0x430] sm:$0xff] %vm252, %v3640
        %3673 = vst.msk [vmem:[#allocation3 + $0x458] sm:$0xff] %vm252, %v3641
        %3674 = vst.msk [vmem:[#allocation3 + $0x480] sm:$0xff] %vm252, %v3642
        %3675 = vst.msk [vmem:[#allocation3 + $0x4a8] sm:$0xff] %vm252, %v3643
        %3676 = vst.msk [vmem:[#allocation3 + $0x4d0] sm:$0xff] %vm252, %v3644
        %3677 = vst.msk [vmem:[#allocation3 + $0x4f8] sm:$0xff] %vm252, %v3645
        %v3678 = vld [vmem:[#allocation3] sm:$0xff]
        %v3679 = vld [vmem:[#allocation3 + $0x8] sm:$0xff]
        %v3680 = vld [vmem:[#allocation3 + $0x10] sm:$0xff]
        %v3681 = vld [vmem:[#allocation3 + $0x18] sm:$0xff]
        %v3682 = vld [vmem:[#allocation3 + $0x20] sm:$0xff]
        %v3683 = vld [vmem:[#allocation3 + $0x28] sm:$0xff]
        %v3684 = vld [vmem:[#allocation3 + $0x30] sm:$0xff]
        %v3685 = vld [vmem:[#allocation3 + $0x38] sm:$0xff]
        %v3686 = vld [vmem:[#allocation3 + $0x40] sm:$0xff]
        %v3687 = vld [vmem:[#allocation3 + $0x48] sm:$0xff]
        %v3688 = vld [vmem:[#allocation3 + $0x50] sm:$0xff]
        %v3689 = vld [vmem:[#allocation3 + $0x58] sm:$0xff]
        %v3690 = vld [vmem:[#allocation3 + $0x60] sm:$0xff]
        %v3691 = vld [vmem:[#allocation3 + $0x68] sm:$0xff]
        %v3692 = vld [vmem:[#allocation3 + $0x70] sm:$0xff]
        %v3693 = vld [vmem:[#allocation3 + $0x78] sm:$0xff]
        %v3694 = vld [vmem:[#allocation3 + $0x80] sm:$0xff]
        %v3695 = vld [vmem:[#allocation3 + $0x88] sm:$0xff]
        %v3696 = vld [vmem:[#allocation3 + $0x90] sm:$0xff]
        %v3697 = vld [vmem:[#allocation3 + $0x98] sm:$0xff]
        %v3698 = vld [vmem:[#allocation3 + $0xa0] sm:$0xff]
        %v3699 = vld [vmem:[#allocation3 + $0xa8] sm:$0xff]
        %v3700 = vld [vmem:[#allocation3 + $0xb0] sm:$0xff]
        %v3701 = vld [vmem:[#allocation3 + $0xb8] sm:$0xff]
        %v3702 = vld [vmem:[#allocation3 + $0xc0] sm:$0xff]
        %v3703 = vld [vmem:[#allocation3 + $0xc8] sm:$0xff]
        %v3704 = vld [vmem:[#allocation3 + $0xd0] sm:$0xff]
        %v3705 = vld [vmem:[#allocation3 + $0xd8] sm:$0xff]
        %v3706 = vld [vmem:[#allocation3 + $0xe0] sm:$0xff]
        %v3707 = vld [vmem:[#allocation3 + $0xe8] sm:$0xff]
        %v3708 = vld [vmem:[#allocation3 + $0xf0] sm:$0xff]
        %v3709 = vld [vmem:[#allocation3 + $0xf8] sm:$0xff]
        %v3710 = vld [vmem:[#allocation3 + $0x100] sm:$0xff]
        %v3711 = vld [vmem:[#allocation3 + $0x108] sm:$0xff]
        %v3712 = vld [vmem:[#allocation3 + $0x110] sm:$0xff]
        %v3713 = vld [vmem:[#allocation3 + $0x118] sm:$0xff]
        %v3714 = vld [vmem:[#allocation3 + $0x120] sm:$0xff]
        %v3715 = vld [vmem:[#allocation3 + $0x128] sm:$0xff]
        %v3716 = vld [vmem:[#allocation3 + $0x130] sm:$0xff]
        %v3717 = vld [vmem:[#allocation3 + $0x138] sm:$0xff]
        %v3718 = vld [vmem:[#allocation3 + $0x140] sm:$0xff]
        %v3719 = vld [vmem:[#allocation3 + $0x148] sm:$0xff]
        %v3720 = vld [vmem:[#allocation3 + $0x150] sm:$0xff]
        %v3721 = vld [vmem:[#allocation3 + $0x158] sm:$0xff]
        %v3722 = vld [vmem:[#allocation3 + $0x160] sm:$0xff]
        %v3723 = vld [vmem:[#allocation3 + $0x168] sm:$0xff]
        %v3724 = vld [vmem:[#allocation3 + $0x170] sm:$0xff]
        %v3725 = vld [vmem:[#allocation3 + $0x178] sm:$0xff]
        %v3726 = vld [vmem:[#allocation3 + $0x180] sm:$0xff]
        %v3727 = vld [vmem:[#allocation3 + $0x188] sm:$0xff]
        %v3728 = vld [vmem:[#allocation3 + $0x190] sm:$0xff]
        %v3729 = vld [vmem:[#allocation3 + $0x198] sm:$0xff]
        %v3730 = vld [vmem:[#allocation3 + $0x1a0] sm:$0xff]
        %v3731 = vld [vmem:[#allocation3 + $0x1a8] sm:$0xff]
        %v3732 = vld [vmem:[#allocation3 + $0x1b0] sm:$0xff]
        %v3733 = vld [vmem:[#allocation3 + $0x1b8] sm:$0xff]
        %v3734 = vld [vmem:[#allocation3 + $0x1c0] sm:$0xff]
        %v3735 = vld [vmem:[#allocation3 + $0x1c8] sm:$0xff]
        %v3736 = vld [vmem:[#allocation3 + $0x1d0] sm:$0xff]
        %v3737 = vld [vmem:[#allocation3 + $0x1d8] sm:$0xff]
        %v3738 = vld [vmem:[#allocation3 + $0x1e0] sm:$0xff]
        %v3739 = vld [vmem:[#allocation3 + $0x1e8] sm:$0xff]
        %v3740 = vld [vmem:[#allocation3 + $0x1f0] sm:$0xff]
        %v3741 = vld [vmem:[#allocation3 + $0x1f8] sm:$0xff]
        %v3742 = vld [vmem:[#allocation3 + $0x200] sm:$0xff]
        %v3743 = vld [vmem:[#allocation3 + $0x208] sm:$0xff]
        %v3744 = vld [vmem:[#allocation3 + $0x210] sm:$0xff]
        %v3745 = vld [vmem:[#allocation3 + $0x218] sm:$0xff]
        %v3746 = vld [vmem:[#allocation3 + $0x220] sm:$0xff]
        %v3747 = vld [vmem:[#allocation3 + $0x228] sm:$0xff]
        %v3748 = vld [vmem:[#allocation3 + $0x230] sm:$0xff]
        %v3749 = vld [vmem:[#allocation3 + $0x238] sm:$0xff]
        %v3750 = vld [vmem:[#allocation3 + $0x240] sm:$0xff]
        %v3751 = vld [vmem:[#allocation3 + $0x248] sm:$0xff]
        %v3752 = vld [vmem:[#allocation3 + $0x250] sm:$0xff]
        %v3753 = vld [vmem:[#allocation3 + $0x258] sm:$0xff]
        %v3754 = vld [vmem:[#allocation3 + $0x260] sm:$0xff]
        %v3755 = vld [vmem:[#allocation3 + $0x268] sm:$0xff]
        %v3756 = vld [vmem:[#allocation3 + $0x270] sm:$0xff]
        %v3757 = vld [vmem:[#allocation3 + $0x278] sm:$0xff]
        %v3758 = vld [vmem:[#allocation3 + $0x280] sm:$0xff]
        %v3759 = vld [vmem:[#allocation3 + $0x288] sm:$0xff]
        %v3760 = vld [vmem:[#allocation3 + $0x290] sm:$0xff]
        %v3761 = vld [vmem:[#allocation3 + $0x298] sm:$0xff]
        %v3762 = vld [vmem:[#allocation3 + $0x2a0] sm:$0xff]
        %v3763 = vld [vmem:[#allocation3 + $0x2a8] sm:$0xff]
        %v3764 = vld [vmem:[#allocation3 + $0x2b0] sm:$0xff]
        %v3765 = vld [vmem:[#allocation3 + $0x2b8] sm:$0xff]
        %v3766 = vld [vmem:[#allocation3 + $0x2c0] sm:$0xff]
        %v3767 = vld [vmem:[#allocation3 + $0x2c8] sm:$0xff]
        %v3768 = vld [vmem:[#allocation3 + $0x2d0] sm:$0xff]
        %v3769 = vld [vmem:[#allocation3 + $0x2d8] sm:$0xff]
        %v3770 = vld [vmem:[#allocation3 + $0x2e0] sm:$0xff]
        %v3771 = vld [vmem:[#allocation3 + $0x2e8] sm:$0xff]
        %v3772 = vld [vmem:[#allocation3 + $0x2f0] sm:$0xff]
        %v3773 = vld [vmem:[#allocation3 + $0x2f8] sm:$0xff]
        %v3774 = vld [vmem:[#allocation3 + $0x300] sm:$0xff]
        %v3775 = vld [vmem:[#allocation3 + $0x308] sm:$0xff]
        %v3776 = vld [vmem:[#allocation3 + $0x310] sm:$0xff]
        %v3777 = vld [vmem:[#allocation3 + $0x318] sm:$0xff]
        %v3778 = vld [vmem:[#allocation3 + $0x320] sm:$0xff]
        %v3779 = vld [vmem:[#allocation3 + $0x328] sm:$0xff]
        %v3780 = vld [vmem:[#allocation3 + $0x330] sm:$0xff]
        %v3781 = vld [vmem:[#allocation3 + $0x338] sm:$0xff]
        %v3782 = vld [vmem:[#allocation3 + $0x340] sm:$0xff]
        %v3783 = vld [vmem:[#allocation3 + $0x348] sm:$0xff]
        %v3784 = vld [vmem:[#allocation3 + $0x350] sm:$0xff]
        %v3785 = vld [vmem:[#allocation3 + $0x358] sm:$0xff]
        %v3786 = vld [vmem:[#allocation3 + $0x360] sm:$0xff]
        %v3787 = vld [vmem:[#allocation3 + $0x368] sm:$0xff]
        %v3788 = vld [vmem:[#allocation3 + $0x370] sm:$0xff]
        %v3789 = vld [vmem:[#allocation3 + $0x378] sm:$0xff]
        %v3790 = vld [vmem:[#allocation3 + $0x380] sm:$0xff]
        %v3791 = vld [vmem:[#allocation3 + $0x388] sm:$0xff]
        %v3792 = vld [vmem:[#allocation3 + $0x390] sm:$0xff]
        %v3793 = vld [vmem:[#allocation3 + $0x398] sm:$0xff]
        %v3794 = vld [vmem:[#allocation3 + $0x3a0] sm:$0xff]
        %v3795 = vld [vmem:[#allocation3 + $0x3a8] sm:$0xff]
        %v3796 = vld [vmem:[#allocation3 + $0x3b0] sm:$0xff]
        %v3797 = vld [vmem:[#allocation3 + $0x3b8] sm:$0xff]
        %v3798 = vld [vmem:[#allocation3 + $0x3c0] sm:$0xff]
        %v3799 = vld [vmem:[#allocation3 + $0x3c8] sm:$0xff]
        %v3800 = vld [vmem:[#allocation3 + $0x3d0] sm:$0xff]
        %v3801 = vld [vmem:[#allocation3 + $0x3d8] sm:$0xff]
        %v3802 = vld [vmem:[#allocation3 + $0x3e0] sm:$0xff]
        %v3803 = vld [vmem:[#allocation3 + $0x3e8] sm:$0xff]
        %v3804 = vld [vmem:[#allocation3 + $0x3f0] sm:$0xff]
        %v3805 = vld [vmem:[#allocation3 + $0x3f8] sm:$0xff]
        %v3806 = vld [vmem:[#allocation3 + $0x400] sm:$0xff]
        %v3807 = vld [vmem:[#allocation3 + $0x408] sm:$0xff]
        %v3808 = vld [vmem:[#allocation3 + $0x410] sm:$0xff]
        %v3809 = vld [vmem:[#allocation3 + $0x418] sm:$0xff]
        %v3810 = vld [vmem:[#allocation3 + $0x420] sm:$0xff]
        %v3811 = vld [vmem:[#allocation3 + $0x428] sm:$0xff]
        %v3812 = vld [vmem:[#allocation3 + $0x430] sm:$0xff]
        %v3813 = vld [vmem:[#allocation3 + $0x438] sm:$0xff]
        %v3814 = vld [vmem:[#allocation3 + $0x440] sm:$0xff]
        %v3815 = vld [vmem:[#allocation3 + $0x448] sm:$0xff]
        %v3816 = vld [vmem:[#allocation3 + $0x450] sm:$0xff]
        %v3817 = vld [vmem:[#allocation3 + $0x458] sm:$0xff]
        %v3818 = vld [vmem:[#allocation3 + $0x460] sm:$0xff]
        %v3819 = vld [vmem:[#allocation3 + $0x468] sm:$0xff]
        %v3820 = vld [vmem:[#allocation3 + $0x470] sm:$0xff]
        %v3821 = vld [vmem:[#allocation3 + $0x478] sm:$0xff]
        %v3822 = vld [vmem:[#allocation3 + $0x480] sm:$0xff]
        %v3823 = vld [vmem:[#allocation3 + $0x488] sm:$0xff]
        %v3824 = vld [vmem:[#allocation3 + $0x490] sm:$0xff]
        %v3825 = vld [vmem:[#allocation3 + $0x498] sm:$0xff]
        %v3826 = vld [vmem:[#allocation3 + $0x4a0] sm:$0xff]
        %v3827 = vld [vmem:[#allocation3 + $0x4a8] sm:$0xff]
        %v3828 = vld [vmem:[#allocation3 + $0x4b0] sm:$0xff]
        %v3829 = vld [vmem:[#allocation3 + $0x4b8] sm:$0xff]
        %v3830 = vld [vmem:[#allocation3 + $0x4c0] sm:$0xff]
        %v3831 = vld [vmem:[#allocation3 + $0x4c8] sm:$0xff]
        %v3832 = vld [vmem:[#allocation3 + $0x4d0] sm:$0xff]
        %v3833 = vld [vmem:[#allocation3 + $0x4d8] sm:$0xff]
        %v3834 = vld [vmem:[#allocation3 + $0x4e0] sm:$0xff]
        %v3835 = vld [vmem:[#allocation3 + $0x4e8] sm:$0xff]
        %v3836 = vld [vmem:[#allocation3 + $0x4f0] sm:$0xff]
        %v3837 = vld [vmem:[#allocation3 + $0x4f8] sm:$0xff]
        %v3838 = vld [vmem:[%s4] sm:$0xff]
        %v3839 = vld [vmem:[%s4 + $0x8] sm:$0xff]
        %v3840 = vld [vmem:[%s4 + $0x10] sm:$0xff]
        %v3841 = vld [vmem:[%s4 + $0x18] sm:$0xff]
        %v3842 = vld [vmem:[%s4 + $0x20] sm:$0xff]
        %v3843 = vld [vmem:[%s4 + $0x28] sm:$0xff]
        %v3844 = vld [vmem:[%s4 + $0x30] sm:$0xff]
        %v3845 = vld [vmem:[%s4 + $0x38] sm:$0xff]
        %v3846 = vld [vmem:[%s4 + $0x40] sm:$0xff]
        %v3847 = vld [vmem:[%s4 + $0x48] sm:$0xff]
        %v3848 = vld [vmem:[%s4 + $0x50] sm:$0xff]
        %v3849 = vld [vmem:[%s4 + $0x58] sm:$0xff]
        %v3850 = vld [vmem:[%s4 + $0x60] sm:$0xff]
        %v3851 = vld [vmem:[%s4 + $0x68] sm:$0xff]
        %v3852 = vld [vmem:[%s4 + $0x70] sm:$0xff]
        %v3853 = vld [vmem:[%s4 + $0x78] sm:$0xff]
        %v3854 = vld [vmem:[%s4 + $0x80] sm:$0xff]
        %v3855 = vld [vmem:[%s4 + $0x88] sm:$0xff]
        %v3856 = vld [vmem:[%s4 + $0x90] sm:$0xff]
        %v3857 = vld [vmem:[%s4 + $0x98] sm:$0xff]
        %v3858 = vld [vmem:[%s4 + $0xa0] sm:$0xff]
        %v3859 = vld [vmem:[%s4 + $0xa8] sm:$0xff]
        %v3860 = vld [vmem:[%s4 + $0xb0] sm:$0xff]
        %v3861 = vld [vmem:[%s4 + $0xb8] sm:$0xff]
        %v3862 = vld [vmem:[%s4 + $0xc0] sm:$0xff]
        %v3863 = vld [vmem:[%s4 + $0xc8] sm:$0xff]
        %v3864 = vld [vmem:[%s4 + $0xd0] sm:$0xff]
        %v3865 = vld [vmem:[%s4 + $0xd8] sm:$0xff]
        %v3866 = vld [vmem:[%s4 + $0xe0] sm:$0xff]
        %v3867 = vld [vmem:[%s4 + $0xe8] sm:$0xff]
        %v3868 = vld [vmem:[%s4 + $0xf0] sm:$0xff]
        %v3869 = vld [vmem:[%s4 + $0xf8] sm:$0xff]
        %v3870 = vld [vmem:[%s4 + $0x100] sm:$0xff]
        %v3871 = vld [vmem:[%s4 + $0x108] sm:$0xff]
        %v3872 = vld [vmem:[%s4 + $0x110] sm:$0xff]
        %v3873 = vld [vmem:[%s4 + $0x118] sm:$0xff]
        %v3874 = vld [vmem:[%s4 + $0x120] sm:$0xff]
        %v3875 = vld [vmem:[%s4 + $0x128] sm:$0xff]
        %v3876 = vld [vmem:[%s4 + $0x130] sm:$0xff]
        %v3877 = vld [vmem:[%s4 + $0x138] sm:$0xff]
        %v3878 = vld [vmem:[%s4 + $0x140] sm:$0xff]
        %v3879 = vld [vmem:[%s4 + $0x148] sm:$0xff]
        %v3880 = vld [vmem:[%s4 + $0x150] sm:$0xff]
        %v3881 = vld [vmem:[%s4 + $0x158] sm:$0xff]
        %v3882 = vld [vmem:[%s4 + $0x160] sm:$0xff]
        %v3883 = vld [vmem:[%s4 + $0x168] sm:$0xff]
        %v3884 = vld [vmem:[%s4 + $0x170] sm:$0xff]
        %v3885 = vld [vmem:[%s4 + $0x178] sm:$0xff]
        %v3886 = vld [vmem:[%s4 + $0x180] sm:$0xff]
        %v3887 = vld [vmem:[%s4 + $0x188] sm:$0xff]
        %v3888 = vld [vmem:[%s4 + $0x190] sm:$0xff]
        %v3889 = vld [vmem:[%s4 + $0x198] sm:$0xff]
        %v3890 = vld [vmem:[%s4 + $0x1a0] sm:$0xff]
        %v3891 = vld [vmem:[%s4 + $0x1a8] sm:$0xff]
        %v3892 = vld [vmem:[%s4 + $0x1b0] sm:$0xff]
        %v3893 = vld [vmem:[%s4 + $0x1b8] sm:$0xff]
        %v3894 = vld [vmem:[%s4 + $0x1c0] sm:$0xff]
        %v3895 = vld [vmem:[%s4 + $0x1c8] sm:$0xff]
        %v3896 = vld [vmem:[%s4 + $0x1d0] sm:$0xff]
        %v3897 = vld [vmem:[%s4 + $0x1d8] sm:$0xff]
        %v3898 = vld [vmem:[%s4 + $0x1e0] sm:$0xff]
        %v3899 = vld [vmem:[%s4 + $0x1e8] sm:$0xff]
        %v3900 = vld [vmem:[%s4 + $0x1f0] sm:$0xff]
        %v3901 = vld [vmem:[%s4 + $0x1f8] sm:$0xff]
        %v3902 = vld [vmem:[%s4 + $0x200] sm:$0xff]
        %v3903 = vld [vmem:[%s4 + $0x208] sm:$0xff]
        %v3904 = vld [vmem:[%s4 + $0x210] sm:$0xff]
        %v3905 = vld [vmem:[%s4 + $0x218] sm:$0xff]
        %v3906 = vld [vmem:[%s4 + $0x220] sm:$0xff]
        %v3907 = vld [vmem:[%s4 + $0x228] sm:$0xff]
        %v3908 = vld [vmem:[%s4 + $0x230] sm:$0xff]
        %v3909 = vld [vmem:[%s4 + $0x238] sm:$0xff]
        %v3910 = vld [vmem:[%s5] sm:$0x1]
        %v3912 = vlaneseq
        %v3913 = vshrl.u32 %v3912, 7
        %v3914 = vsub.s32 0, %v3913
        %v3915 = vrot.slane %v3910, %v3914
        %v3918 = vsel %vm252, %v3682, 0
        %v3921 = vsel %vm252, %v3687, 0
        %v3924 = vsel %vm252, %v3692, 0
        %v3927 = vsel %vm252, %v3697, 0
        %v3930 = vsel %vm252, %v3702, 0
        %v3933 = vsel %vm252, %v3707, 0
        %v3936 = vsel %vm252, %v3712, 0
        %v3939 = vsel %vm252, %v3717, 0
        %v3942 = vsel %vm252, %v3722, 0
        %v3945 = vsel %vm252, %v3727, 0
        %v3948 = vsel %vm252, %v3732, 0
        %v3951 = vsel %vm252, %v3737, 0
        %v3954 = vsel %vm252, %v3742, 0
        %v3957 = vsel %vm252, %v3747, 0
        %v3960 = vsel %vm252, %v3752, 0
        %v3963 = vsel %vm252, %v3757, 0
        %v3966 = vsel %vm252, %v3762, 0
        %v3969 = vsel %vm252, %v3767, 0
        %v3972 = vsel %vm252, %v3772, 0
        %v3975 = vsel %vm252, %v3777, 0
        %v3978 = vsel %vm252, %v3782, 0
        %v3981 = vsel %vm252, %v3787, 0
        %v3984 = vsel %vm252, %v3792, 0
        %v3987 = vsel %vm252, %v3797, 0
        %v3990 = vsel %vm252, %v3802, 0
        %v3993 = vsel %vm252, %v3807, 0
        %v3996 = vsel %vm252, %v3812, 0
        %v3999 = vsel %vm252, %v3817, 0
        %v4002 = vsel %vm252, %v3822, 0
        %v4005 = vsel %vm252, %v3827, 0
        %v4008 = vsel %vm252, %v3832, 0
        %v4011 = vsel %vm252, %v3837, 0
        %4013 = vmatprep.subr.mxu0 0.0
        %4014 = vmatpush1.msra.mxu0 %v3838
        %4015 = vmatprep.subr.mxu0 0.0
        %4016 = vmatpush1.msra.mxu0 %v3839
        %4017 = vmatprep.subr.mxu0 0.0
        %4018 = vmatpush1.msra.mxu0 %v3840
        %4019 = vmatprep.subr.mxu0 0.0
        %4020 = vmatpush1.msra.mxu0 %v3841
        %4021 = vmatprep.subr.mxu0 0.0
        %4022 = vmatpush1.msra.mxu0 %v3842
        %4023 = vmatprep.subr.mxu0 0.0
        %4024 = vmatpush1.msra.mxu0 %v3843
        %4025 = vmatprep.subr.mxu0 0.0
        %4026 = vmatpush1.msra.mxu0 %v3844
        %4027 = vmatprep.subr.mxu0 0.0
        %4028 = vmatpush1.msra.mxu0 %v3845
        %4029 = vmatprep.subr.mxu0 0.0
        %4030 = vmatpush1.msra.mxu0 %v3846
        %4031 = vmatprep.subr.mxu0 0.0
        %4032 = vmatpush1.msra.mxu0 %v3847
        %4033 = vmatprep.subr.mxu0 0.0
        %4034 = vmatpush1.msra.mxu0 %v3848
        %4035 = vmatprep.subr.mxu0 0.0
        %4036 = vmatpush1.msra.mxu0 %v3849
        %4037 = vmatprep.subr.mxu0 0.0
        %4038 = vmatpush1.msra.mxu0 %v3850
        %4039 = vmatprep.subr.mxu0 0.0
        %4040 = vmatpush1.msra.mxu0 %v3851
        %4041 = vmatprep.subr.mxu0 0.0
        %4042 = vmatpush1.msra.mxu0 %v3852
        %4043 = vmatprep.subr.mxu0 0.0
        %4044 = vmatpush1.msra.mxu0 %v3853
        %4045 = vmatprep.subr.mxu0 0.0
        %4046 = vmatpush1.msra.mxu0 %v3854
        %4047 = vmatprep.subr.mxu0 0.0
        %4048 = vmatpush1.msra.mxu0 %v3855
        %4049 = vmatprep.subr.mxu0 0.0
        %4050 = vmatpush1.msra.mxu0 %v3856
        %4051 = vmatprep.subr.mxu0 0.0
        %4052 = vmatpush1.msra.mxu0 %v3857
        %4053 = vmatprep.subr.mxu0 0.0
        %4054 = vmatpush1.msra.mxu0 %v3858
        %4055 = vmatprep.subr.mxu0 0.0
        %4056 = vmatpush1.msra.mxu0 %v3859
        %4057 = vmatprep.subr.mxu0 0.0
        %4058 = vmatpush1.msra.mxu0 %v3860
        %4059 = vmatprep.subr.mxu0 0.0
        %4060 = vmatpush1.msra.mxu0 %v3861
        %4061 = vmatprep.subr.mxu0 0.0
        %4062 = vmatpush1.msra.mxu0 %v3862
        %4063 = vmatprep.subr.mxu0 0.0
        %4064 = vmatpush1.msra.mxu0 %v3863
        %4065 = vmatprep.subr.mxu0 0.0
        %4066 = vmatpush1.msra.mxu0 %v3864
        %4067 = vmatprep.subr.mxu0 0.0
        %4068 = vmatpush1.msra.mxu0 %v3865
        %4069 = vmatprep.subr.mxu0 0.0
        %4070 = vmatpush1.msra.mxu0 %v3866
        %4071 = vmatprep.subr.mxu0 0.0
        %4072 = vmatpush1.msra.mxu0 %v3867
        %4073 = vmatprep.subr.mxu0 0.0
        %4074 = vmatpush1.msra.mxu0 %v3868
        %4075 = vmatprep.subr.mxu0 0.0
        %4076 = vmatpush1.msra.mxu0 %v3869
        %4077 = vmatprep.mubr.f32.mxu0 %v3679
        %4078 = vmatmul.mubr.f32.gmra.mrb[0].mxu0 %v3678
        %v4079 = vpop.f32.mrb[0].mxu0
        %v4080 = vadd.f32 %v3915, %v4079
        %v4081 = vpop.f32.mrb[0].mxu0
        %4082 = vmatprep.mubr.f32.mxu0 %v3684
        %4083 = vmatmul.mubr.f32.gmra.mrb[0].mxu0 %v3683
        %v4084 = vpop.f32.mrb[0].mxu0
        %v4085 = vadd.f32 %v3915, %v4084
        %v4086 = vpop.f32.mrb[0].mxu0
        %4087 = vmatprep.mubr.f32.mxu0 %v3689
        %4088 = vmatmul.mubr.f32.gmra.mrb[0].mxu0 %v3688
        %v4089 = vpop.f32.mrb[0].mxu0
        %v4090 = vadd.f32 %v3915, %v4089
        %v4091 = vpop.f32.mrb[0].mxu0
        %4092 = vmatprep.mubr.f32.mxu0 %v3694
        %4093 = vmatmul.mubr.f32.gmra.mrb[0].mxu0 %v3693
        %v4094 = vpop.f32.mrb[0].mxu0
        %v4095 = vadd.f32 %v3915, %v4094
        %v4096 = vpop.f32.mrb[0].mxu0
        %4097 = vmatprep.mubr.f32.mxu0 %v3699
        %4098 = vmatmul.mubr.f32.gmra.mrb[0].mxu0 %v3698
        %v4099 = vpop.f32.mrb[0].mxu0
        %v4100 = vadd.f32 %v3915, %v4099
        %v4101 = vpop.f32.mrb[0].mxu0
        %4102 = vmatprep.mubr.f32.mxu0 %v3704
        %4103 = vmatmul.mubr.f32.gmra.mrb[0].mxu0 %v3703
        %v4104 = vpop.f32.mrb[0].mxu0
        %v4105 = vadd.f32 %v3915, %v4104
        %v4106 = vpop.f32.mrb[0].mxu0
        %4107 = vmatprep.mubr.f32.mxu0 %v3709
        %4108 = vmatmul.mubr.f32.gmra.mrb[0].mxu0 %v3708
        %v4109 = vpop.f32.mrb[0].mxu0
        %v4110 = vadd.f32 %v3915, %v4109
        %v4111 = vpop.f32.mrb[0].mxu0
        %4112 = vmatprep.mubr.f32.mxu0 %v3714
        %4113 = vmatmul.mubr.f32.gmra.mrb[0].mxu0 %v3713
        %v4114 = vpop.f32.mrb[0].mxu0
        %v4115 = vadd.f32 %v3915, %v4114
        %v4116 = vpop.f32.mrb[0].mxu0
        %4117 = vmatprep.mubr.f32.mxu0 %v3719
        %4118 = vmatmul.mubr.f32.gmra.mrb[0].mxu0 %v3718
        %v4119 = vpop.f32.mrb[0].mxu0
        %v4120 = vadd.f32 %v3915, %v4119
        %v4121 = vpop.f32.mrb[0].mxu0
        %4122 = vmatprep.mubr.f32.mxu0 %v3724
        %4123 = vmatmul.mubr.f32.gmra.mrb[0].mxu0 %v3723
        %v4124 = vpop.f32.mrb[0].mxu0
        %v4125 = vadd.f32 %v3915, %v4124
        %v4126 = vpop.f32.mrb[0].mxu0
        %4127 = vmatprep.mubr.f32.mxu0 %v3729
        %4128 = vmatmul.mubr.f32.gmra.mrb[0].mxu0 %v3728
        %v4129 = vpop.f32.mrb[0].mxu0
        %v4130 = vadd.f32 %v3915, %v4129
        %v4131 = vpop.f32.mrb[0].mxu0
        %4132 = vmatprep.mubr.f32.mxu0 %v3734
        %4133 = vmatmul.mubr.f32.gmra.mrb[0].mxu0 %v3733
        %v4134 = vpop.f32.mrb[0].mxu0
        %v4135 = vadd.f32 %v3915, %v4134
        %v4136 = vpop.f32.mrb[0].mxu0
        %4137 = vmatprep.mubr.f32.mxu0 %v3739
        %4138 = vmatmul.mubr.f32.gmra.mrb[0].mxu0 %v3738
        %v4139 = vpop.f32.mrb[0].mxu0
        %v4140 = vadd.f32 %v3915, %v4139
        %v4141 = vpop.f32.mrb[0].mxu0
        %4142 = vmatprep.mubr.f32.mxu0 %v3744
        %4143 = vmatmul.mubr.f32.gmra.mrb[0].mxu0 %v3743
        %v4144 = vpop.f32.mrb[0].mxu0
        %v4145 = vadd.f32 %v3915, %v4144
        %v4146 = vpop.f32.mrb[0].mxu0
        %4147 = vmatprep.mubr.f32.mxu0 %v3749
        %4148 = vmatmul.mubr.f32.gmra.mrb[0].mxu0 %v3748
        %v4149 = vpop.f32.mrb[0].mxu0
        %v4150 = vadd.f32 %v3915, %v4149
        %v4151 = vpop.f32.mrb[0].mxu0
        %4152 = vmatprep.mubr.f32.mxu0 %v3754
        %4153 = vmatmul.mubr.f32.gmra.mrb[0].mxu0 %v3753
        %v4154 = vpop.f32.mrb[0].mxu0
        %v4155 = vadd.f32 %v3915, %v4154
        %v4156 = vpop.f32.mrb[0].mxu0
        %4157 = vmatprep.mubr.f32.mxu0 %v3759
        %4158 = vmatmul.mubr.f32.gmra.mrb[0].mxu0 %v3758
        %v4159 = vpop.f32.mrb[0].mxu0
        %v4160 = vadd.f32 %v3915, %v4159
        %v4161 = vpop.f32.mrb[0].mxu0
        %4162 = vmatprep.mubr.f32.mxu0 %v3764
        %4163 = vmatmul.mubr.f32.gmra.mrb[0].mxu0 %v3763
        %v4164 = vpop.f32.mrb[0].mxu0
        %v4165 = vadd.f32 %v3915, %v4164
        %v4166 = vpop.f32.mrb[0].mxu0
        %4167 = vmatprep.mubr.f32.mxu0 %v3769
        %4168 = vmatmul.mubr.f32.gmra.mrb[0].mxu0 %v3768
        %v4169 = vpop.f32.mrb[0].mxu0
        %v4170 = vadd.f32 %v3915, %v4169
        %v4171 = vpop.f32.mrb[0].mxu0
        %4172 = vmatprep.mubr.f32.mxu0 %v3774
        %4173 = vmatmul.mubr.f32.gmra.mrb[0].mxu0 %v3773
        %v4174 = vpop.f32.mrb[0].mxu0
        %v4175 = vadd.f32 %v3915, %v4174
        %v4176 = vpop.f32.mrb[0].mxu0
        %4177 = vmatprep.mubr.f32.mxu0 %v3779
        %4178 = vmatmul.mubr.f32.gmra.mrb[0].mxu0 %v3778
        %v4179 = vpop.f32.mrb[0].mxu0
        %v4180 = vadd.f32 %v3915, %v4179
        %v4181 = vpop.f32.mrb[0].mxu0
        %4182 = vmatprep.mubr.f32.mxu0 %v3784
        %4183 = vmatmul.mubr.f32.gmra.mrb[0].mxu0 %v3783
        %v4184 = vpop.f32.mrb[0].mxu0
        %v4185 = vadd.f32 %v3915, %v4184
        %v4186 = vpop.f32.mrb[0].mxu0
        %4187 = vmatprep.mubr.f32.mxu0 %v3789
        %4188 = vmatmul.mubr.f32.gmra.mrb[0].mxu0 %v3788
        %v4189 = vpop.f32.mrb[0].mxu0
        %v4190 = vadd.f32 %v3915, %v4189
        %v4191 = vpop.f32.mrb[0].mxu0
        %4192 = vmatprep.mubr.f32.mxu0 %v3794
        %4193 = vmatmul.mubr.f32.gmra.mrb[0].mxu0 %v3793
        %v4194 = vpop.f32.mrb[0].mxu0
        %v4195 = vadd.f32 %v3915, %v4194
        %v4196 = vpop.f32.mrb[0].mxu0
        %4197 = vmatprep.mubr.f32.mxu0 %v3799
        %4198 = vmatmul.mubr.f32.gmra.mrb[0].mxu0 %v3798
        %v4199 = vpop.f32.mrb[0].mxu0
        %v4200 = vadd.f32 %v3915, %v4199
        %v4201 = vpop.f32.mrb[0].mxu0
        %4202 = vmatprep.mubr.f32.mxu0 %v3804
        %4203 = vmatmul.mubr.f32.gmra.mrb[0].mxu0 %v3803
        %v4204 = vpop.f32.mrb[0].mxu0
        %v4205 = vadd.f32 %v3915, %v4204
        %v4206 = vpop.f32.mrb[0].mxu0
        %4207 = vmatprep.mubr.f32.mxu0 %v3809
        %4208 = vmatmul.mubr.f32.gmra.mrb[0].mxu0 %v3808
        %v4209 = vpop.f32.mrb[0].mxu0
        %v4210 = vadd.f32 %v3915, %v4209
        %v4211 = vpop.f32.mrb[0].mxu0
        %4212 = vmatprep.mubr.f32.mxu0 %v3814
        %4213 = vmatmul.mubr.f32.gmra.mrb[0].mxu0 %v3813
        %v4214 = vpop.f32.mrb[0].mxu0
        %v4215 = vadd.f32 %v3915, %v4214
        %v4216 = vpop.f32.mrb[0].mxu0
        %4217 = vmatprep.mubr.f32.mxu0 %v3819
        %4218 = vmatmul.mubr.f32.gmra.mrb[0].mxu0 %v3818
        %v4219 = vpop.f32.mrb[0].mxu0
        %v4220 = vadd.f32 %v3915, %v4219
        %v4221 = vpop.f32.mrb[0].mxu0
        %4222 = vmatprep.mubr.f32.mxu0 %v3824
        %4223 = vmatmul.mubr.f32.gmra.mrb[0].mxu0 %v3823
        %v4224 = vpop.f32.mrb[0].mxu0
        %v4225 = vadd.f32 %v3915, %v4224
        %v4226 = vpop.f32.mrb[0].mxu0
        %4227 = vmatprep.mubr.f32.mxu0 %v3829
        %4228 = vmatmul.mubr.f32.gmra.mrb[0].mxu0 %v3828
        %v4229 = vpop.f32.mrb[0].mxu0
        %v4230 = vadd.f32 %v3915, %v4229
        %v4231 = vpop.f32.mrb[0].mxu0
        %4232 = vmatprep.mubr.f32.mxu0 %v3834
        %4233 = vmatmul.mubr.f32.gmra.mrb[0].mxu0 %v3833
        %v4234 = vpop.f32.mrb[0].mxu0
        %v4235 = vadd.f32 %v3915, %v4234
        %v4236 = vpop.f32.mrb[0].mxu0
        %4237 = vdwg.mxu0
        %4238 = vmatprep.subr.mxu0 0.0
        %4239 = vmatpush1.msra.mxu0 %v3870
        %4240 = vmatprep.subr.mxu0 0.0
        %4241 = vmatpush1.msra.mxu0 %v3871
        %4242 = vmatprep.subr.mxu0 0.0
        %4243 = vmatpush1.msra.mxu0 %v3872
        %4244 = vmatprep.subr.mxu0 0.0
        %4245 = vmatpush1.msra.mxu0 %v3873
        %4246 = vmatprep.subr.mxu0 0.0
        %4247 = vmatpush1.msra.mxu0 %v3874
        %4248 = vmatprep.subr.mxu0 0.0
        %4249 = vmatpush1.msra.mxu0 %v3875
        %4250 = vmatprep.subr.mxu0 0.0
        %4251 = vmatpush1.msra.mxu0 %v3876
        %4252 = vmatprep.subr.mxu0 0.0
        %4253 = vmatpush1.msra.mxu0 %v3877
        %4254 = vmatprep.subr.mxu0 0.0
        %4255 = vmatpush1.msra.mxu0 %v3878
        %4256 = vmatprep.subr.mxu0 0.0
        %4257 = vmatpush1.msra.mxu0 %v3879
        %4258 = vmatprep.subr.mxu0 0.0
        %4259 = vmatpush1.msra.mxu0 %v3880
        %4260 = vmatprep.subr.mxu0 0.0
        %4261 = vmatpush1.msra.mxu0 %v3881
        %4262 = vmatprep.subr.mxu0 0.0
        %4263 = vmatpush1.msra.mxu0 %v3882
        %4264 = vmatprep.subr.mxu0 0.0
        %4265 = vmatpush1.msra.mxu0 %v3883
        %4266 = vmatprep.subr.mxu0 0.0
        %4267 = vmatpush1.msra.mxu0 %v3884
        %4268 = vmatprep.subr.mxu0 0.0
        %4269 = vmatpush1.msra.mxu0 %v3885
        %4270 = vmatprep.subr.mxu0 0.0
        %4271 = vmatpush1.msra.mxu0 %v3886
        %4272 = vmatprep.subr.mxu0 0.0
        %4273 = vmatpush1.msra.mxu0 %v3887
        %4274 = vmatprep.subr.mxu0 0.0
        %4275 = vmatpush1.msra.mxu0 %v3888
        %4276 = vmatprep.subr.mxu0 0.0
        %4277 = vmatpush1.msra.mxu0 %v3889
        %4278 = vmatprep.subr.mxu0 0.0
        %4279 = vmatpush1.msra.mxu0 %v3890
        %4280 = vmatprep.subr.mxu0 0.0
        %4281 = vmatpush1.msra.mxu0 %v3891
        %4282 = vmatprep.subr.mxu0 0.0
        %4283 = vmatpush1.msra.mxu0 %v3892
        %4284 = vmatprep.subr.mxu0 0.0
        %4285 = vmatpush1.msra.mxu0 %v3893
        %4286 = vmatprep.subr.mxu0 0.0
        %4287 = vmatpush1.msra.mxu0 %v3894
        %4288 = vmatprep.subr.mxu0 0.0
        %4289 = vmatpush1.msra.mxu0 %v3895
        %4290 = vmatprep.subr.mxu0 0.0
        %4291 = vmatpush1.msra.mxu0 %v3896
        %4292 = vmatprep.subr.mxu0 0.0
        %4293 = vmatpush1.msra.mxu0 %v3897
        %4294 = vmatprep.subr.mxu0 0.0
        %4295 = vmatpush1.msra.mxu0 %v3898
        %4296 = vmatprep.subr.mxu0 0.0
        %4297 = vmatpush1.msra.mxu0 %v3899
        %4298 = vmatprep.subr.mxu0 0.0
        %4299 = vmatpush1.msra.mxu0 %v3900
        %4300 = vmatprep.subr.mxu0 0.0
        %4301 = vmatpush1.msra.mxu0 %v3901
        %4302 = vmatprep.mubr.f32.mxu0 %v3681
        %4303 = vmatmul.mubr.f32.gmra.mrb[0].mxu0 %v3680
        %v4304 = vpop.f32.mrb[0].mxu0
        %v4305 = vadd.f32 %v4080, %v4304
        %v4306 = vpop.f32.mrb[0].mxu0
        %4307 = vmatprep.mubr.f32.mxu0 %v3686
        %4308 = vmatmul.mubr.f32.gmra.mrb[0].mxu0 %v3685
        %v4309 = vpop.f32.mrb[0].mxu0
        %v4310 = vadd.f32 %v4085, %v4309
        %v4311 = vpop.f32.mrb[0].mxu0
        %4312 = vmatprep.mubr.f32.mxu0 %v3691
        %4313 = vmatmul.mubr.f32.gmra.mrb[0].mxu0 %v3690
        %v4314 = vpop.f32.mrb[0].mxu0
        %v4315 = vadd.f32 %v4090, %v4314
        %v4316 = vpop.f32.mrb[0].mxu0
        %4317 = vmatprep.mubr.f32.mxu0 %v3696
        %4318 = vmatmul.mubr.f32.gmra.mrb[0].mxu0 %v3695
        %v4319 = vpop.f32.mrb[0].mxu0
        %v4320 = vadd.f32 %v4095, %v4319
        %v4321 = vpop.f32.mrb[0].mxu0
        %4322 = vmatprep.mubr.f32.mxu0 %v3701
        %4323 = vmatmul.mubr.f32.gmra.mrb[0].mxu0 %v3700
        %v4324 = vpop.f32.mrb[0].mxu0
        %v4325 = vadd.f32 %v4100, %v4324
        %v4326 = vpop.f32.mrb[0].mxu0
        %4327 = vmatprep.mubr.f32.mxu0 %v3706
        %4328 = vmatmul.mubr.f32.gmra.mrb[0].mxu0 %v3705
        %v4329 = vpop.f32.mrb[0].mxu0
        %v4330 = vadd.f32 %v4105, %v4329
        %v4331 = vpop.f32.mrb[0].mxu0
        %4332 = vmatprep.mubr.f32.mxu0 %v3711
        %4333 = vmatmul.mubr.f32.gmra.mrb[0].mxu0 %v3710
        %v4334 = vpop.f32.mrb[0].mxu0
        %v4335 = vadd.f32 %v4110, %v4334
        %v4336 = vpop.f32.mrb[0].mxu0
        %4337 = vmatprep.mubr.f32.mxu0 %v3716
        %4338 = vmatmul.mubr.f32.gmra.mrb[0].mxu0 %v3715
        %v4339 = vpop.f32.mrb[0].mxu0
        %v4340 = vadd.f32 %v4115, %v4339
        %v4341 = vpop.f32.mrb[0].mxu0
        %4342 = vmatprep.mubr.f32.mxu0 %v3721
        %4343 = vmatmul.mubr.f32.gmra.mrb[0].mxu0 %v3720
        %v4344 = vpop.f32.mrb[0].mxu0
        %v4345 = vadd.f32 %v4120, %v4344
        %v4346 = vpop.f32.mrb[0].mxu0
        %4347 = vmatprep.mubr.f32.mxu0 %v3726
        %4348 = vmatmul.mubr.f32.gmra.mrb[0].mxu0 %v3725
        %v4349 = vpop.f32.mrb[0].mxu0
        %v4350 = vadd.f32 %v4125, %v4349
        %v4351 = vpop.f32.mrb[0].mxu0
        %4352 = vmatprep.mubr.f32.mxu0 %v3731
        %4353 = vmatmul.mubr.f32.gmra.mrb[0].mxu0 %v3730
        %v4354 = vpop.f32.mrb[0].mxu0
        %v4355 = vadd.f32 %v4130, %v4354
        %v4356 = vpop.f32.mrb[0].mxu0
        %4357 = vmatprep.mubr.f32.mxu0 %v3736
        %4358 = vmatmul.mubr.f32.gmra.mrb[0].mxu0 %v3735
        %v4359 = vpop.f32.mrb[0].mxu0
        %v4360 = vadd.f32 %v4135, %v4359
        %v4361 = vpop.f32.mrb[0].mxu0
        %4362 = vmatprep.mubr.f32.mxu0 %v3741
        %4363 = vmatmul.mubr.f32.gmra.mrb[0].mxu0 %v3740
        %v4364 = vpop.f32.mrb[0].mxu0
        %v4365 = vadd.f32 %v4140, %v4364
        %v4366 = vpop.f32.mrb[0].mxu0
        %4367 = vmatprep.mubr.f32.mxu0 %v3746
        %4368 = vmatmul.mubr.f32.gmra.mrb[0].mxu0 %v3745
        %v4369 = vpop.f32.mrb[0].mxu0
        %v4370 = vadd.f32 %v4145, %v4369
        %v4371 = vpop.f32.mrb[0].mxu0
        %4372 = vmatprep.mubr.f32.mxu0 %v3751
        %4373 = vmatmul.mubr.f32.gmra.mrb[0].mxu0 %v3750
        %v4374 = vpop.f32.mrb[0].mxu0
        %v4375 = vadd.f32 %v4150, %v4374
        %v4376 = vpop.f32.mrb[0].mxu0
        %4377 = vmatprep.mubr.f32.mxu0 %v3756
        %4378 = vmatmul.mubr.f32.gmra.mrb[0].mxu0 %v3755
        %v4379 = vpop.f32.mrb[0].mxu0
        %v4380 = vadd.f32 %v4155, %v4379
        %v4381 = vpop.f32.mrb[0].mxu0
        %4382 = vmatprep.mubr.f32.mxu0 %v3761
        %4383 = vmatmul.mubr.f32.gmra.mrb[0].mxu0 %v3760
        %v4384 = vpop.f32.mrb[0].mxu0
        %v4385 = vadd.f32 %v4160, %v4384
        %v4386 = vpop.f32.mrb[0].mxu0
        %4387 = vmatprep.mubr.f32.mxu0 %v3766
        %4388 = vmatmul.mubr.f32.gmra.mrb[0].mxu0 %v3765
        %v4389 = vpop.f32.mrb[0].mxu0
        %v4390 = vadd.f32 %v4165, %v4389
        %v4391 = vpop.f32.mrb[0].mxu0
        %4392 = vmatprep.mubr.f32.mxu0 %v3771
        %4393 = vmatmul.mubr.f32.gmra.mrb[0].mxu0 %v3770
        %v4394 = vpop.f32.mrb[0].mxu0
        %v4395 = vadd.f32 %v4170, %v4394
        %v4396 = vpop.f32.mrb[0].mxu0
        %4397 = vmatprep.mubr.f32.mxu0 %v3776
        %4398 = vmatmul.mubr.f32.gmra.mrb[0].mxu0 %v3775
        %v4399 = vpop.f32.mrb[0].mxu0
        %v4400 = vadd.f32 %v4175, %v4399
        %v4401 = vpop.f32.mrb[0].mxu0
        %4402 = vmatprep.mubr.f32.mxu0 %v3781
        %4403 = vmatmul.mubr.f32.gmra.mrb[0].mxu0 %v3780
        %v4404 = vpop.f32.mrb[0].mxu0
        %v4405 = vadd.f32 %v4180, %v4404
        %v4406 = vpop.f32.mrb[0].mxu0
        %4407 = vmatprep.mubr.f32.mxu0 %v3786
        %4408 = vmatmul.mubr.f32.gmra.mrb[0].mxu0 %v3785
        %v4409 = vpop.f32.mrb[0].mxu0
        %v4410 = vadd.f32 %v4185, %v4409
        %v4411 = vpop.f32.mrb[0].mxu0
        %4412 = vmatprep.mubr.f32.mxu0 %v3791
        %4413 = vmatmul.mubr.f32.gmra.mrb[0].mxu0 %v3790
        %v4414 = vpop.f32.mrb[0].mxu0
        %v4415 = vadd.f32 %v4190, %v4414
        %v4416 = vpop.f32.mrb[0].mxu0
        %4417 = vmatprep.mubr.f32.mxu0 %v3796
        %4418 = vmatmul.mubr.f32.gmra.mrb[0].mxu0 %v3795
        %v4419 = vpop.f32.mrb[0].mxu0
        %v4420 = vadd.f32 %v4195, %v4419
        %v4421 = vpop.f32.mrb[0].mxu0
        %4422 = vmatprep.mubr.f32.mxu0 %v3801
        %4423 = vmatmul.mubr.f32.gmra.mrb[0].mxu0 %v3800
        %v4424 = vpop.f32.mrb[0].mxu0
        %v4425 = vadd.f32 %v4200, %v4424
        %v4426 = vpop.f32.mrb[0].mxu0
        %4427 = vmatprep.mubr.f32.mxu0 %v3806
        %4428 = vmatmul.mubr.f32.gmra.mrb[0].mxu0 %v3805
        %v4429 = vpop.f32.mrb[0].mxu0
        %v4430 = vadd.f32 %v4205, %v4429
        %v4431 = vpop.f32.mrb[0].mxu0
        %4432 = vmatprep.mubr.f32.mxu0 %v3811
        %4433 = vmatmul.mubr.f32.gmra.mrb[0].mxu0 %v3810
        %v4434 = vpop.f32.mrb[0].mxu0
        %v4435 = vadd.f32 %v4210, %v4434
        %v4436 = vpop.f32.mrb[0].mxu0
        %4437 = vmatprep.mubr.f32.mxu0 %v3816
        %4438 = vmatmul.mubr.f32.gmra.mrb[0].mxu0 %v3815
        %v4439 = vpop.f32.mrb[0].mxu0
        %v4440 = vadd.f32 %v4215, %v4439
        %v4441 = vpop.f32.mrb[0].mxu0
        %4442 = vmatprep.mubr.f32.mxu0 %v3821
        %4443 = vmatmul.mubr.f32.gmra.mrb[0].mxu0 %v3820
        %v4444 = vpop.f32.mrb[0].mxu0
        %v4445 = vadd.f32 %v4220, %v4444
        %v4446 = vpop.f32.mrb[0].mxu0
        %4447 = vmatprep.mubr.f32.mxu0 %v3826
        %4448 = vmatmul.mubr.f32.gmra.mrb[0].mxu0 %v3825
        %v4449 = vpop.f32.mrb[0].mxu0
        %v4450 = vadd.f32 %v4225, %v4449
        %v4451 = vpop.f32.mrb[0].mxu0
        %4452 = vmatprep.mubr.f32.mxu0 %v3831
        %4453 = vmatmul.mubr.f32.gmra.mrb[0].mxu0 %v3830
        %v4454 = vpop.f32.mrb[0].mxu0
        %v4455 = vadd.f32 %v4230, %v4454
        %v4456 = vpop.f32.mrb[0].mxu0
        %4457 = vmatprep.mubr.f32.mxu0 %v3836
        %4458 = vmatmul.mubr.f32.gmra.mrb[0].mxu0 %v3835
        %v4459 = vpop.f32.mrb[0].mxu0
        %v4460 = vadd.f32 %v4235, %v4459
        %v4461 = vpop.f32.mrb[0].mxu0
        %4462 = vdwg.mxu0
        %4463 = vmatprep.subr.mxu0 0.0
        %4464 = vmatpush1.msra.mxu0 %v3902
        %4465 = vmatprep.subr.mxu0 0.0
        %4466 = vmatpush1.msra.mxu0 %v3903
        %4467 = vmatprep.subr.mxu0 0.0
        %4468 = vmatpush1.msra.mxu0 %v3904
        %4469 = vmatprep.subr.mxu0 0.0
        %4470 = vmatpush1.msra.mxu0 %v3905
        %4471 = vmatprep.subr.mxu0 0.0
        %4472 = vmatpush1.msra.mxu0 %v3906
        %4473 = vmatprep.subr.mxu0 0.0
        %4474 = vmatpush1.msra.mxu0 %v3907
        %4475 = vmatprep.subr.mxu0 0.0
        %4476 = vmatpush1.msra.mxu0 %v3908
        %4477 = vmatprep.subr.mxu0 0.0
        %4478 = vmatpush1.msra.mxu0 %v3909
        %4479 = vmatprep.subr.mxu0 0.0
        %4480 = vmatpush1.msra.mxu0 0.0
        %4481 = vmatprep.subr.mxu0 0.0
        %4482 = vmatpush1.msra.mxu0 0.0
        %4483 = vmatprep.subr.mxu0 0.0
        %4484 = vmatpush1.msra.mxu0 0.0
        %4485 = vmatprep.subr.mxu0 0.0
        %4486 = vmatpush1.msra.mxu0 0.0
        %4487 = vmatprep.subr.mxu0 0.0
        %4488 = vmatpush1.msra.mxu0 0.0
        %4489 = vmatprep.subr.mxu0 0.0
        %4490 = vmatpush1.msra.mxu0 0.0
        %4491 = vmatprep.subr.mxu0 0.0
        %4492 = vmatpush1.msra.mxu0 0.0
        %4493 = vmatprep.subr.mxu0 0.0
        %4494 = vmatpush1.msra.mxu0 0.0
        %4495 = vmatprep.subr.mxu0 0.0
        %4496 = vmatpush1.msra.mxu0 0.0
        %4497 = vmatprep.subr.mxu0 0.0
        %4498 = vmatpush1.msra.mxu0 0.0
        %4499 = vmatprep.subr.mxu0 0.0
        %4500 = vmatpush1.msra.mxu0 0.0
        %4501 = vmatprep.subr.mxu0 0.0
        %4502 = vmatpush1.msra.mxu0 0.0
        %4503 = vmatprep.subr.mxu0 0.0
        %4504 = vmatpush1.msra.mxu0 0.0
        %4505 = vmatprep.subr.mxu0 0.0
        %4506 = vmatpush1.msra.mxu0 0.0
        %4507 = vmatprep.subr.mxu0 0.0
        %4508 = vmatpush1.msra.mxu0 0.0
        %4509 = vmatprep.subr.mxu0 0.0
        %4510 = vmatpush1.msra.mxu0 0.0
        %4511 = vmatprep.subr.mxu0 0.0
        %4512 = vmatpush1.msra.mxu0 0.0
        %4513 = vmatprep.subr.mxu0 0.0
        %4514 = vmatpush1.msra.mxu0 0.0
        %4515 = vmatprep.subr.mxu0 0.0
        %4516 = vmatpush1.msra.mxu0 0.0
        %4517 = vmatprep.subr.mxu0 0.0
        %4518 = vmatpush1.msra.mxu0 0.0
        %4519 = vmatprep.subr.mxu0 0.0
        %4520 = vmatpush1.msra.mxu0 0.0
        %4521 = vmatprep.subr.mxu0 0.0
        %4522 = vmatpush1.msra.mxu0 0.0
        %4523 = vmatprep.subr.mxu0 0.0
        %4524 = vmatpush1.msra.mxu0 0.0
        %4525 = vmatprep.subr.mxu0 0.0
        %4526 = vmatpush1.msra.mxu0 0.0
        %4527 = vmatprep.mubr.f32.mxu0 0.0
        %4528 = vmatmul.mubr.f32.gmra.mrb[0].mxu0 %v3918
        %v4529 = vpop.f32.mrb[0].mxu0
        %v4530 = vadd.f32 %v4305, %v4529
        %v4531 = vpop.f32.mrb[0].mxu0
        %4532 = vmatprep.mubr.f32.mxu0 0.0
        %4533 = vmatmul.mubr.f32.gmra.mrb[0].mxu0 %v3921
        %v4534 = vpop.f32.mrb[0].mxu0
        %v4535 = vadd.f32 %v4310, %v4534
        %v4536 = vpop.f32.mrb[0].mxu0
        %4537 = vmatprep.mubr.f32.mxu0 0.0
        %4538 = vmatmul.mubr.f32.gmra.mrb[0].mxu0 %v3924
        %v4539 = vpop.f32.mrb[0].mxu0
        %v4540 = vadd.f32 %v4315, %v4539
        %v4541 = vpop.f32.mrb[0].mxu0
        %4542 = vmatprep.mubr.f32.mxu0 0.0
        %4543 = vmatmul.mubr.f32.gmra.mrb[0].mxu0 %v3927
        %v4544 = vpop.f32.mrb[0].mxu0
        %v4545 = vadd.f32 %v4320, %v4544
        %v4546 = vpop.f32.mrb[0].mxu0
        %4547 = vmatprep.mubr.f32.mxu0 0.0
        %4548 = vmatmul.mubr.f32.gmra.mrb[0].mxu0 %v3930
        %v4549 = vpop.f32.mrb[0].mxu0
        %v4550 = vadd.f32 %v4325, %v4549
        %v4551 = vpop.f32.mrb[0].mxu0
        %4552 = vmatprep.mubr.f32.mxu0 0.0
        %4553 = vmatmul.mubr.f32.gmra.mrb[0].mxu0 %v3933
        %v4554 = vpop.f32.mrb[0].mxu0
        %v4555 = vadd.f32 %v4330, %v4554
        %v4556 = vpop.f32.mrb[0].mxu0
        %4557 = vmatprep.mubr.f32.mxu0 0.0
        %4558 = vmatmul.mubr.f32.gmra.mrb[0].mxu0 %v3936
        %v4559 = vpop.f32.mrb[0].mxu0
        %v4560 = vadd.f32 %v4335, %v4559
        %v4561 = vpop.f32.mrb[0].mxu0
        %4562 = vmatprep.mubr.f32.mxu0 0.0
        %4563 = vmatmul.mubr.f32.gmra.mrb[0].mxu0 %v3939
        %v4564 = vpop.f32.mrb[0].mxu0
        %v4565 = vadd.f32 %v4340, %v4564
        %v4566 = vpop.f32.mrb[0].mxu0
        %4567 = vmatprep.mubr.f32.mxu0 0.0
        %4568 = vmatmul.mubr.f32.gmra.mrb[0].mxu0 %v3942
        %v4569 = vpop.f32.mrb[0].mxu0
        %v4570 = vadd.f32 %v4345, %v4569
        %v4571 = vpop.f32.mrb[0].mxu0
        %4572 = vmatprep.mubr.f32.mxu0 0.0
        %4573 = vmatmul.mubr.f32.gmra.mrb[0].mxu0 %v3945
        %v4574 = vpop.f32.mrb[0].mxu0
        %v4575 = vadd.f32 %v4350, %v4574
        %v4576 = vpop.f32.mrb[0].mxu0
        %4577 = vmatprep.mubr.f32.mxu0 0.0
        %4578 = vmatmul.mubr.f32.gmra.mrb[0].mxu0 %v3948
        %v4579 = vpop.f32.mrb[0].mxu0
        %v4580 = vadd.f32 %v4355, %v4579
        %v4581 = vpop.f32.mrb[0].mxu0
        %4582 = vmatprep.mubr.f32.mxu0 0.0
        %4583 = vmatmul.mubr.f32.gmra.mrb[0].mxu0 %v3951
        %v4584 = vpop.f32.mrb[0].mxu0
        %v4585 = vadd.f32 %v4360, %v4584
        %v4586 = vpop.f32.mrb[0].mxu0
        %4587 = vmatprep.mubr.f32.mxu0 0.0
        %4588 = vmatmul.mubr.f32.gmra.mrb[0].mxu0 %v3954
        %v4589 = vpop.f32.mrb[0].mxu0
        %v4590 = vadd.f32 %v4365, %v4589
        %v4591 = vpop.f32.mrb[0].mxu0
        %4592 = vmatprep.mubr.f32.mxu0 0.0
        %4593 = vmatmul.mubr.f32.gmra.mrb[0].mxu0 %v3957
        %v4594 = vpop.f32.mrb[0].mxu0
        %v4595 = vadd.f32 %v4370, %v4594
        %v4596 = vpop.f32.mrb[0].mxu0
        %4597 = vmatprep.mubr.f32.mxu0 0.0
        %4598 = vmatmul.mubr.f32.gmra.mrb[0].mxu0 %v3960
        %v4599 = vpop.f32.mrb[0].mxu0
        %v4600 = vadd.f32 %v4375, %v4599
        %v4601 = vpop.f32.mrb[0].mxu0
        %4602 = vmatprep.mubr.f32.mxu0 0.0
        %4603 = vmatmul.mubr.f32.gmra.mrb[0].mxu0 %v3963
        %v4604 = vpop.f32.mrb[0].mxu0
        %v4605 = vadd.f32 %v4380, %v4604
        %v4606 = vpop.f32.mrb[0].mxu0
        %4607 = vmatprep.mubr.f32.mxu0 0.0
        %4608 = vmatmul.mubr.f32.gmra.mrb[0].mxu0 %v3966
        %v4609 = vpop.f32.mrb[0].mxu0
        %v4610 = vadd.f32 %v4385, %v4609
        %v4611 = vpop.f32.mrb[0].mxu0
        %4612 = vmatprep.mubr.f32.mxu0 0.0
        %4613 = vmatmul.mubr.f32.gmra.mrb[0].mxu0 %v3969
        %v4614 = vpop.f32.mrb[0].mxu0
        %v4615 = vadd.f32 %v4390, %v4614
        %v4616 = vpop.f32.mrb[0].mxu0
        %4617 = vmatprep.mubr.f32.mxu0 0.0
        %4618 = vmatmul.mubr.f32.gmra.mrb[0].mxu0 %v3972
        %v4619 = vpop.f32.mrb[0].mxu0
        %v4620 = vadd.f32 %v4395, %v4619
        %v4621 = vpop.f32.mrb[0].mxu0
        %4622 = vmatprep.mubr.f32.mxu0 0.0
        %4623 = vmatmul.mubr.f32.gmra.mrb[0].mxu0 %v3975
        %v4624 = vpop.f32.mrb[0].mxu0
        %v4625 = vadd.f32 %v4400, %v4624
        %v4626 = vpop.f32.mrb[0].mxu0
        %4627 = vmatprep.mubr.f32.mxu0 0.0
        %4628 = vmatmul.mubr.f32.gmra.mrb[0].mxu0 %v3978
        %v4629 = vpop.f32.mrb[0].mxu0
        %v4630 = vadd.f32 %v4405, %v4629
        %v4631 = vpop.f32.mrb[0].mxu0
        %4632 = vmatprep.mubr.f32.mxu0 0.0
        %4633 = vmatmul.mubr.f32.gmra.mrb[0].mxu0 %v3981
        %v4634 = vpop.f32.mrb[0].mxu0
        %v4635 = vadd.f32 %v4410, %v4634
        %v4636 = vpop.f32.mrb[0].mxu0
        %4637 = vmatprep.mubr.f32.mxu0 0.0
        %4638 = vmatmul.mubr.f32.gmra.mrb[0].mxu0 %v3984
        %v4639 = vpop.f32.mrb[0].mxu0
        %v4640 = vadd.f32 %v4415, %v4639
        %v4641 = vpop.f32.mrb[0].mxu0
        %4642 = vmatprep.mubr.f32.mxu0 0.0
        %4643 = vmatmul.mubr.f32.gmra.mrb[0].mxu0 %v3987
        %v4644 = vpop.f32.mrb[0].mxu0
        %v4645 = vadd.f32 %v4420, %v4644
        %v4646 = vpop.f32.mrb[0].mxu0
        %4647 = vmatprep.mubr.f32.mxu0 0.0
        %4648 = vmatmul.mubr.f32.gmra.mrb[0].mxu0 %v3990
        %v4649 = vpop.f32.mrb[0].mxu0
        %v4650 = vadd.f32 %v4425, %v4649
        %v4651 = vpop.f32.mrb[0].mxu0
        %4652 = vmatprep.mubr.f32.mxu0 0.0
        %4653 = vmatmul.mubr.f32.gmra.mrb[0].mxu0 %v3993
        %v4654 = vpop.f32.mrb[0].mxu0
        %v4655 = vadd.f32 %v4430, %v4654
        %v4656 = vpop.f32.mrb[0].mxu0
        %4657 = vmatprep.mubr.f32.mxu0 0.0
        %4658 = vmatmul.mubr.f32.gmra.mrb[0].mxu0 %v3996
        %v4659 = vpop.f32.mrb[0].mxu0
        %v4660 = vadd.f32 %v4435, %v4659
        %v4661 = vpop.f32.mrb[0].mxu0
        %4662 = vmatprep.mubr.f32.mxu0 0.0
        %4663 = vmatmul.mubr.f32.gmra.mrb[0].mxu0 %v3999
        %v4664 = vpop.f32.mrb[0].mxu0
        %v4665 = vadd.f32 %v4440, %v4664
        %v4666 = vpop.f32.mrb[0].mxu0
        %4667 = vmatprep.mubr.f32.mxu0 0.0
        %4668 = vmatmul.mubr.f32.gmra.mrb[0].mxu0 %v4002
        %v4669 = vpop.f32.mrb[0].mxu0
        %v4670 = vadd.f32 %v4445, %v4669
        %v4671 = vpop.f32.mrb[0].mxu0
        %4672 = vmatprep.mubr.f32.mxu0 0.0
        %4673 = vmatmul.mubr.f32.gmra.mrb[0].mxu0 %v4005
        %v4674 = vpop.f32.mrb[0].mxu0
        %v4675 = vadd.f32 %v4450, %v4674
        %v4676 = vpop.f32.mrb[0].mxu0
        %4677 = vmatprep.mubr.f32.mxu0 0.0
        %4678 = vmatmul.mubr.f32.gmra.mrb[0].mxu0 %v4008
        %v4679 = vpop.f32.mrb[0].mxu0
        %v4680 = vadd.f32 %v4455, %v4679
        %v4681 = vpop.f32.mrb[0].mxu0
        %4682 = vmatprep.mubr.f32.mxu0 0.0
        %4683 = vmatmul.mubr.f32.gmra.mrb[0].mxu0 %v4011
        %v4684 = vpop.f32.mrb[0].mxu0
        %v4685 = vadd.f32 %v4460, %v4684
        %v4686 = vpop.f32.mrb[0].mxu0
        %4687 = vdwg.mxu0
        %v4688 = vld [vmem:[%s251] sm:$0xff]
        %v4689 = vld [vmem:[%s251 + $0x8] sm:$0xff]
        %v4690 = vld [vmem:[%s251 + $0x10] sm:$0xff]
        %v4691 = vld [vmem:[%s251 + $0x18] sm:$0xff]
        %v4692 = vld [vmem:[%s251 + $0x20] sm:$0xff]
        %v4693 = vld [vmem:[%s251 + $0x28] sm:$0xff]
        %v4694 = vld [vmem:[%s251 + $0x30] sm:$0xff]
        %v4695 = vld [vmem:[%s251 + $0x38] sm:$0xff]
        %v4696 = vld [vmem:[%s251 + $0x40] sm:$0xff]
        %v4697 = vld [vmem:[%s251 + $0x48] sm:$0xff]
        %v4698 = vld [vmem:[%s251 + $0x50] sm:$0xff]
        %v4699 = vld [vmem:[%s251 + $0x58] sm:$0xff]
        %v4700 = vld [vmem:[%s251 + $0x60] sm:$0xff]
        %v4701 = vld [vmem:[%s251 + $0x68] sm:$0xff]
        %v4702 = vld [vmem:[%s251 + $0x70] sm:$0xff]
        %v4703 = vld [vmem:[%s251 + $0x78] sm:$0xff]
        %v4704 = vld [vmem:[%s251 + $0x80] sm:$0xff]
        %v4705 = vld [vmem:[%s251 + $0x88] sm:$0xff]
        %v4706 = vld [vmem:[%s251 + $0x90] sm:$0xff]
        %v4707 = vld [vmem:[%s251 + $0x98] sm:$0xff]
        %v4708 = vld [vmem:[%s251 + $0xa0] sm:$0xff]
        %v4709 = vld [vmem:[%s251 + $0xa8] sm:$0xff]
        %v4710 = vld [vmem:[%s251 + $0xb0] sm:$0xff]
        %v4711 = vld [vmem:[%s251 + $0xb8] sm:$0xff]
        %v4712 = vld [vmem:[%s251 + $0xc0] sm:$0xff]
        %v4713 = vld [vmem:[%s251 + $0xc8] sm:$0xff]
        %v4714 = vld [vmem:[%s251 + $0xd0] sm:$0xff]
        %v4715 = vld [vmem:[%s251 + $0xd8] sm:$0xff]
        %v4716 = vld [vmem:[%s251 + $0xe0] sm:$0xff]
        %v4717 = vld [vmem:[%s251 + $0xe8] sm:$0xff]
        %v4718 = vld [vmem:[%s251 + $0xf0] sm:$0xff]
        %v4719 = vld [vmem:[%s251 + $0xf8] sm:$0xff]
        %v4720 = vadd.f32 %v4530, %v4688
        %v4721 = vadd.f32 %v4535, %v4689
        %v4722 = vadd.f32 %v4540, %v4690
        %v4723 = vadd.f32 %v4545, %v4691
        %v4724 = vadd.f32 %v4550, %v4692
        %v4725 = vadd.f32 %v4555, %v4693
        %v4726 = vadd.f32 %v4560, %v4694
        %v4727 = vadd.f32 %v4565, %v4695
        %v4728 = vadd.f32 %v4570, %v4696
        %v4729 = vadd.f32 %v4575, %v4697
        %v4730 = vadd.f32 %v4580, %v4698
        %v4731 = vadd.f32 %v4585, %v4699
        %v4732 = vadd.f32 %v4590, %v4700
        %v4733 = vadd.f32 %v4595, %v4701
        %v4734 = vadd.f32 %v4600, %v4702
        %v4735 = vadd.f32 %v4605, %v4703
        %v4736 = vadd.f32 %v4610, %v4704
        %v4737 = vadd.f32 %v4615, %v4705
        %v4738 = vadd.f32 %v4620, %v4706
        %v4739 = vadd.f32 %v4625, %v4707
        %v4740 = vadd.f32 %v4630, %v4708
        %v4741 = vadd.f32 %v4635, %v4709
        %v4742 = vadd.f32 %v4640, %v4710
        %v4743 = vadd.f32 %v4645, %v4711
        %v4744 = vadd.f32 %v4650, %v4712
        %v4745 = vadd.f32 %v4655, %v4713
        %v4746 = vadd.f32 %v4660, %v4714
        %v4747 = vadd.f32 %v4665, %v4715
        %v4748 = vadd.f32 %v4670, %v4716
        %v4749 = vadd.f32 %v4675, %v4717
        %v4750 = vadd.f32 %v4680, %v4718
        %v4751 = vadd.f32 %v4685, %v4719
        %4752 = vst.msk [vmem:[%s246] sm:$0xff] %vm252, %v4720
        %4753 = vst.msk [vmem:[%s246 + $0x8] sm:$0xff] %vm252, %v4721
        %4754 = vst.msk [vmem:[%s246 + $0x10] sm:$0xff] %vm252, %v4722
        %4755 = vst.msk [vmem:[%s246 + $0x18] sm:$0xff] %vm252, %v4723
        %4756 = vst.msk [vmem:[%s246 + $0x20] sm:$0xff] %vm252, %v4724
        %4757 = vst.msk [vmem:[%s246 + $0x28] sm:$0xff] %vm252, %v4725
        %4758 = vst.msk [vmem:[%s246 + $0x30] sm:$0xff] %vm252, %v4726
        %4759 = vst.msk [vmem:[%s246 + $0x38] sm:$0xff] %vm252, %v4727
        %4760 = vst.msk [vmem:[%s246 + $0x40] sm:$0xff] %vm252, %v4728
        %4761 = vst.msk [vmem:[%s246 + $0x48] sm:$0xff] %vm252, %v4729
        %4762 = vst.msk [vmem:[%s246 + $0x50] sm:$0xff] %vm252, %v4730
        %4763 = vst.msk [vmem:[%s246 + $0x58] sm:$0xff] %vm252, %v4731
        %4764 = vst.msk [vmem:[%s246 + $0x60] sm:$0xff] %vm252, %v4732
        %4765 = vst.msk [vmem:[%s246 + $0x68] sm:$0xff] %vm252, %v4733
        %4766 = vst.msk [vmem:[%s246 + $0x70] sm:$0xff] %vm252, %v4734
        %4767 = vst.msk [vmem:[%s246 + $0x78] sm:$0xff] %vm252, %v4735
        %4768 = vst.msk [vmem:[%s246 + $0x80] sm:$0xff] %vm252, %v4736
        %4769 = vst.msk [vmem:[%s246 + $0x88] sm:$0xff] %vm252, %v4737
        %4770 = vst.msk [vmem:[%s246 + $0x90] sm:$0xff] %vm252, %v4738
        %4771 = vst.msk [vmem:[%s246 + $0x98] sm:$0xff] %vm252, %v4739
        %4772 = vst.msk [vmem:[%s246 + $0xa0] sm:$0xff] %vm252, %v4740
        %4773 = vst.msk [vmem:[%s246 + $0xa8] sm:$0xff] %vm252, %v4741
        %4774 = vst.msk [vmem:[%s246 + $0xb0] sm:$0xff] %vm252, %v4742
        %4775 = vst.msk [vmem:[%s246 + $0xb8] sm:$0xff] %vm252, %v4743
        %4776 = vst.msk [vmem:[%s246 + $0xc0] sm:$0xff] %vm252, %v4744
        %4777 = vst.msk [vmem:[%s246 + $0xc8] sm:$0xff] %vm252, %v4745
        %4778 = vst.msk [vmem:[%s246 + $0xd0] sm:$0xff] %vm252, %v4746
        %4779 = vst.msk [vmem:[%s246 + $0xd8] sm:$0xff] %vm252, %v4747
        %4780 = vst.msk [vmem:[%s246 + $0xe0] sm:$0xff] %vm252, %v4748
        %4781 = vst.msk [vmem:[%s246 + $0xe8] sm:$0xff] %vm252, %v4749
        %4782 = vst.msk [vmem:[%s246 + $0xf0] sm:$0xff] %vm252, %v4750
        %4783 = vst.msk [vmem:[%s246 + $0xf8] sm:$0xff] %vm252, %v4751
        %s4784 = sand.u32 %s161, 1
        %s4785 = scalar_lea.sflag [#allocation6], %s4784
        %s4786 = sand.u32 %s161, 1
        %s4787 = smul.addr %s4786, 256
        %s4788 = scalar_lea.vmem [#allocation5], %s4787
        // Predicated region
        $region45: #{tpu_custom_call.1} parent=43 // pred_check
          %p4789 = pneg %p171
        $region46: #{tpu_custom_call.1} parent=43 // pred_check_branch
          %4791 = sbr.rel (%p4789) target = $region48
        $region47: #{tpu_custom_call.1} parent=43 // pred_region
          %s4793 = ssub.s32 4096, 4096
          %4794 = vsyncadd %s4785, %s4793
          %s4795 = smul.addr %s22, 32
          %s4796 = smul.addr %s4795, 128
          %s4797 = scalar_lea.hbm %s6, %s4796
          %s4798 = sshll.u32 %s4788, 4
          %s4799 = int_to_ptr.vmem [resolvable:$true] %s4798
          %4804 = dma.vmem_to_hbm [thread:$0]  %s4799, 4096, %s4797, %s4785, 128, 128, 8
        $region48: #{tpu_custom_call.1} parent=43 // pred_fallthru
          _
      $region44: #{tpu_custom_call.1} parent=5 // pred_fallthru
        _
      %p4805 = scmp.le.s32.totalorder 2, %s17
      // Predicated region
      $region49: #{tpu_custom_call.1} parent=5 // pred_check
        %p4806 = pneg %p4805
      $region50: #{tpu_custom_call.1} parent=5 // pred_check_branch
        %4808 = sbr.rel (%p4806) target = $region52
      $region51: #{tpu_custom_call.1} parent=5 // pred_region
        %s4809 = ssub.s32 %s17, 2
        // Predicated region
        $region53: #{tpu_custom_call.1} parent=51 // pred_check
          %p4810 = pneg %p177
        $region54: #{tpu_custom_call.1} parent=51 // pred_check_branch
          %4812 = sbr.rel (%p4810) target = $region56
        $region55: #{tpu_custom_call.1} parent=51 // pred_region
          %s4813 = sand.u32 %s162, 1
          %s4814 = scalar_lea.sflag [#allocation6], %s4813
          %s4815 = sand.u32 %s162, 1
          %s4816 = smul.addr %s4815, 256
          %s4817 = scalar_lea.vmem [#allocation5], %s4816
          %4818 = dma.done %s4814, 4096
        $region56: #{tpu_custom_call.1} parent=51 // pred_fallthru
          _
      $region52: #{tpu_custom_call.1} parent=5 // pred_fallthru
        _
    $region6: #{tpu_custom_call.1} parent=1 // loop_footer
      %s21 = sadd.s32 1, %s17
    $region7: #{tpu_custom_call.1} parent=1 // loop_footer_branch
      %16 = sbr.rel target = $region3
    $region8: #{tpu_custom_call.1} parent=1 // loop_exit
      _
    %4819 = vsyncpa [#allocation6], 1
    %s4820 = scalar_lea.sflag [#allocation6], 1
    %4821 = vsyncpa %s4820, 1

</llo_original>
